<compile_context>
chip_gen: v5e
topology: v5e:2x2
jax: 0.10.0
libtpu: 0.0.40
codegen_flags: <defaults>
</compile_context>

<pallas_src>
import numpy as np
import jax
import jax.numpy as jnp
from jax.experimental import pallas as pl
from jax.experimental.pallas import tpu as pltpu


# --------------------------------------------------------------------------- #
# Pallas kernel
# --------------------------------------------------------------------------- #
def patch_expand_kernel(x_ref, shift_ref, wph_ref, bias_ref, out_ref, xp_ref):
    """x_ref: (bB,H,W,C) f32; out_ref: (bB,H,2,W,2*Cout) f32;
    wph_ref: (4, 4C, Cout) bf16 (BN-scale folded); xp_ref: (bB,H+2,W+2,C) f32."""
    bB, H, W, C = x_ref.shape
    Cout = bias_ref.shape[-1]

    # BatchNorm: scale is folded into wph; only the per-channel shift' remains.
    xn = x_ref[...].astype(jnp.float32) + shift_ref[...]

    # Zero-padded (1 px) activations in VMEM scratch: zero ONLY the halo
    # strips, then overwrite the interior.  Unconditional every step (each
    # core has its own scratch under "parallel" semantics).
    zrow = jnp.zeros((bB, 1, W + 2, C), xp_ref.dtype)
    zcol = jnp.zeros((bB, H, 1, C), xp_ref.dtype)
    xp_ref[:, 0:1, :, :] = zrow
    xp_ref[:, H + 1:H + 2, :, :] = zrow
    xp_ref[:, 1:H + 1, 0:1, :] = zcol
    xp_ref[:, 1:H + 1, W + 1:W + 2, :] = zcol
    xp_ref[:, 1:H + 1, 1:W + 1, :] = xn

    # 9 unique shifted tap views (bf16 MXU operands), reused by all 4 phases.
    taps = [[xp_ref[:, r:r + H, c:c + W, :].astype(jnp.bfloat16)
             for c in range(3)] for r in range(3)]

    def phase(a, b):
        # [4 taps concatenated on channels] @ W_phase : (M, 4C) @ (4C, Cout).
        # TODO(synk): for large H*W (v7x VMEM) switch to 4 accumulated K=C
        #             matmuls instead of materializing the (M, 4C) concat.
        m = jnp.concatenate(
            [taps[a + dh][b + dw] for dh in (0, 1) for dw in (0, 1)],
            axis=-1).reshape(bB * H * W, 4 * C)
        r = jax.lax.dot_general(m, wph_ref[2 * a + b],
                                (((1,), (0,)), ((), ())),
                                preferred_element_type=jnp.float32)
        return (r + bias_ref[...]).reshape(bB, H, W, Cout)

    # Lane-dense assembly: out[:, m, a, n, b*Cout + c] = phase(a, b)[:, m, n, c].
    # Trailing store dims are (W, 2*Cout) -> full-vreg unmasked stores.
    for a in (0, 1):
        row = jnp.concatenate([phase(a, 0), phase(a, 1)], axis=-1)   # (bB,H,W,2Cout)
        out_ref[:, :, a:a + 1, :, :] = row[:, :, None, :, :].astype(out_ref.dtype)


# --------------------------------------------------------------------------- #
# Trace-time weight preparation
# --------------------------------------------------------------------------- #
def _build_phase_weights(w0, w1, C, C4):
    """w0: (C, C4, 2, 2), w1: (C, C4, 4, 4) (PyTorch ConvTranspose2d layout).

    Returns (4, 4C, 2*C4): for phase (a, b) and tap (dh, dw), rows
    [ (2*dh+dw)*C : (2*dh+dw+1)*C ] hold [ W0-part | W1-part ]; the W0 (k=2)
    kernel only contributes at the centre tap (dh, dw) == (1-a, 1-b).
    """
    phases = []
    for a in (0, 1):
        for b in (0, 1):
            rows = []
            for dh in (0, 1):
                for dw in (0, 1):
                    blk1 = w1[:, :, 3 - 2 * dh - a, 3 - 2 * dw - b]     # (C, C4)
                    if (dh, dw) == (1 - a, 1 - b):
                        blk0 = w0[:, :, a, b]
                    else:
                        blk0 = jnp.zeros((C, C4), w0.dtype)
                    rows.append(jnp.concatenate([blk0, blk1], axis=1))  # (C, 2C4)
            phases.append(jnp.concatenate(rows, axis=0))                # (4C, 2C4)
    return jnp.stack(phases, axis=0)                                    # (4, 4C, 2C4)


# --------------------------------------------------------------------------- #
# Forward wrapper (channels-last in / channels-last out)
# --------------------------------------------------------------------------- #
@jax.jit
def patch_expand_forward(x_nhwc, params):
    """x_nhwc: (B, H, W, C) -> (B, 2H, 2W, C//2), NHWC."""
    gamma, beta, rmean, rvar, w0, b0, w1, b1 = params
    B, H, W, C = x_nhwc.shape
    C4 = w0.shape[1]
    Cout = 2 * C4
    eps = 1e-5

    # Inference BatchNorm folded to per-channel scale / shift; the scale is
    # folded into the ConvTranspose weights (exact because the zero padding
    # must stay zero), keeping only x + shift/scale in-kernel.
    # TODO(synk): the shift/scale fold assumes gamma != 0; a gamma == 0 channel
    #             would silently drop its constant shift contribution.
    scale = gamma / jnp.sqrt(rvar + eps)
    shift = beta - rmean * scale
    safe = jnp.where(scale != 0, scale, 1.0)
    shift_pre = jnp.where(scale != 0, shift / safe, 0.0)
    shift_pre = shift_pre.reshape(1, C).astype(jnp.float32)

    wph = _build_phase_weights(w0 * scale[:, None, None, None],
                               w1 * scale[:, None, None, None],
                               C, C4).astype(jnp.bfloat16)            # (4, 4C, Cout)
    bias = jnp.concatenate([b0, b1]).reshape(1, Cout).astype(jnp.float32)

    grid = (B,)   # bB = 1: >= 2 steps per TC on v7x, B steps on v5e/v6e.

    out5 = pl.pallas_call(
        patch_expand_kernel,
        out_shape=jax.ShapeDtypeStruct((B, H, 2, W, 2 * Cout), jnp.float32),
        grid_spec=pltpu.PrefetchScalarGridSpec(
            num_scalar_prefetch=0,
            grid=grid,
            in_specs=[
                pl.BlockSpec((1, H, W, C), lambda i: (i, 0, 0, 0)),
                pl.BlockSpec((1, C), lambda i: (0, 0)),
                # Constant operands; at large C on v7x, single-buffer these
                # (pipeline_mode=pl.Buffered(1)) to halve their VMEM footprint.
                pl.BlockSpec((4, 4 * C, Cout), lambda i: (0, 0, 0)),
                pl.BlockSpec((1, Cout), lambda i: (0, 0)),
            ],
            out_specs=pl.BlockSpec((1, H, 2, W, 2 * Cout),
                                   lambda i: (i, 0, 0, 0, 0)),
            scratch_shapes=[pltpu.VMEM((1, H + 2, W + 2, C), jnp.float32)],
        ),
        compiler_params=pltpu.CompilerParams(
            dimension_semantics=("parallel",),
            vmem_limit_bytes=32 * 1024 * 1024),
    )(x_nhwc, shift_pre, wph, bias)

    # Metadata-only reshape: (B, H, 2, W, 2*Cout) -> (B, 2H, 2W, Cout).
    return out5.reshape(B, 2 * H, 2 * W, Cout)


# --------------------------------------------------------------------------- #
# Pure-JAX reference (mirrors the PyTorch module exactly, NCHW)
# --------------------------------------------------------------------------- #
def _conv_transpose2d_nchw(x, w, b, stride, padding):
    # x: (B, Cin, H, W); w: (Cin, Cout, kh, kw) in PyTorch ConvTranspose2d layout.
    k = w.shape[2]
    rhs = jnp.transpose(w[:, :, ::-1, ::-1], (1, 0, 2, 3))      # (Cout, Cin, kh, kw)
    pad = k - 1 - padding
    y = jax.lax.conv_general_dilated(
        x, rhs, window_strides=(1, 1),
        padding=[(pad, pad), (pad, pad)],
        lhs_dilation=(stride, stride),
        dimension_numbers=("NCHW", "OIHW", "NCHW"),
        precision=jax.lax.Precision.HIGHEST)
    return y + b[None, :, None, None]


def reference_forward_nchw(x, params):
    gamma, beta, rmean, rvar, w0, b0, w1, b1 = params
    eps = 1e-5
    inv = gamma / jnp.sqrt(rvar + eps)
    xn = (x - rmean[None, :, None, None]) * inv[None, :, None, None] \
        + beta[None, :, None, None]
    y0 = _conv_transpose2d_nchw(xn, w0, b0, stride=2, padding=0)
    y1 = _conv_transpose2d_nchw(xn, w1, b1, stride=2, padding=1)
    return jnp.concatenate([y0, y1], axis=1)                    # (B, C//2, 2H, 2W)


# --------------------------------------------------------------------------- #
# Test
# --------------------------------------------------------------------------- #
def init_params(key, dim):
    ks = jax.random.split(key, 8)
    f32 = jnp.float32
    C4 = dim // 4
    gamma = 1.0 + 0.1 * jax.random.normal(ks[0], (dim,), f32)
    beta = 0.1 * jax.random.normal(ks[1], (dim,), f32)
    rmean = 0.1 * jax.random.normal(ks[2], (dim,), f32)
    rvar = 0.5 + jax.random.uniform(ks[3], (dim,), f32)
    w0 = jax.random.normal(ks[4], (dim, C4, 2, 2), f32) / np.sqrt(dim * 4)
    b0 = 0.1 * jax.random.normal(ks[5], (C4,), f32)
    w1 = jax.random.normal(ks[6], (dim, C4, 4, 4), f32) / np.sqrt(dim * 16)
    b1 = 0.1 * jax.random.normal(ks[7], (C4,), f32)
    return (gamma, beta, rmean, rvar, w0, b0, w1, b1)


if __name__ == "__main__":
    key = jax.random.PRNGKey(0)
    k_x, k_p = jax.random.split(key)

    B, dim, H, W = 4, 256, 8, 8
    x_nchw = jax.random.normal(k_x, (B, dim, H, W), jnp.float32)   # PyTorch layout
    params = init_params(k_p, dim)

    # Kernel path is channels-last; convert once in the test harness only.
    x_nhwc = jnp.transpose(x_nchw, (0, 2, 3, 1))

    out = jax.block_until_ready(patch_expand_forward(x_nhwc, params))
    assert out.shape == (B, 2 * H, 2 * W, dim // 2), out.shape

    ref = reference_forward_nchw(x_nchw, params)                  # (B, C/2, 2H, 2W)
    ref_nhwc = jnp.transpose(ref, (0, 2, 3, 1))
    # bf16 MXU operands (f32 accumulation): tolerance loosened accordingly.
    np.testing.assert_allclose(np.asarray(out), np.asarray(ref_nhwc),
                               rtol=3e-2, atol=3e-2)

    print("KERNEL_OK")
</pallas_src>

<mosaic_0001>
module attributes {stable_mosaic.version = 11 : i64} {
  func.func @patch_expand_kernel(%arg0: i32, %arg1: memref<1x8x8x256xf32, #tpu.memory_space<vmem>>, %arg2: memref<1x256xf32, #tpu.memory_space<vmem>>, %arg3: memref<4x1024x128xbf16, #tpu.memory_space<vmem>>, %arg4: memref<1x128xf32, #tpu.memory_space<vmem>>, %arg5: memref<1x8x2x8x256xf32, #tpu.memory_space<vmem>>, %arg6: memref<1x10x10x256xf32, #tpu.memory_space<vmem>>) attributes {dimension_semantics = [#tpu.dimension_semantics<parallel>], iteration_bounds = array<i64: 4>, scalar_prefetch = 0 : i64, scratch_operands = 1 : i64, tpu.core_type = #tpu.core_type<tc>, window_params = [{transform_indices = @transform_0, window_bounds = array<i64: 1, 8, 8, 256>}, {pipeline_mode = #tpu.pipeline_mode<synchronous>, transform_indices = @transform_1, window_bounds = array<i64: 1, 256>}, {pipeline_mode = #tpu.pipeline_mode<synchronous>, transform_indices = @transform_2, window_bounds = array<i64: 4, 1024, 128>}, {pipeline_mode = #tpu.pipeline_mode<synchronous>, transform_indices = @transform_3, window_bounds = array<i64: 1, 128>}, {transform_indices = @transform_4, window_bounds = array<i64: 1, 8, 2, 8, 256>}]} {
    %c0 = arith.constant 0 : index
    %c0_0 = arith.constant 0 : index
    %c0_1 = arith.constant 0 : index
    %c0_2 = arith.constant 0 : index
    %0 = vector.load %arg1[%c0, %c0_0, %c0_1, %c0_2] : memref<1x8x8x256xf32, #tpu.memory_space<vmem>>, vector<1x8x8x256xf32>
    %c0_3 = arith.constant 0 : index
    %c0_4 = arith.constant 0 : index
    %1 = vector.load %arg2[%c0_3, %c0_4] : memref<1x256xf32, #tpu.memory_space<vmem>>, vector<1x256xf32>
    %2 = vector.shape_cast %1 : vector<1x256xf32> to vector<1x1x1x256xf32>
    %3 = vector.broadcast %2 : vector<1x1x1x256xf32> to vector<1x8x8x256xf32>
    %4 = arith.addf %0, %3 : vector<1x8x8x256xf32>
    %cst = arith.constant 0.000000e+00 : f32
    %5 = vector.broadcast %cst : f32 to vector<1x1x10x256xf32>
    %cst_5 = arith.constant 0.000000e+00 : f32
    %6 = vector.broadcast %cst_5 : f32 to vector<1x8x1x256xf32>
    %c0_6 = arith.constant 0 : index
    %c0_7 = arith.constant 0 : index
    %c0_8 = arith.constant 0 : index
    %c0_9 = arith.constant 0 : index
    %7 = vector.load %arg6[%c0_6, %c0_7, %c0_8, %c0_9] : memref<1x10x10x256xf32, #tpu.memory_space<vmem>>, vector<1x1x10x256xf32>
    tpu.vector_store %arg6[%c0_6, %c0_7, %c0_8, %c0_9], %5 {strides = array<i32>} : memref<1x10x10x256xf32, #tpu.memory_space<vmem>>, vector<1x1x10x256xf32>,
    %c0_10 = arith.constant 0 : index
    %c9 = arith.constant 9 : index
    %c0_11 = arith.constant 0 : index
    %c0_12 = arith.constant 0 : index
    %8 = vector.load %arg6[%c0_10, %c9, %c0_11, %c0_12] : memref<1x10x10x256xf32, #tpu.memory_space<vmem>>, vector<1x1x10x256xf32>
    tpu.vector_store %arg6[%c0_10, %c9, %c0_11, %c0_12], %5 {strides = array<i32>} : memref<1x10x10x256xf32, #tpu.memory_space<vmem>>, vector<1x1x10x256xf32>,
    %c0_13 = arith.constant 0 : index
    %c1 = arith.constant 1 : index
    %c0_14 = arith.constant 0 : index
    %c0_15 = arith.constant 0 : index
    %9 = vector.load %arg6[%c0_13, %c1, %c0_14, %c0_15] : memref<1x10x10x256xf32, #tpu.memory_space<vmem>>, vector<1x8x1x256xf32>
    tpu.vector_store %arg6[%c0_13, %c1, %c0_14, %c0_15], %6 {strides = array<i32>} : memref<1x10x10x256xf32, #tpu.memory_space<vmem>>, vector<1x8x1x256xf32>,
    %c0_16 = arith.constant 0 : index
    %c1_17 = arith.constant 1 : index
    %c9_18 = arith.constant 9 : index
    %c0_19 = arith.constant 0 : index
    %10 = vector.load %arg6[%c0_16, %c1_17, %c9_18, %c0_19] : memref<1x10x10x256xf32, #tpu.memory_space<vmem>>, vector<1x8x1x256xf32>
    tpu.vector_store %arg6[%c0_16, %c1_17, %c9_18, %c0_19], %6 {strides = array<i32>} : memref<1x10x10x256xf32, #tpu.memory_space<vmem>>, vector<1x8x1x256xf32>,
    %c0_20 = arith.constant 0 : index
    %c1_21 = arith.constant 1 : index
    %c1_22 = arith.constant 1 : index
    %c0_23 = arith.constant 0 : index
    %11 = vector.load %arg6[%c0_20, %c1_21, %c1_22, %c0_23] : memref<1x10x10x256xf32, #tpu.memory_space<vmem>>, vector<1x8x8x256xf32>
    tpu.vector_store %arg6[%c0_20, %c1_21, %c1_22, %c0_23], %4 {strides = array<i32>} : memref<1x10x10x256xf32, #tpu.memory_space<vmem>>, vector<1x8x8x256xf32>,
    %c0_24 = arith.constant 0 : index
    %c0_25 = arith.constant 0 : index
    %c0_26 = arith.constant 0 : index
    %c0_27 = arith.constant 0 : index
    %12 = vector.load %arg6[%c0_24, %c0_25, %c0_26, %c0_27] : memref<1x10x10x256xf32, #tpu.memory_space<vmem>>, vector<1x8x8x256xf32>
    %13 = arith.truncf %12 : vector<1x8x8x256xf32> to vector<1x8x8x256xbf16>
    %c0_28 = arith.constant 0 : index
    %c0_29 = arith.constant 0 : index
    %c1_30 = arith.constant 1 : index
    %c0_31 = arith.constant 0 : index
    %14 = vector.load %arg6[%c0_28, %c0_29, %c1_30, %c0_31] : memref<1x10x10x256xf32, #tpu.memory_space<vmem>>, vector<1x8x8x256xf32>
    %15 = arith.truncf %14 : vector<1x8x8x256xf32> to vector<1x8x8x256xbf16>
    %c0_32 = arith.constant 0 : index
    %c0_33 = arith.constant 0 : index
    %c2 = arith.constant 2 : index
    %c0_34 = arith.constant 0 : index
    %16 = vector.load %arg6[%c0_32, %c0_33, %c2, %c0_34] : memref<1x10x10x256xf32, #tpu.memory_space<vmem>>, vector<1x8x8x256xf32>
    %17 = arith.truncf %16 : vector<1x8x8x256xf32> to vector<1x8x8x256xbf16>
    %c0_35 = arith.constant 0 : index
    %c1_36 = arith.constant 1 : index
    %c0_37 = arith.constant 0 : index
    %c0_38 = arith.constant 0 : index
    %18 = vector.load %arg6[%c0_35, %c1_36, %c0_37, %c0_38] : memref<1x10x10x256xf32, #tpu.memory_space<vmem>>, vector<1x8x8x256xf32>
    %19 = arith.truncf %18 : vector<1x8x8x256xf32> to vector<1x8x8x256xbf16>
    %c0_39 = arith.constant 0 : index
    %c1_40 = arith.constant 1 : index
    %c1_41 = arith.constant 1 : index
    %c0_42 = arith.constant 0 : index
    %20 = vector.load %arg6[%c0_39, %c1_40, %c1_41, %c0_42] : memref<1x10x10x256xf32, #tpu.memory_space<vmem>>, vector<1x8x8x256xf32>
    %21 = arith.truncf %20 : vector<1x8x8x256xf32> to vector<1x8x8x256xbf16>
    %c0_43 = arith.constant 0 : index
    %c1_44 = arith.constant 1 : index
    %c2_45 = arith.constant 2 : index
    %c0_46 = arith.constant 0 : index
    %22 = vector.load %arg6[%c0_43, %c1_44, %c2_45, %c0_46] : memref<1x10x10x256xf32, #tpu.memory_space<vmem>>, vector<1x8x8x256xf32>
    %23 = arith.truncf %22 : vector<1x8x8x256xf32> to vector<1x8x8x256xbf16>
    %c0_47 = arith.constant 0 : index
    %c2_48 = arith.constant 2 : index
    %c0_49 = arith.constant 0 : index
    %c0_50 = arith.constant 0 : index
    %24 = vector.load %arg6[%c0_47, %c2_48, %c0_49, %c0_50] : memref<1x10x10x256xf32, #tpu.memory_space<vmem>>, vector<1x8x8x256xf32>
    %25 = arith.truncf %24 : vector<1x8x8x256xf32> to vector<1x8x8x256xbf16>
    %c0_51 = arith.constant 0 : index
    %c2_52 = arith.constant 2 : index
    %c1_53 = arith.constant 1 : index
    %c0_54 = arith.constant 0 : index
    %26 = vector.load %arg6[%c0_51, %c2_52, %c1_53, %c0_54] : memref<1x10x10x256xf32, #tpu.memory_space<vmem>>, vector<1x8x8x256xf32>
    %27 = arith.truncf %26 : vector<1x8x8x256xf32> to vector<1x8x8x256xbf16>
    %c0_55 = arith.constant 0 : index
    %c2_56 = arith.constant 2 : index
    %c2_57 = arith.constant 2 : index
    %c0_58 = arith.constant 0 : index
    %28 = vector.load %arg6[%c0_55, %c2_56, %c2_57, %c0_58] : memref<1x10x10x256xf32, #tpu.memory_space<vmem>>, vector<1x8x8x256xf32>
    %29 = arith.truncf %28 : vector<1x8x8x256xf32> to vector<1x8x8x256xbf16>
    %30 = tpu.concatenate %13, %15, %19, %21 in 3 : vector<1x8x8x256xbf16>, vector<1x8x8x256xbf16>, vector<1x8x8x256xbf16>, vector<1x8x8x256xbf16> -> vector<1x8x8x1024xbf16>
    %31 = vector.shape_cast %30 : vector<1x8x8x1024xbf16> to vector<64x1024xbf16>
    %c0_59 = arith.constant 0 : index
    %c0_60 = arith.constant 0 : index
    %c0_61 = arith.constant 0 : index
    %32 = vector.load %arg3[%c0_59, %c0_60, %c0_61] : memref<4x1024x128xbf16, #tpu.memory_space<vmem>>, vector<1x1024x128xbf16>
    %33 = vector.shape_cast %32 : vector<1x1024x128xbf16> to vector<1024x128xbf16>
    %cst_62 = arith.constant dense<0.000000e+00> : vector<64x128xf32>
    %34 = tpu.matmul %31, %33, %cst_62 {dimension_numbers = #tpu.dot_dimension_numbers<[1], [0], [0], [1], [0, 0, 1, 1], [], []>} : vector<64x1024xbf16>, vector<1024x128xbf16>, vector<64x128xf32> -> vector<64x128xf32>
    %c0_63 = arith.constant 0 : index
    %c0_64 = arith.constant 0 : index
    %35 = vector.load %arg4[%c0_63, %c0_64] : memref<1x128xf32, #tpu.memory_space<vmem>>, vector<1x128xf32>
    %36 = vector.broadcast %35 : vector<1x128xf32> to vector<64x128xf32>
    %37 = arith.addf %34, %36 : vector<64x128xf32>
    %38 = vector.shape_cast %37 : vector<64x128xf32> to vector<1x8x8x128xf32>
    %39 = tpu.concatenate %15, %17, %21, %23 in 3 : vector<1x8x8x256xbf16>, vector<1x8x8x256xbf16>, vector<1x8x8x256xbf16>, vector<1x8x8x256xbf16> -> vector<1x8x8x1024xbf16>
    %40 = vector.shape_cast %39 : vector<1x8x8x1024xbf16> to vector<64x1024xbf16>
    %c1_65 = arith.constant 1 : index
    %c0_66 = arith.constant 0 : index
    %c0_67 = arith.constant 0 : index
    %41 = vector.load %arg3[%c1_65, %c0_66, %c0_67] : memref<4x1024x128xbf16, #tpu.memory_space<vmem>>, vector<1x1024x128xbf16>
    %42 = vector.shape_cast %41 : vector<1x1024x128xbf16> to vector<1024x128xbf16>
    %cst_68 = arith.constant dense<0.000000e+00> : vector<64x128xf32>
    %43 = tpu.matmul %40, %42, %cst_68 {dimension_numbers = #tpu.dot_dimension_numbers<[1], [0], [0], [1], [0, 0, 1, 1], [], []>} : vector<64x1024xbf16>, vector<1024x128xbf16>, vector<64x128xf32> -> vector<64x128xf32>
    %c0_69 = arith.constant 0 : index
    %c0_70 = arith.constant 0 : index
    %44 = vector.load %arg4[%c0_69, %c0_70] : memref<1x128xf32, #tpu.memory_space<vmem>>, vector<1x128xf32>
    %45 = vector.broadcast %44 : vector<1x128xf32> to vector<64x128xf32>
    %46 = arith.addf %43, %45 : vector<64x128xf32>
    %47 = vector.shape_cast %46 : vector<64x128xf32> to vector<1x8x8x128xf32>
    %48 = tpu.concatenate %38, %47 in 3 : vector<1x8x8x128xf32>, vector<1x8x8x128xf32> -> vector<1x8x8x256xf32>
    %49 = vector.shape_cast %48 : vector<1x8x8x256xf32> to vector<1x8x1x8x256xf32>
    %c0_71 = arith.constant 0 : index
    %c0_72 = arith.constant 0 : index
    %c0_73 = arith.constant 0 : index
    %c0_74 = arith.constant 0 : index
    %c0_75 = arith.constant 0 : index
    %50 = vector.load %arg5[%c0_71, %c0_72, %c0_73, %c0_74, %c0_75] : memref<1x8x2x8x256xf32, #tpu.memory_space<vmem>>, vector<1x8x1x8x256xf32>
    tpu.vector_store %arg5[%c0_71, %c0_72, %c0_73, %c0_74, %c0_75], %49 {strides = array<i32>} : memref<1x8x2x8x256xf32, #tpu.memory_space<vmem>>, vector<1x8x1x8x256xf32>,
    %51 = tpu.concatenate %19, %21, %25, %27 in 3 : vector<1x8x8x256xbf16>, vector<1x8x8x256xbf16>, vector<1x8x8x256xbf16>, vector<1x8x8x256xbf16> -> vector<1x8x8x1024xbf16>
    %52 = vector.shape_cast %51 : vector<1x8x8x1024xbf16> to vector<64x1024xbf16>
    %c2_76 = arith.constant 2 : index
    %c0_77 = arith.constant 0 : index
    %c0_78 = arith.constant 0 : index
    %53 = vector.load %arg3[%c2_76, %c0_77, %c0_78] : memref<4x1024x128xbf16, #tpu.memory_space<vmem>>, vector<1x1024x128xbf16>
    %54 = vector.shape_cast %53 : vector<1x1024x128xbf16> to vector<1024x128xbf16>
    %cst_79 = arith.constant dense<0.000000e+00> : vector<64x128xf32>
    %55 = tpu.matmul %52, %54, %cst_79 {dimension_numbers = #tpu.dot_dimension_numbers<[1], [0], [0], [1], [0, 0, 1, 1], [], []>} : vector<64x1024xbf16>, vector<1024x128xbf16>, vector<64x128xf32> -> vector<64x128xf32>
    %c0_80 = arith.constant 0 : index
    %c0_81 = arith.constant 0 : index
    %56 = vector.load %arg4[%c0_80, %c0_81] : memref<1x128xf32, #tpu.memory_space<vmem>>, vector<1x128xf32>
    %57 = vector.broadcast %56 : vector<1x128xf32> to vector<64x128xf32>
    %58 = arith.addf %55, %57 : vector<64x128xf32>
    %59 = vector.shape_cast %58 : vector<64x128xf32> to vector<1x8x8x128xf32>
    %60 = tpu.concatenate %21, %23, %27, %29 in 3 : vector<1x8x8x256xbf16>, vector<1x8x8x256xbf16>, vector<1x8x8x256xbf16>, vector<1x8x8x256xbf16> -> vector<1x8x8x1024xbf16>
    %61 = vector.shape_cast %60 : vector<1x8x8x1024xbf16> to vector<64x1024xbf16>
    %c3 = arith.constant 3 : index
    %c0_82 = arith.constant 0 : index
    %c0_83 = arith.constant 0 : index
    %62 = vector.load %arg3[%c3, %c0_82, %c0_83] : memref<4x1024x128xbf16, #tpu.memory_space<vmem>>, vector<1x1024x128xbf16>
    %63 = vector.shape_cast %62 : vector<1x1024x128xbf16> to vector<1024x128xbf16>
    %cst_84 = arith.constant dense<0.000000e+00> : vector<64x128xf32>
    %64 = tpu.matmul %61, %63, %cst_84 {dimension_numbers = #tpu.dot_dimension_numbers<[1], [0], [0], [1], [0, 0, 1, 1], [], []>} : vector<64x1024xbf16>, vector<1024x128xbf16>, vector<64x128xf32> -> vector<64x128xf32>
    %c0_85 = arith.constant 0 : index
    %c0_86 = arith.constant 0 : index
    %65 = vector.load %arg4[%c0_85, %c0_86] : memref<1x128xf32, #tpu.memory_space<vmem>>, vector<1x128xf32>
    %66 = vector.broadcast %65 : vector<1x128xf32> to vector<64x128xf32>
    %67 = arith.addf %64, %66 : vector<64x128xf32>
    %68 = vector.shape_cast %67 : vector<64x128xf32> to vector<1x8x8x128xf32>
    %69 = tpu.concatenate %59, %68 in 3 : vector<1x8x8x128xf32>, vector<1x8x8x128xf32> -> vector<1x8x8x256xf32>
    %70 = vector.shape_cast %69 : vector<1x8x8x256xf32> to vector<1x8x1x8x256xf32>
    %c0_87 = arith.constant 0 : index
    %c0_88 = arith.constant 0 : index
    %c1_89 = arith.constant 1 : index
    %c0_90 = arith.constant 0 : index
    %c0_91 = arith.constant 0 : index
    %71 = vector.load %arg5[%c0_87, %c0_88, %c1_89, %c0_90, %c0_91] : memref<1x8x2x8x256xf32, #tpu.memory_space<vmem>>, vector<1x8x1x8x256xf32>
    tpu.vector_store %arg5[%c0_87, %c0_88, %c1_89, %c0_90, %c0_91], %70 {strides = array<i32>} : memref<1x8x2x8x256xf32, #tpu.memory_space<vmem>>, vector<1x8x1x8x256xf32>,
    return
  }
  func.func @transform_0(%arg0: i32) -> (i32, i32, i32, i32) {
    %c0_i32 = arith.constant 0 : i32
    %c0_i32_0 = arith.constant 0 : i32
    %c0_i32_1 = arith.constant 0 : i32
    %c0_i32_2 = arith.constant 0 : i32
    return %arg0, %c0_i32, %c0_i32_0, %c0_i32_1 : i32, i32, i32, i32
  }
  func.func @transform_1(%arg0: i32) -> (i32, i32) {
    %c0_i32 = arith.constant 0 : i32
    %c0_i32_0 = arith.constant 0 : i32
    %c0_i32_1 = arith.constant 0 : i32
    return %c0_i32, %c0_i32_0 : i32, i32
  }
  func.func @transform_2(%arg0: i32) -> (i32, i32, i32) {
    %c0_i32 = arith.constant 0 : i32
    %c0_i32_0 = arith.constant 0 : i32
    %c0_i32_1 = arith.constant 0 : i32
    %c0_i32_2 = arith.constant 0 : i32
    return %c0_i32, %c0_i32_0, %c0_i32_1 : i32, i32, i32
  }
  func.func @transform_3(%arg0: i32) -> (i32, i32) {
    %c0_i32 = arith.constant 0 : i32
    %c0_i32_0 = arith.constant 0 : i32
    %c0_i32_1 = arith.constant 0 : i32
    return %c0_i32, %c0_i32_0 : i32, i32
  }
  func.func @transform_4(%arg0: i32) -> (i32, i32, i32, i32, i32) {
    %c0_i32 = arith.constant 0 : i32
    %c0_i32_0 = arith.constant 0 : i32
    %c0_i32_1 = arith.constant 0 : i32
    %c0_i32_2 = arith.constant 0 : i32
    %c0_i32_3 = arith.constant 0 : i32
    return %arg0, %c0_i32, %c0_i32_0, %c0_i32_1, %c0_i32_2 : i32, i32, i32, i32, i32
  }
}

</mosaic_0001>

<llo_original>
// kernel: patch_expand_forward.1
$region0: #{patch_expand_forward.1}
  #allocation0 [shape = 'u32[]', space=smem, size = 0x4, offset = 0x4, fixed_abs, tag = 'smem constant byte address 0x4 - core index']
  #allocation1 [shape = 'u32[72,128]{1,0:T(1,128)}', space=vmem, size = 0x9000, scoped, tag = 'internal scratch']
  #allocation2 [shape = 'f32[1,10,10,256]{3,2,1,0:T(8,128)}', space=vmem, size = 0x28000, scoped, tag = 'scratch operand']
  %s0 = inlined_call_operand.vmem [shape: f32[4,8,8,256], index: 0, kind: input, shape index: {}]
  %s1 = inlined_call_operand.vmem [shape: f32[1,256], index: 1, kind: input, shape index: {}]
  %s2 = inlined_call_operand.vmem [shape: bf16[4,1024,128], index: 2, kind: input, shape index: {}]
  %s3 = inlined_call_operand.vmem [shape: f32[1,128], index: 3, kind: input, shape index: {}]
  %s4 = inlined_call_operand.vmem [shape: f32[4,8,2,8,256], index: 4, kind: output, shape index: {}]
  %s5 = sld [smem:[#allocation0]]
  $region49: #{patch_expand_forward.1} parent=0
    _
  %s7 = ssub.s32 1, %s5
  %s8 = scalar_select 0, %s7, %s5
  loop: start=0, step=1, limit=6
  $region2: #{patch_expand_forward.1} parent=0 // loop_pre_header
    _
  $region3: #{patch_expand_forward.1} parent=0 // loop_header
    %s10 = sphi 0, %s14
    %p11 = scmp.ge.s32.totalorder %s10, 6
    %s20 = sphi 0, %s22
    %s23 = sphi 0, %s20
    %s24 = sphi 0, %s23
    %s40 = sphi 0, %s24
    %s44 = sphi 0, %s44
    %s46 = sphi 0, %s44
    %s47 = sphi 0, %s46
    %s61 = sphi 0, %s47
    %s65 = sphi 0, %s65
    %s67 = sphi 0, %s65
    %s68 = sphi 0, %s67
    %s82 = sphi 0, %s68
    %s86 = sphi 0, %s86
    %s88 = sphi 0, %s86
    %s89 = sphi 0, %s88
    %s103 = sphi 0, %s89
    %s109 = sphi 0, %s111
    %s112 = sphi 0, %s109
    %s113 = sphi 0, %s112
    %s129 = sphi 0, %s113
  $region4: #{patch_expand_forward.1} parent=0 // loop_header_branch
    %13 = sbr.rel (%p11) target = $region8
  $region5: #{patch_expand_forward.1} parent=0 // loop_body
    %s15 = ssub.s32 %s10, 1
    %s16 = ssub.s32 %s10, 2
    %s17 = sadd.s32 %s10, 1
    %s18 = ssub.s32 %s10, %s17
    %p19 = scmp.eq.s32.totalorder %s18, 0
    %s21 = sadd.s32 %s20, 1
    %s22 = scalar_select %p19, %s20, %s21
    %p25 = pneg %p19
    %p26 = scmp.eq.s32.totalorder %s10, 3
    %p27 = por %p25, %p26
    %p28 = scmp.ne.s32.totalorder %s20, %s23
    %p29 = scmp.eq.s32.totalorder %s10, 0
    %p30 = por %p28, %p29
    %p31 = scmp.ne.s32.totalorder %s20, %s23
    %p32 = scmp.eq.s32.totalorder %s15, 3
    %p33 = por %p31, %p32
    %p34 = scmp.ne.s32.totalorder %s23, %s24
    %p35 = scmp.eq.s32.totalorder %s15, 0
    %p36 = por %p34, %p35
    %p37 = scmp.ne.s32.totalorder %s23, %s24
    %p38 = scmp.eq.s32.totalorder %s16, 3
    %p39 = por %p37, %p38
    %p41 = scmp.ne.s32.totalorder %s24, %s40
    %p42 = scmp.eq.s32.totalorder %s16, 0
    %p43 = por %p41, %p42
    %s45 = sadd.s32 %s44, 1
    %p48 = scmp.eq.s32.totalorder %s10, 3
    %p49 = scmp.ne.s32.totalorder %s44, %s46
    %p50 = scmp.eq.s32.totalorder %s10, 0
    %p51 = por %p49, %p50
    %p52 = scmp.ne.s32.totalorder %s44, %s46
    %p53 = scmp.eq.s32.totalorder %s15, 3
    %p54 = por %p52, %p53
    %p55 = scmp.ne.s32.totalorder %s46, %s47
    %p56 = scmp.eq.s32.totalorder %s15, 0
    %p57 = por %p55, %p56
    %p58 = scmp.ne.s32.totalorder %s46, %s47
    %p59 = scmp.eq.s32.totalorder %s16, 3
    %p60 = por %p58, %p59
    %p62 = scmp.ne.s32.totalorder %s47, %s61
    %p63 = scmp.eq.s32.totalorder %s16, 0
    %p64 = por %p62, %p63
    %s66 = sadd.s32 %s65, 1
    %p69 = scmp.eq.s32.totalorder %s10, 3
    %p70 = scmp.ne.s32.totalorder %s65, %s67
    %p71 = scmp.eq.s32.totalorder %s10, 0
    %p72 = por %p70, %p71
    %p73 = scmp.ne.s32.totalorder %s65, %s67
    %p74 = scmp.eq.s32.totalorder %s15, 3
    %p75 = por %p73, %p74
    %p76 = scmp.ne.s32.totalorder %s67, %s68
    %p77 = scmp.eq.s32.totalorder %s15, 0
    %p78 = por %p76, %p77
    %p79 = scmp.ne.s32.totalorder %s67, %s68
    %p80 = scmp.eq.s32.totalorder %s16, 3
    %p81 = por %p79, %p80
    %p83 = scmp.ne.s32.totalorder %s68, %s82
    %p84 = scmp.eq.s32.totalorder %s16, 0
    %p85 = por %p83, %p84
    %s87 = sadd.s32 %s86, 1
    %p90 = scmp.eq.s32.totalorder %s10, 3
    %p91 = scmp.ne.s32.totalorder %s86, %s88
    %p92 = scmp.eq.s32.totalorder %s10, 0
    %p93 = por %p91, %p92
    %p94 = scmp.ne.s32.totalorder %s86, %s88
    %p95 = scmp.eq.s32.totalorder %s15, 3
    %p96 = por %p94, %p95
    %p97 = scmp.ne.s32.totalorder %s88, %s89
    %p98 = scmp.eq.s32.totalorder %s15, 0
    %p99 = por %p97, %p98
    %p100 = scmp.ne.s32.totalorder %s88, %s89
    %p101 = scmp.eq.s32.totalorder %s16, 3
    %p102 = por %p100, %p101
    %p104 = scmp.ne.s32.totalorder %s89, %s103
    %p105 = scmp.eq.s32.totalorder %s16, 0
    %p106 = por %p104, %p105
    %s107 = ssub.s32 %s10, %s17
    %p108 = scmp.eq.s32.totalorder %s107, 0
    %s110 = sadd.s32 %s109, 1
    %s111 = scalar_select %p108, %s109, %s110
    %p114 = pneg %p108
    %p115 = scmp.eq.s32.totalorder %s10, 3
    %p116 = por %p114, %p115
    %p117 = scmp.ne.s32.totalorder %s109, %s112
    %p118 = scmp.eq.s32.totalorder %s10, 0
    %p119 = por %p117, %p118
    %p120 = scmp.ne.s32.totalorder %s109, %s112
    %p121 = scmp.eq.s32.totalorder %s15, 3
    %p122 = por %p120, %p121
    %p123 = scmp.ne.s32.totalorder %s112, %s113
    %p124 = scmp.eq.s32.totalorder %s15, 0
    %p125 = por %p123, %p124
    %p126 = scmp.ne.s32.totalorder %s112, %s113
    %p127 = scmp.eq.s32.totalorder %s16, 3
    %p128 = por %p126, %p127
    %p130 = scmp.ne.s32.totalorder %s113, %s129
    %p131 = scmp.eq.s32.totalorder %s16, 0
    %p132 = por %p130, %p131
    %p133 = scmp.le.s32.totalorder 1, %s10
    %p134 = scmp.lt.s32.totalorder %s10, 5
    %p135 = pnand %p133, %p134
    %p136 = pneg %p135
    // Predicated region
    $region9: #{patch_expand_forward.1} parent=5 // pred_check
      _
    $region10: #{patch_expand_forward.1} parent=5 // pred_check_branch
      %138 = sbr.rel (%p135) target = $region12
    $region11: #{patch_expand_forward.1} parent=5 // pred_region
      %s139 = ssub.s32 %s10, 1
      // Predicated region
      $region13: #{patch_expand_forward.1} parent=11 // pred_check
        %p140 = pneg %p57
      $region14: #{patch_expand_forward.1} parent=11 // pred_check_branch
        %142 = sbr.rel (%p140) target = $region16
      $region15: #{patch_expand_forward.1} parent=11 // pred_region
        _
      $region16: #{patch_expand_forward.1} parent=11 // pred_fallthru
        _
      // Predicated region
      $region17: #{patch_expand_forward.1} parent=11 // pred_check
        %p143 = pneg %p78
      $region18: #{patch_expand_forward.1} parent=11 // pred_check_branch
        %145 = sbr.rel (%p143) target = $region20
      $region19: #{patch_expand_forward.1} parent=11 // pred_region
        _
      $region20: #{patch_expand_forward.1} parent=11 // pred_fallthru
        _
      // Predicated region
      $region21: #{patch_expand_forward.1} parent=11 // pred_check
        %p146 = pneg %p99
      $region22: #{patch_expand_forward.1} parent=11 // pred_check_branch
        %148 = sbr.rel (%p146) target = $region24
      $region23: #{patch_expand_forward.1} parent=11 // pred_region
        _
      $region24: #{patch_expand_forward.1} parent=11 // pred_fallthru
        _
    $region12: #{patch_expand_forward.1} parent=5 // pred_fallthru
      _
    %p149 = scmp.lt.s32.totalorder %s10, 4
    // Predicated region
    $region25: #{patch_expand_forward.1} parent=5 // pred_check
      %p150 = pneg %p149
    $region26: #{patch_expand_forward.1} parent=5 // pred_check_branch
      %152 = sbr.rel (%p150) target = $region28
    $region27: #{patch_expand_forward.1} parent=5 // pred_region
      // Predicated region
      $region29: #{patch_expand_forward.1} parent=27 // pred_check
        %p153 = pneg %p30
      $region30: #{patch_expand_forward.1} parent=27 // pred_check_branch
        %155 = sbr.rel (%p153) target = $region32
      $region31: #{patch_expand_forward.1} parent=27 // pred_region
        %p156 = scmp.lt.s32.totalorder %s10, 3
        %s157 = scalar_select %p156, %s10, 3
        %s158 = smul.addr %s157, 16
        %s159 = smul.addr %s158, 8
        %s160 = scalar_lea.vmem %s0, %s159
      $region32: #{patch_expand_forward.1} parent=27 // pred_fallthru
        _
    $region28: #{patch_expand_forward.1} parent=5 // pred_fallthru
      _
    %p161 = scmp.le.s32.totalorder 1, %s10
    %p162 = scmp.lt.s32.totalorder %s10, 5
    %p163 = pnand %p161, %p162
    %p164 = pneg %p163
    // Predicated region
    $region33: #{patch_expand_forward.1} parent=5 // pred_check
      _
    $region34: #{patch_expand_forward.1} parent=5 // pred_check_branch
      %166 = sbr.rel (%p163) target = $region36
    $region35: #{patch_expand_forward.1} parent=5 // pred_region
      %s167 = ssub.s32 %s10, 1
      %p168 = scmp.lt.s32.totalorder %s15, 3
      %s169 = scalar_select %p168, %s15, 3
      %s170 = smul.addr %s169, 16
      %s171 = smul.addr %s170, 8
      %s172 = scalar_lea.vmem %s0, %s171
      %p173 = pneg %p36
      %p174 = pneg %p33
      %p175 = pneg %p57
      %p176 = pneg %p54
      %p177 = pneg %p78
      %p178 = pneg %p75
      %p179 = pneg %p99
      %p180 = pneg %p96
      %p181 = pneg %p125
      %p182 = pneg %p122
      %p183 = scmp.lt.s32.totalorder %s15, 3
      %s184 = scalar_select %p183, %s15, 3
      %s185 = smul.addr %s184, 32
      %s186 = smul.addr %s185, 8
      %s187 = scalar_lea.vmem %s4, %s186
      %p188 = scmp.lt.s32.totalorder %s15, 3
      %s189 = scalar_select %p188, %s15, 3
      %s190 = smul.addr %s189, 16
      %s191 = smul.addr %s190, 8
      %s192 = scalar_lea.vmem %s0, %s191
      %p193 = scmp.lt.s32.totalorder %s15, 3
      %s194 = scalar_select %p193, %s15, 3
      %s195 = smul.addr %s194, 32
      %s196 = smul.addr %s195, 8
      %s197 = scalar_lea.vmem %s4, %s196
      %v198 = vld [vmem:[%s192] sm:$0xff]
      %v199 = vld [vmem:[%s192 + $0x8] sm:$0xff]
      %v200 = vld [vmem:[%s192 + $0x10] sm:$0xff]
      %v201 = vld [vmem:[%s192 + $0x18] sm:$0xff]
      %v202 = vld [vmem:[%s192 + $0x20] sm:$0xff]
      %v203 = vld [vmem:[%s192 + $0x28] sm:$0xff]
      %v204 = vld [vmem:[%s192 + $0x30] sm:$0xff]
      %v205 = vld [vmem:[%s192 + $0x38] sm:$0xff]
      %v206 = vld [vmem:[%s192 + $0x40] sm:$0xff]
      %v207 = vld [vmem:[%s192 + $0x48] sm:$0xff]
      %v208 = vld [vmem:[%s192 + $0x50] sm:$0xff]
      %v209 = vld [vmem:[%s192 + $0x58] sm:$0xff]
      %v210 = vld [vmem:[%s192 + $0x60] sm:$0xff]
      %v211 = vld [vmem:[%s192 + $0x68] sm:$0xff]
      %v212 = vld [vmem:[%s192 + $0x70] sm:$0xff]
      %v213 = vld [vmem:[%s192 + $0x78] sm:$0xff]
      %v214 = vld [vmem:[%s1] sm:$0x3]
      %v216 = vperm.slane %v214, 0
      %v217 = vperm.slane %v214, 1
      %v220 = vadd.f32 %v198, %v216
      %v221 = vadd.f32 %v199, %v217
      %v222 = vadd.f32 %v200, %v216
      %v223 = vadd.f32 %v201, %v217
      %v224 = vadd.f32 %v202, %v216
      %v225 = vadd.f32 %v203, %v217
      %v226 = vadd.f32 %v204, %v216
      %v227 = vadd.f32 %v205, %v217
      %v228 = vadd.f32 %v206, %v216
      %v229 = vadd.f32 %v207, %v217
      %v230 = vadd.f32 %v208, %v216
      %v231 = vadd.f32 %v209, %v217
      %v232 = vadd.f32 %v210, %v216
      %v233 = vadd.f32 %v211, %v217
      %v234 = vadd.f32 %v212, %v216
      %v235 = vadd.f32 %v213, %v217
      %236 = vst [vmem:[#allocation2] sm:$0xff] 0.0
      %237 = vst [vmem:[#allocation2 + $0x8] sm:$0xff] 0.0
      %238 = vst [vmem:[#allocation2 + $0x10] sm:$0x3] 0.0
      %239 = vst [vmem:[#allocation2 + $0x18] sm:$0x3] 0.0
      %s240 = scalar_lea.vmem [#allocation2], 288
      %241 = vst [vmem:[%s240] sm:$0xff] 0.0
      %242 = vst [vmem:[%s240 + $0x8] sm:$0xff] 0.0
      %243 = vst [vmem:[%s240 + $0x10] sm:$0x3] 0.0
      %244 = vst [vmem:[%s240 + $0x18] sm:$0x3] 0.0
      %s245 = scalar_lea.vmem [#allocation2], 32
      %v246 = vlaneseq
      %vm247 = vcmp.ge.s32.totalorder %v246, 0
      %vm248 = vcmp.lt.s32.totalorder %v246, 256
      %vm249 = vmand %vm247, %vm248
      %250 = vst.msk [vmem:[%s245] ss:$8 sm:$0x3] %vm249, 0.0
      %251 = vst.msk [vmem:[%s245] ss:$8 sm:$0x0] %vm249, 0.0
      %s252 = scalar_lea.vmem %s245, 32 [#allocation2]
      %253 = vst.msk [vmem:[%s252] ss:$8 sm:$0x3] %vm249, 0.0
      %254 = vst.msk [vmem:[%s252] ss:$8 sm:$0x0] %vm249, 0.0
      %s255 = scalar_lea.vmem %s245, 64 [#allocation2]
      %256 = vst.msk [vmem:[%s255] ss:$8 sm:$0x3] %vm249, 0.0
      %257 = vst.msk [vmem:[%s255] ss:$8 sm:$0x0] %vm249, 0.0
      %s258 = scalar_lea.vmem %s245, 96 [#allocation2]
      %259 = vst.msk [vmem:[%s258] ss:$8 sm:$0x3] %vm249, 0.0
      %260 = vst.msk [vmem:[%s258] ss:$8 sm:$0x0] %vm249, 0.0
      %s261 = scalar_lea.vmem %s245, 128 [#allocation2]
      %262 = vst.msk [vmem:[%s261] ss:$8 sm:$0x3] %vm249, 0.0
      %263 = vst.msk [vmem:[%s261] ss:$8 sm:$0x0] %vm249, 0.0
      %s264 = scalar_lea.vmem %s245, 160 [#allocation2]
      %265 = vst.msk [vmem:[%s264] ss:$8 sm:$0x3] %vm249, 0.0
      %266 = vst.msk [vmem:[%s264] ss:$8 sm:$0x0] %vm249, 0.0
      %s267 = scalar_lea.vmem %s245, 192 [#allocation2]
      %268 = vst.msk [vmem:[%s267] ss:$8 sm:$0x3] %vm249, 0.0
      %269 = vst.msk [vmem:[%s267] ss:$8 sm:$0x0] %vm249, 0.0
      %s270 = scalar_lea.vmem %s245, 224 [#allocation2]
      %271 = vst.msk [vmem:[%s270] ss:$8 sm:$0x3] %vm249, 0.0
      %272 = vst.msk [vmem:[%s270] ss:$8 sm:$0x0] %vm249, 0.0
      %s273 = scalar_lea.vmem %s245, 17 [#allocation2]
      %274 = vst.msk [vmem:[%s273] ss:$8 sm:$0x3] %vm249, 0.0
      %275 = vst.msk [vmem:[%s273] ss:$8 sm:$0x0] %vm249, 0.0
      %s276 = scalar_lea.vmem %s245, 49 [#allocation2]
      %277 = vst.msk [vmem:[%s276] ss:$8 sm:$0x3] %vm249, 0.0
      %278 = vst.msk [vmem:[%s276] ss:$8 sm:$0x0] %vm249, 0.0
      %s279 = scalar_lea.vmem %s245, 81 [#allocation2]
      %280 = vst.msk [vmem:[%s279] ss:$8 sm:$0x3] %vm249, 0.0
      %281 = vst.msk [vmem:[%s279] ss:$8 sm:$0x0] %vm249, 0.0
      %s282 = scalar_lea.vmem %s245, 113 [#allocation2]
      %283 = vst.msk [vmem:[%s282] ss:$8 sm:$0x3] %vm249, 0.0
      %284 = vst.msk [vmem:[%s282] ss:$8 sm:$0x0] %vm249, 0.0
      %s285 = scalar_lea.vmem %s245, 145 [#allocation2]
      %286 = vst.msk [vmem:[%s285] ss:$8 sm:$0x3] %vm249, 0.0
      %287 = vst.msk [vmem:[%s285] ss:$8 sm:$0x0] %vm249, 0.0
      %s288 = scalar_lea.vmem %s245, 177 [#allocation2]
      %289 = vst.msk [vmem:[%s288] ss:$8 sm:$0x3] %vm249, 0.0
      %290 = vst.msk [vmem:[%s288] ss:$8 sm:$0x0] %vm249, 0.0
      %s291 = scalar_lea.vmem %s245, 209 [#allocation2]
      %292 = vst.msk [vmem:[%s291] ss:$8 sm:$0x3] %vm249, 0.0
      %293 = vst.msk [vmem:[%s291] ss:$8 sm:$0x0] %vm249, 0.0
      %s294 = scalar_lea.vmem %s245, 241 [#allocation2]
      %295 = vst.msk [vmem:[%s294] ss:$8 sm:$0x3] %vm249, 0.0
      %296 = vst.msk [vmem:[%s294] ss:$8 sm:$0x0] %vm249, 0.0
      %v313 = vrot.slane %v220, 7
      %v314 = vrot.slane %v221, 7
      %v315 = vrot.slane %v222, 7
      %v316 = vrot.slane %v223, 7
      %v317 = vrot.slane %v224, 7
      %v318 = vrot.slane %v225, 7
      %v319 = vrot.slane %v226, 7
      %v320 = vrot.slane %v227, 7
      %v321 = vrot.slane %v228, 7
      %v322 = vrot.slane %v229, 7
      %v323 = vrot.slane %v230, 7
      %v324 = vrot.slane %v231, 7
      %v325 = vrot.slane %v232, 7
      %v326 = vrot.slane %v233, 7
      %v327 = vrot.slane %v234, 7
      %v328 = vrot.slane %v235, 7
      %345 = vst [vmem:[%s245] sm:$0xfe] %v313
      %346 = vst [vmem:[%s245 + $0x8] sm:$0xfe] %v314
      %347 = vst [vmem:[%s245 + $0x10] sm:$0x1] %v313
      %348 = vst [vmem:[%s245 + $0x18] sm:$0x1] %v314
      %349 = vst [vmem:[%s245 + $0x20] sm:$0xfe] %v315
      %350 = vst [vmem:[%s245 + $0x28] sm:$0xfe] %v316
      %351 = vst [vmem:[%s245 + $0x30] sm:$0x1] %v315
      %352 = vst [vmem:[%s245 + $0x38] sm:$0x1] %v316
      %353 = vst [vmem:[%s245 + $0x40] sm:$0xfe] %v317
      %354 = vst [vmem:[%s245 + $0x48] sm:$0xfe] %v318
      %355 = vst [vmem:[%s245 + $0x50] sm:$0x1] %v317
      %356 = vst [vmem:[%s245 + $0x58] sm:$0x1] %v318
      %357 = vst [vmem:[%s245 + $0x60] sm:$0xfe] %v319
      %358 = vst [vmem:[%s245 + $0x68] sm:$0xfe] %v320
      %359 = vst [vmem:[%s245 + $0x70] sm:$0x1] %v319
      %360 = vst [vmem:[%s245 + $0x78] sm:$0x1] %v320
      %361 = vst [vmem:[%s245 + $0x80] sm:$0xfe] %v321
      %362 = vst [vmem:[%s245 + $0x88] sm:$0xfe] %v322
      %363 = vst [vmem:[%s245 + $0x90] sm:$0x1] %v321
      %364 = vst [vmem:[%s245 + $0x98] sm:$0x1] %v322
      %365 = vst [vmem:[%s245 + $0xa0] sm:$0xfe] %v323
      %366 = vst [vmem:[%s245 + $0xa8] sm:$0xfe] %v324
      %367 = vst [vmem:[%s245 + $0xb0] sm:$0x1] %v323
      %368 = vst [vmem:[%s245 + $0xb8] sm:$0x1] %v324
      %369 = vst [vmem:[%s245 + $0xc0] sm:$0xfe] %v325
      %370 = vst [vmem:[%s245 + $0xc8] sm:$0xfe] %v326
      %371 = vst [vmem:[%s245 + $0xd0] sm:$0x1] %v325
      %372 = vst [vmem:[%s245 + $0xd8] sm:$0x1] %v326
      %373 = vst [vmem:[%s245 + $0xe0] sm:$0xfe] %v327
      %374 = vst [vmem:[%s245 + $0xe8] sm:$0xfe] %v328
      %375 = vst [vmem:[%s245 + $0xf0] sm:$0x1] %v327
      %376 = vst [vmem:[%s245 + $0xf8] sm:$0x1] %v328
      %v377 = vld [vmem:[#allocation2] sm:$0xff]
      %v378 = vld [vmem:[#allocation2 + $0x8] sm:$0xff]
      %v379 = vld [vmem:[#allocation2 + $0x20] sm:$0xff]
      %v380 = vld [vmem:[#allocation2 + $0x28] sm:$0xff]
      %v381 = vld [vmem:[#allocation2 + $0x40] sm:$0xff]
      %v382 = vld [vmem:[#allocation2 + $0x48] sm:$0xff]
      %v383 = vld [vmem:[#allocation2 + $0x60] sm:$0xff]
      %v384 = vld [vmem:[#allocation2 + $0x68] sm:$0xff]
      %v385 = vld [vmem:[#allocation2 + $0x80] sm:$0xff]
      %v386 = vld [vmem:[#allocation2 + $0x88] sm:$0xff]
      %v387 = vld [vmem:[#allocation2 + $0xa0] sm:$0xff]
      %v388 = vld [vmem:[#allocation2 + $0xa8] sm:$0xff]
      %v389 = vld [vmem:[#allocation2 + $0xc0] sm:$0xff]
      %v390 = vld [vmem:[#allocation2 + $0xc8] sm:$0xff]
      %v391 = vld [vmem:[#allocation2 + $0xe0] sm:$0xff]
      %v392 = vld [vmem:[#allocation2 + $0xe8] sm:$0xff]
      %v393 = vpack.c.bf16 %v378, %v377
      %v394 = vpack.c.bf16 %v380, %v379
      %v395 = vpack.c.bf16 %v382, %v381
      %v396 = vpack.c.bf16 %v384, %v383
      %v397 = vpack.c.bf16 %v386, %v385
      %v398 = vpack.c.bf16 %v388, %v387
      %v399 = vpack.c.bf16 %v390, %v389
      %v400 = vpack.c.bf16 %v392, %v391
      %v401 = vld [vmem:[#allocation2] sm:$0xfe]
      %v402 = vld [vmem:[#allocation2 + $0x8] sm:$0xfe]
      %v403 = vld [vmem:[#allocation2 + $0x10] sm:$0x1]
      %v404 = vld [vmem:[#allocation2 + $0x18] sm:$0x1]
      %v405 = vld [vmem:[#allocation2 + $0x20] sm:$0xfe]
      %v406 = vld [vmem:[#allocation2 + $0x28] sm:$0xfe]
      %v407 = vld [vmem:[#allocation2 + $0x30] sm:$0x1]
      %v408 = vld [vmem:[#allocation2 + $0x38] sm:$0x1]
      %v409 = vld [vmem:[#allocation2 + $0x40] sm:$0xfe]
      %v410 = vld [vmem:[#allocation2 + $0x48] sm:$0xfe]
      %v411 = vld [vmem:[#allocation2 + $0x50] sm:$0x1]
      %v412 = vld [vmem:[#allocation2 + $0x58] sm:$0x1]
      %v413 = vld [vmem:[#allocation2 + $0x60] sm:$0xfe]
      %v414 = vld [vmem:[#allocation2 + $0x68] sm:$0xfe]
      %v415 = vld [vmem:[#allocation2 + $0x70] sm:$0x1]
      %v416 = vld [vmem:[#allocation2 + $0x78] sm:$0x1]
      %v417 = vld [vmem:[#allocation2 + $0x80] sm:$0xfe]
      %v418 = vld [vmem:[#allocation2 + $0x88] sm:$0xfe]
      %v419 = vld [vmem:[#allocation2 + $0x90] sm:$0x1]
      %v420 = vld [vmem:[#allocation2 + $0x98] sm:$0x1]
      %v421 = vld [vmem:[#allocation2 + $0xa0] sm:$0xfe]
      %v422 = vld [vmem:[#allocation2 + $0xa8] sm:$0xfe]
      %v423 = vld [vmem:[#allocation2 + $0xb0] sm:$0x1]
      %v424 = vld [vmem:[#allocation2 + $0xb8] sm:$0x1]
      %v425 = vld [vmem:[#allocation2 + $0xc0] sm:$0xfe]
      %v426 = vld [vmem:[#allocation2 + $0xc8] sm:$0xfe]
      %v427 = vld [vmem:[#allocation2 + $0xd0] sm:$0x1]
      %v428 = vld [vmem:[#allocation2 + $0xd8] sm:$0x1]
      %v429 = vld [vmem:[#allocation2 + $0xe0] sm:$0xfe]
      %v430 = vld [vmem:[#allocation2 + $0xe8] sm:$0xfe]
      %v431 = vld [vmem:[#allocation2 + $0xf0] sm:$0x1]
      %v432 = vld [vmem:[#allocation2 + $0xf8] sm:$0x1]
      %v433 = vpack.c.bf16 %v402, %v401
      %v434 = vpack.c.bf16 %v404, %v403
      %v435 = vpack.c.bf16 %v406, %v405
      %v436 = vpack.c.bf16 %v408, %v407
      %v437 = vpack.c.bf16 %v410, %v409
      %v438 = vpack.c.bf16 %v412, %v411
      %v439 = vpack.c.bf16 %v414, %v413
      %v440 = vpack.c.bf16 %v416, %v415
      %v441 = vpack.c.bf16 %v418, %v417
      %v442 = vpack.c.bf16 %v420, %v419
      %v443 = vpack.c.bf16 %v422, %v421
      %v444 = vpack.c.bf16 %v424, %v423
      %v445 = vpack.c.bf16 %v426, %v425
      %v446 = vpack.c.bf16 %v428, %v427
      %v447 = vpack.c.bf16 %v430, %v429
      %v448 = vpack.c.bf16 %v432, %v431
      %v449 = vld [vmem:[#allocation2] sm:$0xfc]
      %v450 = vld [vmem:[#allocation2 + $0x8] sm:$0xfc]
      %v451 = vld [vmem:[#allocation2 + $0x10] sm:$0x3]
      %v452 = vld [vmem:[#allocation2 + $0x18] sm:$0x3]
      %v453 = vld [vmem:[#allocation2 + $0x20] sm:$0xfc]
      %v454 = vld [vmem:[#allocation2 + $0x28] sm:$0xfc]
      %v455 = vld [vmem:[#allocation2 + $0x30] sm:$0x3]
      %v456 = vld [vmem:[#allocation2 + $0x38] sm:$0x3]
      %v457 = vld [vmem:[#allocation2 + $0x40] sm:$0xfc]
      %v458 = vld [vmem:[#allocation2 + $0x48] sm:$0xfc]
      %v459 = vld [vmem:[#allocation2 + $0x50] sm:$0x3]
      %v460 = vld [vmem:[#allocation2 + $0x58] sm:$0x3]
      %v461 = vld [vmem:[#allocation2 + $0x60] sm:$0xfc]
      %v462 = vld [vmem:[#allocation2 + $0x68] sm:$0xfc]
      %v463 = vld [vmem:[#allocation2 + $0x70] sm:$0x3]
      %v464 = vld [vmem:[#allocation2 + $0x78] sm:$0x3]
      %v465 = vld [vmem:[#allocation2 + $0x80] sm:$0xfc]
      %v466 = vld [vmem:[#allocation2 + $0x88] sm:$0xfc]
      %v467 = vld [vmem:[#allocation2 + $0x90] sm:$0x3]
      %v468 = vld [vmem:[#allocation2 + $0x98] sm:$0x3]
      %v469 = vld [vmem:[#allocation2 + $0xa0] sm:$0xfc]
      %v470 = vld [vmem:[#allocation2 + $0xa8] sm:$0xfc]
      %v471 = vld [vmem:[#allocation2 + $0xb0] sm:$0x3]
      %v472 = vld [vmem:[#allocation2 + $0xb8] sm:$0x3]
      %v473 = vld [vmem:[#allocation2 + $0xc0] sm:$0xfc]
      %v474 = vld [vmem:[#allocation2 + $0xc8] sm:$0xfc]
      %v475 = vld [vmem:[#allocation2 + $0xd0] sm:$0x3]
      %v476 = vld [vmem:[#allocation2 + $0xd8] sm:$0x3]
      %v477 = vld [vmem:[#allocation2 + $0xe0] sm:$0xfc]
      %v478 = vld [vmem:[#allocation2 + $0xe8] sm:$0xfc]
      %v479 = vld [vmem:[#allocation2 + $0xf0] sm:$0x3]
      %v480 = vld [vmem:[#allocation2 + $0xf8] sm:$0x3]
      %v481 = vpack.c.bf16 %v450, %v449
      %v482 = vpack.c.bf16 %v452, %v451
      %v483 = vpack.c.bf16 %v454, %v453
      %v484 = vpack.c.bf16 %v456, %v455
      %v485 = vpack.c.bf16 %v458, %v457
      %v486 = vpack.c.bf16 %v460, %v459
      %v487 = vpack.c.bf16 %v462, %v461
      %v488 = vpack.c.bf16 %v464, %v463
      %v489 = vpack.c.bf16 %v466, %v465
      %v490 = vpack.c.bf16 %v468, %v467
      %v491 = vpack.c.bf16 %v470, %v469
      %v492 = vpack.c.bf16 %v472, %v471
      %v493 = vpack.c.bf16 %v474, %v473
      %v494 = vpack.c.bf16 %v476, %v475
      %v495 = vpack.c.bf16 %v478, %v477
      %v496 = vpack.c.bf16 %v480, %v479
      %v497 = vld [vmem:[%s245] sm:$0xff]
      %v498 = vld [vmem:[%s245 + $0x8] sm:$0xff]
      %v499 = vld [vmem:[%s245 + $0x20] sm:$0xff]
      %v500 = vld [vmem:[%s245 + $0x28] sm:$0xff]
      %v501 = vld [vmem:[%s245 + $0x40] sm:$0xff]
      %v502 = vld [vmem:[%s245 + $0x48] sm:$0xff]
      %v503 = vld [vmem:[%s245 + $0x60] sm:$0xff]
      %v504 = vld [vmem:[%s245 + $0x68] sm:$0xff]
      %v505 = vld [vmem:[%s245 + $0x80] sm:$0xff]
      %v506 = vld [vmem:[%s245 + $0x88] sm:$0xff]
      %v507 = vld [vmem:[%s245 + $0xa0] sm:$0xff]
      %v508 = vld [vmem:[%s245 + $0xa8] sm:$0xff]
      %v509 = vld [vmem:[%s245 + $0xc0] sm:$0xff]
      %v510 = vld [vmem:[%s245 + $0xc8] sm:$0xff]
      %v511 = vld [vmem:[%s245 + $0xe0] sm:$0xff]
      %v512 = vld [vmem:[%s245 + $0xe8] sm:$0xff]
      %v513 = vpack.c.bf16 %v498, %v497
      %v514 = vpack.c.bf16 %v500, %v499
      %v515 = vpack.c.bf16 %v502, %v501
      %v516 = vpack.c.bf16 %v504, %v503
      %v517 = vpack.c.bf16 %v506, %v505
      %v518 = vpack.c.bf16 %v508, %v507
      %v519 = vpack.c.bf16 %v510, %v509
      %v520 = vpack.c.bf16 %v512, %v511
      %v521 = vld [vmem:[%s245] sm:$0xfe]
      %v522 = vld [vmem:[%s245 + $0x8] sm:$0xfe]
      %v523 = vld [vmem:[%s245 + $0x10] sm:$0x1]
      %v524 = vld [vmem:[%s245 + $0x18] sm:$0x1]
      %v525 = vld [vmem:[%s245 + $0x20] sm:$0xfe]
      %v526 = vld [vmem:[%s245 + $0x28] sm:$0xfe]
      %v527 = vld [vmem:[%s245 + $0x30] sm:$0x1]
      %v528 = vld [vmem:[%s245 + $0x38] sm:$0x1]
      %v529 = vld [vmem:[%s245 + $0x40] sm:$0xfe]
      %v530 = vld [vmem:[%s245 + $0x48] sm:$0xfe]
      %v531 = vld [vmem:[%s245 + $0x50] sm:$0x1]
      %v532 = vld [vmem:[%s245 + $0x58] sm:$0x1]
      %v533 = vld [vmem:[%s245 + $0x60] sm:$0xfe]
      %v534 = vld [vmem:[%s245 + $0x68] sm:$0xfe]
      %v535 = vld [vmem:[%s245 + $0x70] sm:$0x1]
      %v536 = vld [vmem:[%s245 + $0x78] sm:$0x1]
      %v537 = vld [vmem:[%s245 + $0x80] sm:$0xfe]
      %v538 = vld [vmem:[%s245 + $0x88] sm:$0xfe]
      %v539 = vld [vmem:[%s245 + $0x90] sm:$0x1]
      %v540 = vld [vmem:[%s245 + $0x98] sm:$0x1]
      %v541 = vld [vmem:[%s245 + $0xa0] sm:$0xfe]
      %v542 = vld [vmem:[%s245 + $0xa8] sm:$0xfe]
      %v543 = vld [vmem:[%s245 + $0xb0] sm:$0x1]
      %v544 = vld [vmem:[%s245 + $0xb8] sm:$0x1]
      %v545 = vld [vmem:[%s245 + $0xc0] sm:$0xfe]
      %v546 = vld [vmem:[%s245 + $0xc8] sm:$0xfe]
      %v547 = vld [vmem:[%s245 + $0xd0] sm:$0x1]
      %v548 = vld [vmem:[%s245 + $0xd8] sm:$0x1]
      %v549 = vld [vmem:[%s245 + $0xe0] sm:$0xfe]
      %v550 = vld [vmem:[%s245 + $0xe8] sm:$0xfe]
      %v551 = vld [vmem:[%s245 + $0xf0] sm:$0x1]
      %v552 = vld [vmem:[%s245 + $0xf8] sm:$0x1]
      %v553 = vpack.c.bf16 %v522, %v521
      %v554 = vpack.c.bf16 %v524, %v523
      %v555 = vpack.c.bf16 %v526, %v525
      %v556 = vpack.c.bf16 %v528, %v527
      %v557 = vpack.c.bf16 %v530, %v529
      %v558 = vpack.c.bf16 %v532, %v531
      %v559 = vpack.c.bf16 %v534, %v533
      %v560 = vpack.c.bf16 %v536, %v535
      %v561 = vpack.c.bf16 %v538, %v537
      %v562 = vpack.c.bf16 %v540, %v539
      %v563 = vpack.c.bf16 %v542, %v541
      %v564 = vpack.c.bf16 %v544, %v543
      %v565 = vpack.c.bf16 %v546, %v545
      %v566 = vpack.c.bf16 %v548, %v547
      %v567 = vpack.c.bf16 %v550, %v549
      %v568 = vpack.c.bf16 %v552, %v551
      %v569 = vld [vmem:[%s245] sm:$0xfc]
      %v570 = vld [vmem:[%s245 + $0x8] sm:$0xfc]
      %v571 = vld [vmem:[%s245 + $0x10] sm:$0x3]
      %v572 = vld [vmem:[%s245 + $0x18] sm:$0x3]
      %v573 = vld [vmem:[%s245 + $0x20] sm:$0xfc]
      %v574 = vld [vmem:[%s245 + $0x28] sm:$0xfc]
      %v575 = vld [vmem:[%s245 + $0x30] sm:$0x3]
      %v576 = vld [vmem:[%s245 + $0x38] sm:$0x3]
      %v577 = vld [vmem:[%s245 + $0x40] sm:$0xfc]
      %v578 = vld [vmem:[%s245 + $0x48] sm:$0xfc]
      %v579 = vld [vmem:[%s245 + $0x50] sm:$0x3]
      %v580 = vld [vmem:[%s245 + $0x58] sm:$0x3]
      %v581 = vld [vmem:[%s245 + $0x60] sm:$0xfc]
      %v582 = vld [vmem:[%s245 + $0x68] sm:$0xfc]
      %v583 = vld [vmem:[%s245 + $0x70] sm:$0x3]
      %v584 = vld [vmem:[%s245 + $0x78] sm:$0x3]
      %v585 = vld [vmem:[%s245 + $0x80] sm:$0xfc]
      %v586 = vld [vmem:[%s245 + $0x88] sm:$0xfc]
      %v587 = vld [vmem:[%s245 + $0x90] sm:$0x3]
      %v588 = vld [vmem:[%s245 + $0x98] sm:$0x3]
      %v589 = vld [vmem:[%s245 + $0xa0] sm:$0xfc]
      %v590 = vld [vmem:[%s245 + $0xa8] sm:$0xfc]
      %v591 = vld [vmem:[%s245 + $0xb0] sm:$0x3]
      %v592 = vld [vmem:[%s245 + $0xb8] sm:$0x3]
      %v593 = vld [vmem:[%s245 + $0xc0] sm:$0xfc]
      %v594 = vld [vmem:[%s245 + $0xc8] sm:$0xfc]
      %v595 = vld [vmem:[%s245 + $0xd0] sm:$0x3]
      %v596 = vld [vmem:[%s245 + $0xd8] sm:$0x3]
      %v597 = vld [vmem:[%s245 + $0xe0] sm:$0xfc]
      %v598 = vld [vmem:[%s245 + $0xe8] sm:$0xfc]
      %v599 = vld [vmem:[%s245 + $0xf0] sm:$0x3]
      %v600 = vld [vmem:[%s245 + $0xf8] sm:$0x3]
      %v601 = vpack.c.bf16 %v570, %v569
      %v602 = vpack.c.bf16 %v572, %v571
      %v603 = vpack.c.bf16 %v574, %v573
      %v604 = vpack.c.bf16 %v576, %v575
      %v605 = vpack.c.bf16 %v578, %v577
      %v606 = vpack.c.bf16 %v580, %v579
      %v607 = vpack.c.bf16 %v582, %v581
      %v608 = vpack.c.bf16 %v584, %v583
      %v609 = vpack.c.bf16 %v586, %v585
      %v610 = vpack.c.bf16 %v588, %v587
      %v611 = vpack.c.bf16 %v590, %v589
      %v612 = vpack.c.bf16 %v592, %v591
      %v613 = vpack.c.bf16 %v594, %v593
      %v614 = vpack.c.bf16 %v596, %v595
      %v615 = vpack.c.bf16 %v598, %v597
      %v616 = vpack.c.bf16 %v600, %v599
      %s617 = scalar_lea.vmem [#allocation2], 64
      %v618 = vld [vmem:[%s617] sm:$0xff]
      %v619 = vld [vmem:[%s617 + $0x8] sm:$0xff]
      %v620 = vld [vmem:[%s617 + $0x20] sm:$0xff]
      %v621 = vld [vmem:[%s617 + $0x28] sm:$0xff]
      %v622 = vld [vmem:[%s617 + $0x40] sm:$0xff]
      %v623 = vld [vmem:[%s617 + $0x48] sm:$0xff]
      %v624 = vld [vmem:[%s617 + $0x60] sm:$0xff]
      %v625 = vld [vmem:[%s617 + $0x68] sm:$0xff]
      %v626 = vld [vmem:[%s617 + $0x80] sm:$0xff]
      %v627 = vld [vmem:[%s617 + $0x88] sm:$0xff]
      %v628 = vld [vmem:[%s617 + $0xa0] sm:$0xff]
      %v629 = vld [vmem:[%s617 + $0xa8] sm:$0xff]
      %v630 = vld [vmem:[%s617 + $0xc0] sm:$0xff]
      %v631 = vld [vmem:[%s617 + $0xc8] sm:$0xff]
      %v632 = vld [vmem:[%s617 + $0xe0] sm:$0xff]
      %v633 = vld [vmem:[%s617 + $0xe8] sm:$0xff]
      %v634 = vpack.c.bf16 %v619, %v618
      %v635 = vpack.c.bf16 %v621, %v620
      %v636 = vpack.c.bf16 %v623, %v622
      %v637 = vpack.c.bf16 %v625, %v624
      %v638 = vpack.c.bf16 %v627, %v626
      %v639 = vpack.c.bf16 %v629, %v628
      %v640 = vpack.c.bf16 %v631, %v630
      %v641 = vpack.c.bf16 %v633, %v632
      %v642 = vld [vmem:[%s617] sm:$0xfe]
      %v643 = vld [vmem:[%s617 + $0x8] sm:$0xfe]
      %v644 = vld [vmem:[%s617 + $0x10] sm:$0x1]
      %v645 = vld [vmem:[%s617 + $0x18] sm:$0x1]
      %v646 = vld [vmem:[%s617 + $0x20] sm:$0xfe]
      %v647 = vld [vmem:[%s617 + $0x28] sm:$0xfe]
      %v648 = vld [vmem:[%s617 + $0x30] sm:$0x1]
      %v649 = vld [vmem:[%s617 + $0x38] sm:$0x1]
      %v650 = vld [vmem:[%s617 + $0x40] sm:$0xfe]
      %v651 = vld [vmem:[%s617 + $0x48] sm:$0xfe]
      %v652 = vld [vmem:[%s617 + $0x50] sm:$0x1]
      %v653 = vld [vmem:[%s617 + $0x58] sm:$0x1]
      %v654 = vld [vmem:[%s617 + $0x60] sm:$0xfe]
      %v655 = vld [vmem:[%s617 + $0x68] sm:$0xfe]
      %v656 = vld [vmem:[%s617 + $0x70] sm:$0x1]
      %v657 = vld [vmem:[%s617 + $0x78] sm:$0x1]
      %v658 = vld [vmem:[%s617 + $0x80] sm:$0xfe]
      %v659 = vld [vmem:[%s617 + $0x88] sm:$0xfe]
      %v660 = vld [vmem:[%s617 + $0x90] sm:$0x1]
      %v661 = vld [vmem:[%s617 + $0x98] sm:$0x1]
      %v662 = vld [vmem:[%s617 + $0xa0] sm:$0xfe]
      %v663 = vld [vmem:[%s617 + $0xa8] sm:$0xfe]
      %v664 = vld [vmem:[%s617 + $0xb0] sm:$0x1]
      %v665 = vld [vmem:[%s617 + $0xb8] sm:$0x1]
      %v666 = vld [vmem:[%s617 + $0xc0] sm:$0xfe]
      %v667 = vld [vmem:[%s617 + $0xc8] sm:$0xfe]
      %v668 = vld [vmem:[%s617 + $0xd0] sm:$0x1]
      %v669 = vld [vmem:[%s617 + $0xd8] sm:$0x1]
      %v670 = vld [vmem:[%s617 + $0xe0] sm:$0xfe]
      %v671 = vld [vmem:[%s617 + $0xe8] sm:$0xfe]
      %v672 = vld [vmem:[%s617 + $0xf0] sm:$0x1]
      %v673 = vld [vmem:[%s617 + $0xf8] sm:$0x1]
      %v674 = vpack.c.bf16 %v643, %v642
      %v675 = vpack.c.bf16 %v645, %v644
      %v676 = vpack.c.bf16 %v647, %v646
      %v677 = vpack.c.bf16 %v649, %v648
      %v678 = vpack.c.bf16 %v651, %v650
      %v679 = vpack.c.bf16 %v653, %v652
      %v680 = vpack.c.bf16 %v655, %v654
      %v681 = vpack.c.bf16 %v657, %v656
      %v682 = vpack.c.bf16 %v659, %v658
      %v683 = vpack.c.bf16 %v661, %v660
      %v684 = vpack.c.bf16 %v663, %v662
      %v685 = vpack.c.bf16 %v665, %v664
      %v686 = vpack.c.bf16 %v667, %v666
      %v687 = vpack.c.bf16 %v669, %v668
      %v688 = vpack.c.bf16 %v671, %v670
      %v689 = vpack.c.bf16 %v673, %v672
      %v690 = vld [vmem:[%s617] sm:$0xfc]
      %v691 = vld [vmem:[%s617 + $0x8] sm:$0xfc]
      %v692 = vld [vmem:[%s617 + $0x10] sm:$0x3]
      %v693 = vld [vmem:[%s617 + $0x18] sm:$0x3]
      %v694 = vld [vmem:[%s617 + $0x20] sm:$0xfc]
      %v695 = vld [vmem:[%s617 + $0x28] sm:$0xfc]
      %v696 = vld [vmem:[%s617 + $0x30] sm:$0x3]
      %v697 = vld [vmem:[%s617 + $0x38] sm:$0x3]
      %v698 = vld [vmem:[%s617 + $0x40] sm:$0xfc]
      %v699 = vld [vmem:[%s617 + $0x48] sm:$0xfc]
      %v700 = vld [vmem:[%s617 + $0x50] sm:$0x3]
      %v701 = vld [vmem:[%s617 + $0x58] sm:$0x3]
      %v702 = vld [vmem:[%s617 + $0x60] sm:$0xfc]
      %v703 = vld [vmem:[%s617 + $0x68] sm:$0xfc]
      %v704 = vld [vmem:[%s617 + $0x70] sm:$0x3]
      %v705 = vld [vmem:[%s617 + $0x78] sm:$0x3]
      %v706 = vld [vmem:[%s617 + $0x80] sm:$0xfc]
      %v707 = vld [vmem:[%s617 + $0x88] sm:$0xfc]
      %v708 = vld [vmem:[%s617 + $0x90] sm:$0x3]
      %v709 = vld [vmem:[%s617 + $0x98] sm:$0x3]
      %v710 = vld [vmem:[%s617 + $0xa0] sm:$0xfc]
      %v711 = vld [vmem:[%s617 + $0xa8] sm:$0xfc]
      %v712 = vld [vmem:[%s617 + $0xb0] sm:$0x3]
      %v713 = vld [vmem:[%s617 + $0xb8] sm:$0x3]
      %v714 = vld [vmem:[%s617 + $0xc0] sm:$0xfc]
      %v715 = vld [vmem:[%s617 + $0xc8] sm:$0xfc]
      %v716 = vld [vmem:[%s617 + $0xd0] sm:$0x3]
      %v717 = vld [vmem:[%s617 + $0xd8] sm:$0x3]
      %v718 = vld [vmem:[%s617 + $0xe0] sm:$0xfc]
      %v719 = vld [vmem:[%s617 + $0xe8] sm:$0xfc]
      %v720 = vld [vmem:[%s617 + $0xf0] sm:$0x3]
      %v721 = vld [vmem:[%s617 + $0xf8] sm:$0x3]
      %v722 = vpack.c.bf16 %v691, %v690
      %v723 = vpack.c.bf16 %v693, %v692
      %v724 = vpack.c.bf16 %v695, %v694
      %v725 = vpack.c.bf16 %v697, %v696
      %v726 = vpack.c.bf16 %v699, %v698
      %v727 = vpack.c.bf16 %v701, %v700
      %v728 = vpack.c.bf16 %v703, %v702
      %v729 = vpack.c.bf16 %v705, %v704
      %v730 = vpack.c.bf16 %v707, %v706
      %v731 = vpack.c.bf16 %v709, %v708
      %v732 = vpack.c.bf16 %v711, %v710
      %v733 = vpack.c.bf16 %v713, %v712
      %v734 = vpack.c.bf16 %v715, %v714
      %v735 = vpack.c.bf16 %v717, %v716
      %v736 = vpack.c.bf16 %v719, %v718
      %v737 = vpack.c.bf16 %v721, %v720
      %v746 = vunpack.c.l.b16 %v393
      %v747 = vunpack.c.h.b16 %v393
      %v748 = vunpack.c.l.b16 %v394
      %v749 = vunpack.c.h.b16 %v394
      %v750 = vunpack.c.l.b16 %v395
      %v751 = vunpack.c.h.b16 %v395
      %v752 = vunpack.c.l.b16 %v396
      %v753 = vunpack.c.h.b16 %v396
      %v754 = vunpack.c.l.b16 %v397
      %v755 = vunpack.c.h.b16 %v397
      %v756 = vunpack.c.l.b16 %v398
      %v757 = vunpack.c.h.b16 %v398
      %v758 = vunpack.c.l.b16 %v399
      %v759 = vunpack.c.h.b16 %v399
      %v760 = vunpack.c.l.b16 %v400
      %v761 = vunpack.c.h.b16 %v400
      %v778 = vunpack.c.l.b16 %v433
      %v779 = vunpack.c.h.b16 %v433
      %v780 = vunpack.c.l.b16 %v434
      %v781 = vunpack.c.h.b16 %v434
      %v782 = vunpack.c.l.b16 %v435
      %v783 = vunpack.c.h.b16 %v435
      %v784 = vunpack.c.l.b16 %v436
      %v785 = vunpack.c.h.b16 %v436
      %v786 = vunpack.c.l.b16 %v437
      %v787 = vunpack.c.h.b16 %v437
      %v788 = vunpack.c.l.b16 %v438
      %v789 = vunpack.c.h.b16 %v438
      %v790 = vunpack.c.l.b16 %v439
      %v791 = vunpack.c.h.b16 %v439
      %v792 = vunpack.c.l.b16 %v440
      %v793 = vunpack.c.h.b16 %v440
      %v794 = vunpack.c.l.b16 %v441
      %v795 = vunpack.c.h.b16 %v441
      %v796 = vunpack.c.l.b16 %v442
      %v797 = vunpack.c.h.b16 %v442
      %v798 = vunpack.c.l.b16 %v443
      %v799 = vunpack.c.h.b16 %v443
      %v800 = vunpack.c.l.b16 %v444
      %v801 = vunpack.c.h.b16 %v444
      %v802 = vunpack.c.l.b16 %v445
      %v803 = vunpack.c.h.b16 %v445
      %v804 = vunpack.c.l.b16 %v446
      %v805 = vunpack.c.h.b16 %v446
      %v806 = vunpack.c.l.b16 %v447
      %v807 = vunpack.c.h.b16 %v447
      %v808 = vunpack.c.l.b16 %v448
      %v809 = vunpack.c.h.b16 %v448
      %v810 = vpack.c.b16 %v780, %v778
      %v811 = vpack.c.b16 %v781, %v779
      %v812 = vpack.c.b16 %v784, %v782
      %v813 = vpack.c.b16 %v785, %v783
      %v814 = vpack.c.b16 %v788, %v786
      %v815 = vpack.c.b16 %v789, %v787
      %v816 = vpack.c.b16 %v792, %v790
      %v817 = vpack.c.b16 %v793, %v791
      %v818 = vpack.c.b16 %v796, %v794
      %v819 = vpack.c.b16 %v797, %v795
      %v820 = vpack.c.b16 %v800, %v798
      %v821 = vpack.c.b16 %v801, %v799
      %v822 = vpack.c.b16 %v804, %v802
      %v823 = vpack.c.b16 %v805, %v803
      %v824 = vpack.c.b16 %v808, %v806
      %v825 = vpack.c.b16 %v809, %v807
      %v827 = vshrl.u32 %v810, 16
      %v829 = vshll.u32 %v810, 16
      %v831 = vrot.slane %v829, 1
      %v832 = vor.u32 %v827, %v831
      %v834 = vshrl.u32 %v811, 16
      %v836 = vshll.u32 %v811, 16
      %v838 = vrot.slane %v836, 1
      %v839 = vor.u32 %v834, %v838
      %v841 = vshrl.u32 %v812, 16
      %v843 = vshll.u32 %v812, 16
      %v845 = vrot.slane %v843, 1
      %v846 = vor.u32 %v841, %v845
      %v848 = vshrl.u32 %v813, 16
      %v850 = vshll.u32 %v813, 16
      %v852 = vrot.slane %v850, 1
      %v853 = vor.u32 %v848, %v852
      %v855 = vshrl.u32 %v814, 16
      %v857 = vshll.u32 %v814, 16
      %v859 = vrot.slane %v857, 1
      %v860 = vor.u32 %v855, %v859
      %v862 = vshrl.u32 %v815, 16
      %v864 = vshll.u32 %v815, 16
      %v866 = vrot.slane %v864, 1
      %v867 = vor.u32 %v862, %v866
      %v869 = vshrl.u32 %v816, 16
      %v871 = vshll.u32 %v816, 16
      %v873 = vrot.slane %v871, 1
      %v874 = vor.u32 %v869, %v873
      %v876 = vshrl.u32 %v817, 16
      %v878 = vshll.u32 %v817, 16
      %v880 = vrot.slane %v878, 1
      %v881 = vor.u32 %v876, %v880
      %v883 = vshrl.u32 %v818, 16
      %v885 = vshll.u32 %v818, 16
      %v887 = vrot.slane %v885, 1
      %v888 = vor.u32 %v883, %v887
      %v890 = vshrl.u32 %v819, 16
      %v892 = vshll.u32 %v819, 16
      %v894 = vrot.slane %v892, 1
      %v895 = vor.u32 %v890, %v894
      %v897 = vshrl.u32 %v820, 16
      %v899 = vshll.u32 %v820, 16
      %v901 = vrot.slane %v899, 1
      %v902 = vor.u32 %v897, %v901
      %v904 = vshrl.u32 %v821, 16
      %v906 = vshll.u32 %v821, 16
      %v908 = vrot.slane %v906, 1
      %v909 = vor.u32 %v904, %v908
      %v911 = vshrl.u32 %v822, 16
      %v913 = vshll.u32 %v822, 16
      %v915 = vrot.slane %v913, 1
      %v916 = vor.u32 %v911, %v915
      %v918 = vshrl.u32 %v823, 16
      %v920 = vshll.u32 %v823, 16
      %v922 = vrot.slane %v920, 1
      %v923 = vor.u32 %v918, %v922
      %v925 = vshrl.u32 %v824, 16
      %v927 = vshll.u32 %v824, 16
      %v929 = vrot.slane %v927, 1
      %v930 = vor.u32 %v925, %v929
      %v932 = vshrl.u32 %v825, 16
      %v934 = vshll.u32 %v825, 16
      %v936 = vrot.slane %v934, 1
      %v937 = vor.u32 %v932, %v936
      %v946 = vunpack.c.l.b16 %v513
      %v947 = vunpack.c.h.b16 %v513
      %v948 = vunpack.c.l.b16 %v514
      %v949 = vunpack.c.h.b16 %v514
      %v950 = vunpack.c.l.b16 %v515
      %v951 = vunpack.c.h.b16 %v515
      %v952 = vunpack.c.l.b16 %v516
      %v953 = vunpack.c.h.b16 %v516
      %v954 = vunpack.c.l.b16 %v517
      %v955 = vunpack.c.h.b16 %v517
      %v956 = vunpack.c.l.b16 %v518
      %v957 = vunpack.c.h.b16 %v518
      %v958 = vunpack.c.l.b16 %v519
      %v959 = vunpack.c.h.b16 %v519
      %v960 = vunpack.c.l.b16 %v520
      %v961 = vunpack.c.h.b16 %v520
      %v978 = vunpack.c.l.b16 %v553
      %v979 = vunpack.c.h.b16 %v553
      %v980 = vunpack.c.l.b16 %v554
      %v981 = vunpack.c.h.b16 %v554
      %v982 = vunpack.c.l.b16 %v555
      %v983 = vunpack.c.h.b16 %v555
      %v984 = vunpack.c.l.b16 %v556
      %v985 = vunpack.c.h.b16 %v556
      %v986 = vunpack.c.l.b16 %v557
      %v987 = vunpack.c.h.b16 %v557
      %v988 = vunpack.c.l.b16 %v558
      %v989 = vunpack.c.h.b16 %v558
      %v990 = vunpack.c.l.b16 %v559
      %v991 = vunpack.c.h.b16 %v559
      %v992 = vunpack.c.l.b16 %v560
      %v993 = vunpack.c.h.b16 %v560
      %v994 = vunpack.c.l.b16 %v561
      %v995 = vunpack.c.h.b16 %v561
      %v996 = vunpack.c.l.b16 %v562
      %v997 = vunpack.c.h.b16 %v562
      %v998 = vunpack.c.l.b16 %v563
      %v999 = vunpack.c.h.b16 %v563
      %v1000 = vunpack.c.l.b16 %v564
      %v1001 = vunpack.c.h.b16 %v564
      %v1002 = vunpack.c.l.b16 %v565
      %v1003 = vunpack.c.h.b16 %v565
      %v1004 = vunpack.c.l.b16 %v566
      %v1005 = vunpack.c.h.b16 %v566
      %v1006 = vunpack.c.l.b16 %v567
      %v1007 = vunpack.c.h.b16 %v567
      %v1008 = vunpack.c.l.b16 %v568
      %v1009 = vunpack.c.h.b16 %v568
      %v1010 = vpack.c.b16 %v980, %v978
      %v1011 = vpack.c.b16 %v981, %v979
      %v1012 = vpack.c.b16 %v984, %v982
      %v1013 = vpack.c.b16 %v985, %v983
      %v1014 = vpack.c.b16 %v988, %v986
      %v1015 = vpack.c.b16 %v989, %v987
      %v1016 = vpack.c.b16 %v992, %v990
      %v1017 = vpack.c.b16 %v993, %v991
      %v1018 = vpack.c.b16 %v996, %v994
      %v1019 = vpack.c.b16 %v997, %v995
      %v1020 = vpack.c.b16 %v1000, %v998
      %v1021 = vpack.c.b16 %v1001, %v999
      %v1022 = vpack.c.b16 %v1004, %v1002
      %v1023 = vpack.c.b16 %v1005, %v1003
      %v1024 = vpack.c.b16 %v1008, %v1006
      %v1025 = vpack.c.b16 %v1009, %v1007
      %v1027 = vshrl.u32 %v1010, 16
      %v1029 = vshll.u32 %v1010, 16
      %v1031 = vrot.slane %v1029, 1
      %v1032 = vor.u32 %v1027, %v1031
      %v1034 = vshrl.u32 %v1011, 16
      %v1036 = vshll.u32 %v1011, 16
      %v1038 = vrot.slane %v1036, 1
      %v1039 = vor.u32 %v1034, %v1038
      %v1041 = vshrl.u32 %v1012, 16
      %v1043 = vshll.u32 %v1012, 16
      %v1045 = vrot.slane %v1043, 1
      %v1046 = vor.u32 %v1041, %v1045
      %v1048 = vshrl.u32 %v1013, 16
      %v1050 = vshll.u32 %v1013, 16
      %v1052 = vrot.slane %v1050, 1
      %v1053 = vor.u32 %v1048, %v1052
      %v1055 = vshrl.u32 %v1014, 16
      %v1057 = vshll.u32 %v1014, 16
      %v1059 = vrot.slane %v1057, 1
      %v1060 = vor.u32 %v1055, %v1059
      %v1062 = vshrl.u32 %v1015, 16
      %v1064 = vshll.u32 %v1015, 16
      %v1066 = vrot.slane %v1064, 1
      %v1067 = vor.u32 %v1062, %v1066
      %v1069 = vshrl.u32 %v1016, 16
      %v1071 = vshll.u32 %v1016, 16
      %v1073 = vrot.slane %v1071, 1
      %v1074 = vor.u32 %v1069, %v1073
      %v1076 = vshrl.u32 %v1017, 16
      %v1078 = vshll.u32 %v1017, 16
      %v1080 = vrot.slane %v1078, 1
      %v1081 = vor.u32 %v1076, %v1080
      %v1083 = vshrl.u32 %v1018, 16
      %v1085 = vshll.u32 %v1018, 16
      %v1087 = vrot.slane %v1085, 1
      %v1088 = vor.u32 %v1083, %v1087
      %v1090 = vshrl.u32 %v1019, 16
      %v1092 = vshll.u32 %v1019, 16
      %v1094 = vrot.slane %v1092, 1
      %v1095 = vor.u32 %v1090, %v1094
      %v1097 = vshrl.u32 %v1020, 16
      %v1099 = vshll.u32 %v1020, 16
      %v1101 = vrot.slane %v1099, 1
      %v1102 = vor.u32 %v1097, %v1101
      %v1104 = vshrl.u32 %v1021, 16
      %v1106 = vshll.u32 %v1021, 16
      %v1108 = vrot.slane %v1106, 1
      %v1109 = vor.u32 %v1104, %v1108
      %v1111 = vshrl.u32 %v1022, 16
      %v1113 = vshll.u32 %v1022, 16
      %v1115 = vrot.slane %v1113, 1
      %v1116 = vor.u32 %v1111, %v1115
      %v1118 = vshrl.u32 %v1023, 16
      %v1120 = vshll.u32 %v1023, 16
      %v1122 = vrot.slane %v1120, 1
      %v1123 = vor.u32 %v1118, %v1122
      %v1125 = vshrl.u32 %v1024, 16
      %v1127 = vshll.u32 %v1024, 16
      %v1129 = vrot.slane %v1127, 1
      %v1130 = vor.u32 %v1125, %v1129
      %v1132 = vshrl.u32 %v1025, 16
      %v1134 = vshll.u32 %v1025, 16
      %v1136 = vrot.slane %v1134, 1
      %v1137 = vor.u32 %v1132, %v1136
      %v1138 = vunpack.c.l.b16 %v832
      %v1139 = vunpack.c.l.b16 %v839
      %v1140 = vunpack.c.l.b16 %v1032
      %v1141 = vunpack.c.l.b16 %v1039
      %v1142 = vunpack.c.l.b16 %v846
      %v1143 = vunpack.c.l.b16 %v853
      %v1144 = vunpack.c.l.b16 %v1046
      %v1145 = vunpack.c.l.b16 %v1053
      %v1146 = vunpack.c.l.b16 %v860
      %v1147 = vunpack.c.l.b16 %v867
      %v1148 = vunpack.c.l.b16 %v1060
      %v1149 = vunpack.c.l.b16 %v1067
      %v1150 = vunpack.c.l.b16 %v874
      %v1151 = vunpack.c.l.b16 %v881
      %v1152 = vunpack.c.l.b16 %v1074
      %v1153 = vunpack.c.l.b16 %v1081
      %v1154 = vunpack.c.l.b16 %v888
      %v1155 = vunpack.c.l.b16 %v895
      %v1156 = vunpack.c.l.b16 %v1088
      %v1157 = vunpack.c.l.b16 %v1095
      %v1158 = vunpack.c.l.b16 %v902
      %v1159 = vunpack.c.l.b16 %v909
      %v1160 = vunpack.c.l.b16 %v1102
      %v1161 = vunpack.c.l.b16 %v1109
      %v1162 = vunpack.c.l.b16 %v916
      %v1163 = vunpack.c.l.b16 %v923
      %v1164 = vunpack.c.l.b16 %v1116
      %v1165 = vunpack.c.l.b16 %v1123
      %v1166 = vunpack.c.l.b16 %v930
      %v1167 = vunpack.c.l.b16 %v937
      %v1168 = vunpack.c.l.b16 %v1130
      %v1169 = vunpack.c.l.b16 %v1137
      %v1170 = vld [vmem:[%s2] sm:$0xf]
      %v1171 = vld [vmem:[%s2 + $0x4] sm:$0xf]
      %v1172 = vld [vmem:[%s2 + $0x8] sm:$0xf]
      %v1173 = vld [vmem:[%s2 + $0xc] sm:$0xf]
      %v1174 = vld [vmem:[%s2 + $0x10] sm:$0xf]
      %v1175 = vld [vmem:[%s2 + $0x14] sm:$0xf]
      %v1176 = vld [vmem:[%s2 + $0x18] sm:$0xf]
      %v1177 = vld [vmem:[%s2 + $0x1c] sm:$0xf]
      %v1178 = vld [vmem:[%s2 + $0x20] sm:$0xf]
      %v1179 = vld [vmem:[%s2 + $0x24] sm:$0xf]
      %v1180 = vld [vmem:[%s2 + $0x28] sm:$0xf]
      %v1181 = vld [vmem:[%s2 + $0x2c] sm:$0xf]
      %v1182 = vld [vmem:[%s2 + $0x30] sm:$0xf]
      %v1183 = vld [vmem:[%s2 + $0x34] sm:$0xf]
      %v1184 = vld [vmem:[%s2 + $0x38] sm:$0xf]
      %v1185 = vld [vmem:[%s2 + $0x3c] sm:$0xf]
      %v1186 = vld [vmem:[%s2 + $0x40] sm:$0xf]
      %v1187 = vld [vmem:[%s2 + $0x44] sm:$0xf]
      %v1188 = vld [vmem:[%s2 + $0x48] sm:$0xf]
      %v1189 = vld [vmem:[%s2 + $0x4c] sm:$0xf]
      %v1190 = vld [vmem:[%s2 + $0x50] sm:$0xf]
      %v1191 = vld [vmem:[%s2 + $0x54] sm:$0xf]
      %v1192 = vld [vmem:[%s2 + $0x58] sm:$0xf]
      %v1193 = vld [vmem:[%s2 + $0x5c] sm:$0xf]
      %v1194 = vld [vmem:[%s2 + $0x60] sm:$0xf]
      %v1195 = vld [vmem:[%s2 + $0x64] sm:$0xf]
      %v1196 = vld [vmem:[%s2 + $0x68] sm:$0xf]
      %v1197 = vld [vmem:[%s2 + $0x6c] sm:$0xf]
      %v1198 = vld [vmem:[%s2 + $0x70] sm:$0xf]
      %v1199 = vld [vmem:[%s2 + $0x74] sm:$0xf]
      %v1200 = vld [vmem:[%s2 + $0x78] sm:$0xf]
      %v1201 = vld [vmem:[%s2 + $0x7c] sm:$0xf]
      %v1202 = vld [vmem:[%s2 + $0x80] sm:$0xf]
      %v1203 = vld [vmem:[%s2 + $0x84] sm:$0xf]
      %v1204 = vld [vmem:[%s2 + $0x88] sm:$0xf]
      %v1205 = vld [vmem:[%s2 + $0x8c] sm:$0xf]
      %v1206 = vld [vmem:[%s2 + $0x90] sm:$0xf]
      %v1207 = vld [vmem:[%s2 + $0x94] sm:$0xf]
      %v1208 = vld [vmem:[%s2 + $0x98] sm:$0xf]
      %v1209 = vld [vmem:[%s2 + $0x9c] sm:$0xf]
      %v1210 = vld [vmem:[%s2 + $0xa0] sm:$0xf]
      %v1211 = vld [vmem:[%s2 + $0xa4] sm:$0xf]
      %v1212 = vld [vmem:[%s2 + $0xa8] sm:$0xf]
      %v1213 = vld [vmem:[%s2 + $0xac] sm:$0xf]
      %v1214 = vld [vmem:[%s2 + $0xb0] sm:$0xf]
      %v1215 = vld [vmem:[%s2 + $0xb4] sm:$0xf]
      %v1216 = vld [vmem:[%s2 + $0xb8] sm:$0xf]
      %v1217 = vld [vmem:[%s2 + $0xbc] sm:$0xf]
      %v1218 = vld [vmem:[%s2 + $0xc0] sm:$0xf]
      %v1219 = vld [vmem:[%s2 + $0xc4] sm:$0xf]
      %v1220 = vld [vmem:[%s2 + $0xc8] sm:$0xf]
      %v1221 = vld [vmem:[%s2 + $0xcc] sm:$0xf]
      %v1222 = vld [vmem:[%s2 + $0xd0] sm:$0xf]
      %v1223 = vld [vmem:[%s2 + $0xd4] sm:$0xf]
      %v1224 = vld [vmem:[%s2 + $0xd8] sm:$0xf]
      %v1225 = vld [vmem:[%s2 + $0xdc] sm:$0xf]
      %v1226 = vld [vmem:[%s2 + $0xe0] sm:$0xf]
      %v1227 = vld [vmem:[%s2 + $0xe4] sm:$0xf]
      %v1228 = vld [vmem:[%s2 + $0xe8] sm:$0xf]
      %v1229 = vld [vmem:[%s2 + $0xec] sm:$0xf]
      %v1230 = vld [vmem:[%s2 + $0xf0] sm:$0xf]
      %v1231 = vld [vmem:[%s2 + $0xf4] sm:$0xf]
      %v1232 = vld [vmem:[%s2 + $0xf8] sm:$0xf]
      %v1233 = vld [vmem:[%s2 + $0xfc] sm:$0xf]
      %v1234 = vld [vmem:[%s2 + $0x100] sm:$0xf]
      %v1235 = vld [vmem:[%s2 + $0x104] sm:$0xf]
      %v1236 = vld [vmem:[%s2 + $0x108] sm:$0xf]
      %v1237 = vld [vmem:[%s2 + $0x10c] sm:$0xf]
      %v1238 = vld [vmem:[%s2 + $0x110] sm:$0xf]
      %v1239 = vld [vmem:[%s2 + $0x114] sm:$0xf]
      %v1240 = vld [vmem:[%s2 + $0x118] sm:$0xf]
      %v1241 = vld [vmem:[%s2 + $0x11c] sm:$0xf]
      %v1242 = vld [vmem:[%s2 + $0x120] sm:$0xf]
      %v1243 = vld [vmem:[%s2 + $0x124] sm:$0xf]
      %v1244 = vld [vmem:[%s2 + $0x128] sm:$0xf]
      %v1245 = vld [vmem:[%s2 + $0x12c] sm:$0xf]
      %v1246 = vld [vmem:[%s2 + $0x130] sm:$0xf]
      %v1247 = vld [vmem:[%s2 + $0x134] sm:$0xf]
      %v1248 = vld [vmem:[%s2 + $0x138] sm:$0xf]
      %v1249 = vld [vmem:[%s2 + $0x13c] sm:$0xf]
      %v1250 = vld [vmem:[%s2 + $0x140] sm:$0xf]
      %v1251 = vld [vmem:[%s2 + $0x144] sm:$0xf]
      %v1252 = vld [vmem:[%s2 + $0x148] sm:$0xf]
      %v1253 = vld [vmem:[%s2 + $0x14c] sm:$0xf]
      %v1254 = vld [vmem:[%s2 + $0x150] sm:$0xf]
      %v1255 = vld [vmem:[%s2 + $0x154] sm:$0xf]
      %v1256 = vld [vmem:[%s2 + $0x158] sm:$0xf]
      %v1257 = vld [vmem:[%s2 + $0x15c] sm:$0xf]
      %v1258 = vld [vmem:[%s2 + $0x160] sm:$0xf]
      %v1259 = vld [vmem:[%s2 + $0x164] sm:$0xf]
      %v1260 = vld [vmem:[%s2 + $0x168] sm:$0xf]
      %v1261 = vld [vmem:[%s2 + $0x16c] sm:$0xf]
      %v1262 = vld [vmem:[%s2 + $0x170] sm:$0xf]
      %v1263 = vld [vmem:[%s2 + $0x174] sm:$0xf]
      %v1264 = vld [vmem:[%s2 + $0x178] sm:$0xf]
      %v1265 = vld [vmem:[%s2 + $0x17c] sm:$0xf]
      %v1266 = vld [vmem:[%s2 + $0x180] sm:$0xf]
      %v1267 = vld [vmem:[%s2 + $0x184] sm:$0xf]
      %v1268 = vld [vmem:[%s2 + $0x188] sm:$0xf]
      %v1269 = vld [vmem:[%s2 + $0x18c] sm:$0xf]
      %v1270 = vld [vmem:[%s2 + $0x190] sm:$0xf]
      %v1271 = vld [vmem:[%s2 + $0x194] sm:$0xf]
      %v1272 = vld [vmem:[%s2 + $0x198] sm:$0xf]
      %v1273 = vld [vmem:[%s2 + $0x19c] sm:$0xf]
      %v1274 = vld [vmem:[%s2 + $0x1a0] sm:$0xf]
      %v1275 = vld [vmem:[%s2 + $0x1a4] sm:$0xf]
      %v1276 = vld [vmem:[%s2 + $0x1a8] sm:$0xf]
      %v1277 = vld [vmem:[%s2 + $0x1ac] sm:$0xf]
      %v1278 = vld [vmem:[%s2 + $0x1b0] sm:$0xf]
      %v1279 = vld [vmem:[%s2 + $0x1b4] sm:$0xf]
      %v1280 = vld [vmem:[%s2 + $0x1b8] sm:$0xf]
      %v1281 = vld [vmem:[%s2 + $0x1bc] sm:$0xf]
      %v1282 = vld [vmem:[%s2 + $0x1c0] sm:$0xf]
      %v1283 = vld [vmem:[%s2 + $0x1c4] sm:$0xf]
      %v1284 = vld [vmem:[%s2 + $0x1c8] sm:$0xf]
      %v1285 = vld [vmem:[%s2 + $0x1cc] sm:$0xf]
      %v1286 = vld [vmem:[%s2 + $0x1d0] sm:$0xf]
      %v1287 = vld [vmem:[%s2 + $0x1d4] sm:$0xf]
      %v1288 = vld [vmem:[%s2 + $0x1d8] sm:$0xf]
      %v1289 = vld [vmem:[%s2 + $0x1dc] sm:$0xf]
      %v1290 = vld [vmem:[%s2 + $0x1e0] sm:$0xf]
      %v1291 = vld [vmem:[%s2 + $0x1e4] sm:$0xf]
      %v1292 = vld [vmem:[%s2 + $0x1e8] sm:$0xf]
      %v1293 = vld [vmem:[%s2 + $0x1ec] sm:$0xf]
      %v1294 = vld [vmem:[%s2 + $0x1f0] sm:$0xf]
      %v1295 = vld [vmem:[%s2 + $0x1f4] sm:$0xf]
      %v1296 = vld [vmem:[%s2 + $0x1f8] sm:$0xf]
      %v1297 = vld [vmem:[%s2 + $0x1fc] sm:$0xf]
      %v1298 = vld [vmem:[%s3] sm:$0x1]
      %v1300 = vperm.slane %v1298, 0
      %v1302 = vpack.c.b16 %v748, %v746
      %v1303 = vpack.c.b16 %v749, %v747
      %v1304 = vpack.c.b16 %v1142, %v1138
      %v1305 = vpack.c.b16 %v1143, %v1139
      %v1306 = vpack.c.b16 %v948, %v946
      %v1307 = vpack.c.b16 %v949, %v947
      %v1308 = vpack.c.b16 %v1144, %v1140
      %v1309 = vpack.c.b16 %v1145, %v1141
      %v1310 = vpack.c.b16 %v752, %v750
      %v1311 = vpack.c.b16 %v753, %v751
      %v1312 = vpack.c.b16 %v1150, %v1146
      %v1313 = vpack.c.b16 %v1151, %v1147
      %v1314 = vpack.c.b16 %v952, %v950
      %v1315 = vpack.c.b16 %v953, %v951
      %v1316 = vpack.c.b16 %v1152, %v1148
      %v1317 = vpack.c.b16 %v1153, %v1149
      %v1318 = vpack.c.b16 %v756, %v754
      %v1319 = vpack.c.b16 %v757, %v755
      %v1320 = vpack.c.b16 %v1158, %v1154
      %v1321 = vpack.c.b16 %v1159, %v1155
      %v1322 = vpack.c.b16 %v956, %v954
      %v1323 = vpack.c.b16 %v957, %v955
      %v1324 = vpack.c.b16 %v1160, %v1156
      %v1325 = vpack.c.b16 %v1161, %v1157
      %v1326 = vpack.c.b16 %v760, %v758
      %v1327 = vpack.c.b16 %v761, %v759
      %v1328 = vpack.c.b16 %v1166, %v1162
      %v1329 = vpack.c.b16 %v1167, %v1163
      %v1330 = vpack.c.b16 %v960, %v958
      %v1331 = vpack.c.b16 %v961, %v959
      %v1332 = vpack.c.b16 %v1168, %v1164
      %v1333 = vpack.c.b16 %v1169, %v1165
      %v1494 = vunpack.c.l.b16 %v1170
      %v1495 = vunpack.c.l.b16 %v1171
      %v1496 = vunpack.c.l.b16 %v1172
      %v1497 = vunpack.c.l.b16 %v1173
      %v1498 = vunpack.c.l.b16 %v1174
      %v1499 = vunpack.c.l.b16 %v1175
      %v1500 = vunpack.c.l.b16 %v1176
      %v1501 = vunpack.c.l.b16 %v1177
      %v1502 = vunpack.c.l.b16 %v1178
      %v1503 = vunpack.c.l.b16 %v1179
      %v1504 = vunpack.c.l.b16 %v1180
      %v1505 = vunpack.c.l.b16 %v1181
      %v1506 = vunpack.c.l.b16 %v1182
      %v1507 = vunpack.c.l.b16 %v1183
      %v1508 = vunpack.c.l.b16 %v1184
      %v1509 = vunpack.c.l.b16 %v1185
      %v1510 = vunpack.c.l.b16 %v1186
      %v1511 = vunpack.c.l.b16 %v1187
      %v1512 = vunpack.c.l.b16 %v1188
      %v1513 = vunpack.c.l.b16 %v1189
      %v1514 = vunpack.c.l.b16 %v1190
      %v1515 = vunpack.c.l.b16 %v1191
      %v1516 = vunpack.c.l.b16 %v1192
      %v1517 = vunpack.c.l.b16 %v1193
      %v1518 = vunpack.c.l.b16 %v1194
      %v1519 = vunpack.c.l.b16 %v1195
      %v1520 = vunpack.c.l.b16 %v1196
      %v1521 = vunpack.c.l.b16 %v1197
      %v1522 = vunpack.c.l.b16 %v1198
      %v1523 = vunpack.c.l.b16 %v1199
      %v1524 = vunpack.c.l.b16 %v1200
      %v1525 = vunpack.c.l.b16 %v1201
      %v1526 = vunpack.c.l.b16 %v1202
      %v1527 = vunpack.c.l.b16 %v1203
      %v1528 = vunpack.c.l.b16 %v1204
      %v1529 = vunpack.c.l.b16 %v1205
      %v1530 = vunpack.c.l.b16 %v1206
      %v1531 = vunpack.c.l.b16 %v1207
      %v1532 = vunpack.c.l.b16 %v1208
      %v1533 = vunpack.c.l.b16 %v1209
      %v1534 = vunpack.c.l.b16 %v1210
      %v1535 = vunpack.c.l.b16 %v1211
      %v1536 = vunpack.c.l.b16 %v1212
      %v1537 = vunpack.c.l.b16 %v1213
      %v1538 = vunpack.c.l.b16 %v1214
      %v1539 = vunpack.c.l.b16 %v1215
      %v1540 = vunpack.c.l.b16 %v1216
      %v1541 = vunpack.c.l.b16 %v1217
      %v1542 = vunpack.c.l.b16 %v1218
      %v1543 = vunpack.c.l.b16 %v1219
      %v1544 = vunpack.c.l.b16 %v1220
      %v1545 = vunpack.c.l.b16 %v1221
      %v1546 = vunpack.c.l.b16 %v1222
      %v1547 = vunpack.c.l.b16 %v1223
      %v1548 = vunpack.c.l.b16 %v1224
      %v1549 = vunpack.c.l.b16 %v1225
      %v1550 = vunpack.c.l.b16 %v1226
      %v1551 = vunpack.c.l.b16 %v1227
      %v1552 = vunpack.c.l.b16 %v1228
      %v1553 = vunpack.c.l.b16 %v1229
      %v1554 = vunpack.c.l.b16 %v1230
      %v1555 = vunpack.c.l.b16 %v1231
      %v1556 = vunpack.c.l.b16 %v1232
      %v1557 = vunpack.c.l.b16 %v1233
      %v1558 = vunpack.c.l.b16 %v1234
      %v1559 = vunpack.c.l.b16 %v1235
      %v1560 = vunpack.c.l.b16 %v1236
      %v1561 = vunpack.c.l.b16 %v1237
      %v1562 = vunpack.c.l.b16 %v1238
      %v1563 = vunpack.c.l.b16 %v1239
      %v1564 = vunpack.c.l.b16 %v1240
      %v1565 = vunpack.c.l.b16 %v1241
      %v1566 = vunpack.c.l.b16 %v1242
      %v1567 = vunpack.c.l.b16 %v1243
      %v1568 = vunpack.c.l.b16 %v1244
      %v1569 = vunpack.c.l.b16 %v1245
      %v1570 = vunpack.c.l.b16 %v1246
      %v1571 = vunpack.c.l.b16 %v1247
      %v1572 = vunpack.c.l.b16 %v1248
      %v1573 = vunpack.c.l.b16 %v1249
      %v1574 = vunpack.c.l.b16 %v1250
      %v1575 = vunpack.c.l.b16 %v1251
      %v1576 = vunpack.c.l.b16 %v1252
      %v1577 = vunpack.c.l.b16 %v1253
      %v1578 = vunpack.c.l.b16 %v1254
      %v1579 = vunpack.c.l.b16 %v1255
      %v1580 = vunpack.c.l.b16 %v1256
      %v1581 = vunpack.c.l.b16 %v1257
      %v1582 = vunpack.c.l.b16 %v1258
      %v1583 = vunpack.c.l.b16 %v1259
      %v1584 = vunpack.c.l.b16 %v1260
      %v1585 = vunpack.c.l.b16 %v1261
      %v1586 = vunpack.c.l.b16 %v1262
      %v1587 = vunpack.c.l.b16 %v1263
      %v1588 = vunpack.c.l.b16 %v1264
      %v1589 = vunpack.c.l.b16 %v1265
      %v1590 = vunpack.c.l.b16 %v1266
      %v1591 = vunpack.c.l.b16 %v1267
      %v1592 = vunpack.c.l.b16 %v1268
      %v1593 = vunpack.c.l.b16 %v1269
      %v1594 = vunpack.c.l.b16 %v1270
      %v1595 = vunpack.c.l.b16 %v1271
      %v1596 = vunpack.c.l.b16 %v1272
      %v1597 = vunpack.c.l.b16 %v1273
      %v1598 = vunpack.c.l.b16 %v1274
      %v1599 = vunpack.c.l.b16 %v1275
      %v1600 = vunpack.c.l.b16 %v1276
      %v1601 = vunpack.c.l.b16 %v1277
      %v1602 = vunpack.c.l.b16 %v1278
      %v1603 = vunpack.c.l.b16 %v1279
      %v1604 = vunpack.c.l.b16 %v1280
      %v1605 = vunpack.c.l.b16 %v1281
      %v1606 = vunpack.c.l.b16 %v1282
      %v1607 = vunpack.c.l.b16 %v1283
      %v1608 = vunpack.c.l.b16 %v1284
      %v1609 = vunpack.c.l.b16 %v1285
      %v1610 = vunpack.c.l.b16 %v1286
      %v1611 = vunpack.c.l.b16 %v1287
      %v1612 = vunpack.c.l.b16 %v1288
      %v1613 = vunpack.c.l.b16 %v1289
      %v1614 = vunpack.c.l.b16 %v1290
      %v1615 = vunpack.c.l.b16 %v1291
      %v1616 = vunpack.c.l.b16 %v1292
      %v1617 = vunpack.c.l.b16 %v1293
      %v1618 = vunpack.c.l.b16 %v1294
      %v1619 = vunpack.c.l.b16 %v1295
      %v1620 = vunpack.c.l.b16 %v1296
      %v1621 = vunpack.c.l.b16 %v1297
      %v1622 = vpack.c.b16 %v1495, %v1494
      %v1623 = vpack.c.b16 %v1497, %v1496
      %v1624 = vpack.c.b16 %v1499, %v1498
      %v1625 = vpack.c.b16 %v1501, %v1500
      %v1626 = vpack.c.b16 %v1503, %v1502
      %v1627 = vpack.c.b16 %v1505, %v1504
      %v1628 = vpack.c.b16 %v1507, %v1506
      %v1629 = vpack.c.b16 %v1509, %v1508
      %v1630 = vpack.c.b16 %v1511, %v1510
      %v1631 = vpack.c.b16 %v1513, %v1512
      %v1632 = vpack.c.b16 %v1515, %v1514
      %v1633 = vpack.c.b16 %v1517, %v1516
      %v1634 = vpack.c.b16 %v1519, %v1518
      %v1635 = vpack.c.b16 %v1521, %v1520
      %v1636 = vpack.c.b16 %v1523, %v1522
      %v1637 = vpack.c.b16 %v1525, %v1524
      %v1638 = vpack.c.b16 %v1527, %v1526
      %v1639 = vpack.c.b16 %v1529, %v1528
      %v1640 = vpack.c.b16 %v1531, %v1530
      %v1641 = vpack.c.b16 %v1533, %v1532
      %v1642 = vpack.c.b16 %v1535, %v1534
      %v1643 = vpack.c.b16 %v1537, %v1536
      %v1644 = vpack.c.b16 %v1539, %v1538
      %v1645 = vpack.c.b16 %v1541, %v1540
      %v1646 = vpack.c.b16 %v1543, %v1542
      %v1647 = vpack.c.b16 %v1545, %v1544
      %v1648 = vpack.c.b16 %v1547, %v1546
      %v1649 = vpack.c.b16 %v1549, %v1548
      %v1650 = vpack.c.b16 %v1551, %v1550
      %v1651 = vpack.c.b16 %v1553, %v1552
      %v1652 = vpack.c.b16 %v1555, %v1554
      %v1653 = vpack.c.b16 %v1557, %v1556
      %v1654 = vpack.c.b16 %v1559, %v1558
      %v1655 = vpack.c.b16 %v1561, %v1560
      %v1656 = vpack.c.b16 %v1563, %v1562
      %v1657 = vpack.c.b16 %v1565, %v1564
      %v1658 = vpack.c.b16 %v1567, %v1566
      %v1659 = vpack.c.b16 %v1569, %v1568
      %v1660 = vpack.c.b16 %v1571, %v1570
      %v1661 = vpack.c.b16 %v1573, %v1572
      %v1662 = vpack.c.b16 %v1575, %v1574
      %v1663 = vpack.c.b16 %v1577, %v1576
      %v1664 = vpack.c.b16 %v1579, %v1578
      %v1665 = vpack.c.b16 %v1581, %v1580
      %v1666 = vpack.c.b16 %v1583, %v1582
      %v1667 = vpack.c.b16 %v1585, %v1584
      %v1668 = vpack.c.b16 %v1587, %v1586
      %v1669 = vpack.c.b16 %v1589, %v1588
      %v1670 = vpack.c.b16 %v1591, %v1590
      %v1671 = vpack.c.b16 %v1593, %v1592
      %v1672 = vpack.c.b16 %v1595, %v1594
      %v1673 = vpack.c.b16 %v1597, %v1596
      %v1674 = vpack.c.b16 %v1599, %v1598
      %v1675 = vpack.c.b16 %v1601, %v1600
      %v1676 = vpack.c.b16 %v1603, %v1602
      %v1677 = vpack.c.b16 %v1605, %v1604
      %v1678 = vpack.c.b16 %v1607, %v1606
      %v1679 = vpack.c.b16 %v1609, %v1608
      %v1680 = vpack.c.b16 %v1611, %v1610
      %v1681 = vpack.c.b16 %v1613, %v1612
      %v1682 = vpack.c.b16 %v1615, %v1614
      %v1683 = vpack.c.b16 %v1617, %v1616
      %v1684 = vpack.c.b16 %v1619, %v1618
      %v1685 = vpack.c.b16 %v1621, %v1620
      %1750 = vmatpush.bf16.msra.mxu0 %v1629
      %1751 = vmatpush.bf16.msra.mxu0 %v1628
      %1752 = vmatpush.bf16.msra.mxu0 %v1627
      %1753 = vmatpush.bf16.msra.mxu0 %v1626
      %1754 = vmatpush.bf16.msra.mxu0 %v1625
      %1755 = vmatpush.bf16.msra.mxu0 %v1624
      %1756 = vmatpush.bf16.msra.mxu0 %v1623
      %1757 = vmatpush.bf16.msra.mxu0 %v1622
      %1758 = vmatmul.bf16.gmra.mxu0 %v1302
      %v1759 = vpop.f32.mrf.mxu0
      %v1760 = vadd.f32 %v1300, %v1759
      %v1761 = vpop.f32.mrf.mxu0
      %v1762 = vadd.f32 %v1300, %v1761
      %1763 = vmatmul.bf16.gmra.mxu0 %v1310
      %v1764 = vpop.f32.mrf.mxu0
      %v1765 = vadd.f32 %v1300, %v1764
      %v1766 = vpop.f32.mrf.mxu0
      %v1767 = vadd.f32 %v1300, %v1766
      %1768 = vmatmul.bf16.gmra.mxu0 %v1318
      %v1769 = vpop.f32.mrf.mxu0
      %v1770 = vadd.f32 %v1300, %v1769
      %v1771 = vpop.f32.mrf.mxu0
      %v1772 = vadd.f32 %v1300, %v1771
      %1773 = vmatmul.bf16.gmra.mxu0 %v1326
      %v1774 = vpop.f32.mrf.mxu0
      %v1775 = vadd.f32 %v1300, %v1774
      %v1776 = vpop.f32.mrf.mxu0
      %v1777 = vadd.f32 %v1300, %v1776
      %1778 = vdwg.mxu0
      %1779 = vmatpush.bf16.msra.mxu0 %v1637
      %1780 = vmatpush.bf16.msra.mxu0 %v1636
      %1781 = vmatpush.bf16.msra.mxu0 %v1635
      %1782 = vmatpush.bf16.msra.mxu0 %v1634
      %1783 = vmatpush.bf16.msra.mxu0 %v1633
      %1784 = vmatpush.bf16.msra.mxu0 %v1632
      %1785 = vmatpush.bf16.msra.mxu0 %v1631
      %1786 = vmatpush.bf16.msra.mxu0 %v1630
      %1787 = vmatmul.bf16.gmra.mxu0 %v1303
      %v1788 = vpop.f32.mrf.mxu0
      %v1789 = vadd.f32 %v1760, %v1788
      %v1790 = vpop.f32.mrf.mxu0
      %v1791 = vadd.f32 %v1762, %v1790
      %1792 = vmatmul.bf16.gmra.mxu0 %v1311
      %v1793 = vpop.f32.mrf.mxu0
      %v1794 = vadd.f32 %v1765, %v1793
      %v1795 = vpop.f32.mrf.mxu0
      %v1796 = vadd.f32 %v1767, %v1795
      %1797 = vmatmul.bf16.gmra.mxu0 %v1319
      %v1798 = vpop.f32.mrf.mxu0
      %v1799 = vadd.f32 %v1770, %v1798
      %v1800 = vpop.f32.mrf.mxu0
      %v1801 = vadd.f32 %v1772, %v1800
      %1802 = vmatmul.bf16.gmra.mxu0 %v1327
      %v1803 = vpop.f32.mrf.mxu0
      %v1804 = vadd.f32 %v1775, %v1803
      %v1805 = vpop.f32.mrf.mxu0
      %v1806 = vadd.f32 %v1777, %v1805
      %1807 = vdwg.mxu0
      %1808 = vmatpush.bf16.msra.mxu0 %v1645
      %1809 = vmatpush.bf16.msra.mxu0 %v1644
      %1810 = vmatpush.bf16.msra.mxu0 %v1643
      %1811 = vmatpush.bf16.msra.mxu0 %v1642
      %1812 = vmatpush.bf16.msra.mxu0 %v1641
      %1813 = vmatpush.bf16.msra.mxu0 %v1640
      %1814 = vmatpush.bf16.msra.mxu0 %v1639
      %1815 = vmatpush.bf16.msra.mxu0 %v1638
      %1816 = vmatmul.bf16.gmra.mxu0 %v1304
      %v1817 = vpop.f32.mrf.mxu0
      %v1818 = vadd.f32 %v1789, %v1817
      %v1819 = vpop.f32.mrf.mxu0
      %v1820 = vadd.f32 %v1791, %v1819
      %1821 = vmatmul.bf16.gmra.mxu0 %v1312
      %v1822 = vpop.f32.mrf.mxu0
      %v1823 = vadd.f32 %v1794, %v1822
      %v1824 = vpop.f32.mrf.mxu0
      %v1825 = vadd.f32 %v1796, %v1824
      %1826 = vmatmul.bf16.gmra.mxu0 %v1320
      %v1827 = vpop.f32.mrf.mxu0
      %v1828 = vadd.f32 %v1799, %v1827
      %v1829 = vpop.f32.mrf.mxu0
      %v1830 = vadd.f32 %v1801, %v1829
      %1831 = vmatmul.bf16.gmra.mxu0 %v1328
      %v1832 = vpop.f32.mrf.mxu0
      %v1833 = vadd.f32 %v1804, %v1832
      %v1834 = vpop.f32.mrf.mxu0
      %v1835 = vadd.f32 %v1806, %v1834
      %1836 = vdwg.mxu0
      %1837 = vmatpush.bf16.msra.mxu0 %v1653
      %1838 = vmatpush.bf16.msra.mxu0 %v1652
      %1839 = vmatpush.bf16.msra.mxu0 %v1651
      %1840 = vmatpush.bf16.msra.mxu0 %v1650
      %1841 = vmatpush.bf16.msra.mxu0 %v1649
      %1842 = vmatpush.bf16.msra.mxu0 %v1648
      %1843 = vmatpush.bf16.msra.mxu0 %v1647
      %1844 = vmatpush.bf16.msra.mxu0 %v1646
      %1845 = vmatmul.bf16.gmra.mxu0 %v1305
      %v1846 = vpop.f32.mrf.mxu0
      %v1847 = vadd.f32 %v1818, %v1846
      %v1848 = vpop.f32.mrf.mxu0
      %v1849 = vadd.f32 %v1820, %v1848
      %1850 = vmatmul.bf16.gmra.mxu0 %v1313
      %v1851 = vpop.f32.mrf.mxu0
      %v1852 = vadd.f32 %v1823, %v1851
      %v1853 = vpop.f32.mrf.mxu0
      %v1854 = vadd.f32 %v1825, %v1853
      %1855 = vmatmul.bf16.gmra.mxu0 %v1321
      %v1856 = vpop.f32.mrf.mxu0
      %v1857 = vadd.f32 %v1828, %v1856
      %v1858 = vpop.f32.mrf.mxu0
      %v1859 = vadd.f32 %v1830, %v1858
      %1860 = vmatmul.bf16.gmra.mxu0 %v1329
      %v1861 = vpop.f32.mrf.mxu0
      %v1862 = vadd.f32 %v1833, %v1861
      %v1863 = vpop.f32.mrf.mxu0
      %v1864 = vadd.f32 %v1835, %v1863
      %1865 = vdwg.mxu0
      %1866 = vmatpush.bf16.msra.mxu0 %v1661
      %1867 = vmatpush.bf16.msra.mxu0 %v1660
      %1868 = vmatpush.bf16.msra.mxu0 %v1659
      %1869 = vmatpush.bf16.msra.mxu0 %v1658
      %1870 = vmatpush.bf16.msra.mxu0 %v1657
      %1871 = vmatpush.bf16.msra.mxu0 %v1656
      %1872 = vmatpush.bf16.msra.mxu0 %v1655
      %1873 = vmatpush.bf16.msra.mxu0 %v1654
      %1874 = vmatmul.bf16.gmra.mxu0 %v1306
      %v1875 = vpop.f32.mrf.mxu0
      %v1876 = vadd.f32 %v1847, %v1875
      %v1877 = vpop.f32.mrf.mxu0
      %v1878 = vadd.f32 %v1849, %v1877
      %1879 = vmatmul.bf16.gmra.mxu0 %v1314
      %v1880 = vpop.f32.mrf.mxu0
      %v1881 = vadd.f32 %v1852, %v1880
      %v1882 = vpop.f32.mrf.mxu0
      %v1883 = vadd.f32 %v1854, %v1882
      %1884 = vmatmul.bf16.gmra.mxu0 %v1322
      %v1885 = vpop.f32.mrf.mxu0
      %v1886 = vadd.f32 %v1857, %v1885
      %v1887 = vpop.f32.mrf.mxu0
      %v1888 = vadd.f32 %v1859, %v1887
      %1889 = vmatmul.bf16.gmra.mxu0 %v1330
      %v1890 = vpop.f32.mrf.mxu0
      %v1891 = vadd.f32 %v1862, %v1890
      %v1892 = vpop.f32.mrf.mxu0
      %v1893 = vadd.f32 %v1864, %v1892
      %1894 = vdwg.mxu0
      %1895 = vmatpush.bf16.msra.mxu0 %v1669
      %1896 = vmatpush.bf16.msra.mxu0 %v1668
      %1897 = vmatpush.bf16.msra.mxu0 %v1667
      %1898 = vmatpush.bf16.msra.mxu0 %v1666
      %1899 = vmatpush.bf16.msra.mxu0 %v1665
      %1900 = vmatpush.bf16.msra.mxu0 %v1664
      %1901 = vmatpush.bf16.msra.mxu0 %v1663
      %1902 = vmatpush.bf16.msra.mxu0 %v1662
      %1903 = vmatmul.bf16.gmra.mxu0 %v1307
      %v1904 = vpop.f32.mrf.mxu0
      %v1905 = vadd.f32 %v1876, %v1904
      %v1906 = vpop.f32.mrf.mxu0
      %v1907 = vadd.f32 %v1878, %v1906
      %1908 = vmatmul.bf16.gmra.mxu0 %v1315
      %v1909 = vpop.f32.mrf.mxu0
      %v1910 = vadd.f32 %v1881, %v1909
      %v1911 = vpop.f32.mrf.mxu0
      %v1912 = vadd.f32 %v1883, %v1911
      %1913 = vmatmul.bf16.gmra.mxu0 %v1323
      %v1914 = vpop.f32.mrf.mxu0
      %v1915 = vadd.f32 %v1886, %v1914
      %v1916 = vpop.f32.mrf.mxu0
      %v1917 = vadd.f32 %v1888, %v1916
      %1918 = vmatmul.bf16.gmra.mxu0 %v1331
      %v1919 = vpop.f32.mrf.mxu0
      %v1920 = vadd.f32 %v1891, %v1919
      %v1921 = vpop.f32.mrf.mxu0
      %v1922 = vadd.f32 %v1893, %v1921
      %1923 = vdwg.mxu0
      %1924 = vmatpush.bf16.msra.mxu0 %v1677
      %1925 = vmatpush.bf16.msra.mxu0 %v1676
      %1926 = vmatpush.bf16.msra.mxu0 %v1675
      %1927 = vmatpush.bf16.msra.mxu0 %v1674
      %1928 = vmatpush.bf16.msra.mxu0 %v1673
      %1929 = vmatpush.bf16.msra.mxu0 %v1672
      %1930 = vmatpush.bf16.msra.mxu0 %v1671
      %1931 = vmatpush.bf16.msra.mxu0 %v1670
      %1932 = vmatmul.bf16.gmra.mxu0 %v1308
      %v1933 = vpop.f32.mrf.mxu0
      %v1934 = vadd.f32 %v1905, %v1933
      %v1935 = vpop.f32.mrf.mxu0
      %v1936 = vadd.f32 %v1907, %v1935
      %1937 = vmatmul.bf16.gmra.mxu0 %v1316
      %v1938 = vpop.f32.mrf.mxu0
      %v1939 = vadd.f32 %v1910, %v1938
      %v1940 = vpop.f32.mrf.mxu0
      %v1941 = vadd.f32 %v1912, %v1940
      %1942 = vmatmul.bf16.gmra.mxu0 %v1324
      %v1943 = vpop.f32.mrf.mxu0
      %v1944 = vadd.f32 %v1915, %v1943
      %v1945 = vpop.f32.mrf.mxu0
      %v1946 = vadd.f32 %v1917, %v1945
      %1947 = vmatmul.bf16.gmra.mxu0 %v1332
      %v1948 = vpop.f32.mrf.mxu0
      %v1949 = vadd.f32 %v1920, %v1948
      %v1950 = vpop.f32.mrf.mxu0
      %v1951 = vadd.f32 %v1922, %v1950
      %1952 = vdwg.mxu0
      %1953 = vmatpush.bf16.msra.mxu0 %v1685
      %1954 = vmatpush.bf16.msra.mxu0 %v1684
      %1955 = vmatpush.bf16.msra.mxu0 %v1683
      %1956 = vmatpush.bf16.msra.mxu0 %v1682
      %1957 = vmatpush.bf16.msra.mxu0 %v1681
      %1958 = vmatpush.bf16.msra.mxu0 %v1680
      %1959 = vmatpush.bf16.msra.mxu0 %v1679
      %1960 = vmatpush.bf16.msra.mxu0 %v1678
      %1961 = vmatmul.bf16.gmra.mxu0 %v1309
      %v1962 = vpop.f32.mrf.mxu0
      %v1963 = vadd.f32 %v1934, %v1962
      %v1964 = vpop.f32.mrf.mxu0
      %v1965 = vadd.f32 %v1936, %v1964
      %1966 = vmatmul.bf16.gmra.mxu0 %v1317
      %v1967 = vpop.f32.mrf.mxu0
      %v1968 = vadd.f32 %v1939, %v1967
      %v1969 = vpop.f32.mrf.mxu0
      %v1970 = vadd.f32 %v1941, %v1969
      %1971 = vmatmul.bf16.gmra.mxu0 %v1325
      %v1972 = vpop.f32.mrf.mxu0
      %v1973 = vadd.f32 %v1944, %v1972
      %v1974 = vpop.f32.mrf.mxu0
      %v1975 = vadd.f32 %v1946, %v1974
      %1976 = vmatmul.bf16.gmra.mxu0 %v1333
      %v1977 = vpop.f32.mrf.mxu0
      %v1978 = vadd.f32 %v1949, %v1977
      %v1979 = vpop.f32.mrf.mxu0
      %v1980 = vadd.f32 %v1951, %v1979
      %1981 = vdwg.mxu0
      %v1998 = vunpack.c.l.b16 %v481
      %v1999 = vunpack.c.h.b16 %v481
      %v2000 = vunpack.c.l.b16 %v482
      %v2001 = vunpack.c.h.b16 %v482
      %v2002 = vunpack.c.l.b16 %v483
      %v2003 = vunpack.c.h.b16 %v483
      %v2004 = vunpack.c.l.b16 %v484
      %v2005 = vunpack.c.h.b16 %v484
      %v2006 = vunpack.c.l.b16 %v485
      %v2007 = vunpack.c.h.b16 %v485
      %v2008 = vunpack.c.l.b16 %v486
      %v2009 = vunpack.c.h.b16 %v486
      %v2010 = vunpack.c.l.b16 %v487
      %v2011 = vunpack.c.h.b16 %v487
      %v2012 = vunpack.c.l.b16 %v488
      %v2013 = vunpack.c.h.b16 %v488
      %v2014 = vunpack.c.l.b16 %v489
      %v2015 = vunpack.c.h.b16 %v489
      %v2016 = vunpack.c.l.b16 %v490
      %v2017 = vunpack.c.h.b16 %v490
      %v2018 = vunpack.c.l.b16 %v491
      %v2019 = vunpack.c.h.b16 %v491
      %v2020 = vunpack.c.l.b16 %v492
      %v2021 = vunpack.c.h.b16 %v492
      %v2022 = vunpack.c.l.b16 %v493
      %v2023 = vunpack.c.h.b16 %v493
      %v2024 = vunpack.c.l.b16 %v494
      %v2025 = vunpack.c.h.b16 %v494
      %v2026 = vunpack.c.l.b16 %v495
      %v2027 = vunpack.c.h.b16 %v495
      %v2028 = vunpack.c.l.b16 %v496
      %v2029 = vunpack.c.h.b16 %v496
      %v2030 = vpack.c.b16 %v2000, %v1998
      %v2031 = vpack.c.b16 %v2001, %v1999
      %v2032 = vpack.c.b16 %v2004, %v2002
      %v2033 = vpack.c.b16 %v2005, %v2003
      %v2034 = vpack.c.b16 %v2008, %v2006
      %v2035 = vpack.c.b16 %v2009, %v2007
      %v2036 = vpack.c.b16 %v2012, %v2010
      %v2037 = vpack.c.b16 %v2013, %v2011
      %v2038 = vpack.c.b16 %v2016, %v2014
      %v2039 = vpack.c.b16 %v2017, %v2015
      %v2040 = vpack.c.b16 %v2020, %v2018
      %v2041 = vpack.c.b16 %v2021, %v2019
      %v2042 = vpack.c.b16 %v2024, %v2022
      %v2043 = vpack.c.b16 %v2025, %v2023
      %v2044 = vpack.c.b16 %v2028, %v2026
      %v2045 = vpack.c.b16 %v2029, %v2027
      %v2047 = vshrl.u32 %v2030, 16
      %v2049 = vshll.u32 %v2030, 16
      %v2051 = vrot.slane %v2049, 1
      %v2052 = vor.u32 %v2047, %v2051
      %v2054 = vshrl.u32 %v2031, 16
      %v2056 = vshll.u32 %v2031, 16
      %v2058 = vrot.slane %v2056, 1
      %v2059 = vor.u32 %v2054, %v2058
      %v2061 = vshrl.u32 %v2032, 16
      %v2063 = vshll.u32 %v2032, 16
      %v2065 = vrot.slane %v2063, 1
      %v2066 = vor.u32 %v2061, %v2065
      %v2068 = vshrl.u32 %v2033, 16
      %v2070 = vshll.u32 %v2033, 16
      %v2072 = vrot.slane %v2070, 1
      %v2073 = vor.u32 %v2068, %v2072
      %v2075 = vshrl.u32 %v2034, 16
      %v2077 = vshll.u32 %v2034, 16
      %v2079 = vrot.slane %v2077, 1
      %v2080 = vor.u32 %v2075, %v2079
      %v2082 = vshrl.u32 %v2035, 16
      %v2084 = vshll.u32 %v2035, 16
      %v2086 = vrot.slane %v2084, 1
      %v2087 = vor.u32 %v2082, %v2086
      %v2089 = vshrl.u32 %v2036, 16
      %v2091 = vshll.u32 %v2036, 16
      %v2093 = vrot.slane %v2091, 1
      %v2094 = vor.u32 %v2089, %v2093
      %v2096 = vshrl.u32 %v2037, 16
      %v2098 = vshll.u32 %v2037, 16
      %v2100 = vrot.slane %v2098, 1
      %v2101 = vor.u32 %v2096, %v2100
      %v2103 = vshrl.u32 %v2038, 16
      %v2105 = vshll.u32 %v2038, 16
      %v2107 = vrot.slane %v2105, 1
      %v2108 = vor.u32 %v2103, %v2107
      %v2110 = vshrl.u32 %v2039, 16
      %v2112 = vshll.u32 %v2039, 16
      %v2114 = vrot.slane %v2112, 1
      %v2115 = vor.u32 %v2110, %v2114
      %v2117 = vshrl.u32 %v2040, 16
      %v2119 = vshll.u32 %v2040, 16
      %v2121 = vrot.slane %v2119, 1
      %v2122 = vor.u32 %v2117, %v2121
      %v2124 = vshrl.u32 %v2041, 16
      %v2126 = vshll.u32 %v2041, 16
      %v2128 = vrot.slane %v2126, 1
      %v2129 = vor.u32 %v2124, %v2128
      %v2131 = vshrl.u32 %v2042, 16
      %v2133 = vshll.u32 %v2042, 16
      %v2135 = vrot.slane %v2133, 1
      %v2136 = vor.u32 %v2131, %v2135
      %v2138 = vshrl.u32 %v2043, 16
      %v2140 = vshll.u32 %v2043, 16
      %v2142 = vrot.slane %v2140, 1
      %v2143 = vor.u32 %v2138, %v2142
      %v2145 = vshrl.u32 %v2044, 16
      %v2147 = vshll.u32 %v2044, 16
      %v2149 = vrot.slane %v2147, 1
      %v2150 = vor.u32 %v2145, %v2149
      %v2152 = vshrl.u32 %v2045, 16
      %v2154 = vshll.u32 %v2045, 16
      %v2156 = vrot.slane %v2154, 1
      %v2157 = vor.u32 %v2152, %v2156
      %v2174 = vunpack.c.l.b16 %v601
      %v2175 = vunpack.c.h.b16 %v601
      %v2176 = vunpack.c.l.b16 %v602
      %v2177 = vunpack.c.h.b16 %v602
      %v2178 = vunpack.c.l.b16 %v603
      %v2179 = vunpack.c.h.b16 %v603
      %v2180 = vunpack.c.l.b16 %v604
      %v2181 = vunpack.c.h.b16 %v604
      %v2182 = vunpack.c.l.b16 %v605
      %v2183 = vunpack.c.h.b16 %v605
      %v2184 = vunpack.c.l.b16 %v606
      %v2185 = vunpack.c.h.b16 %v606
      %v2186 = vunpack.c.l.b16 %v607
      %v2187 = vunpack.c.h.b16 %v607
      %v2188 = vunpack.c.l.b16 %v608
      %v2189 = vunpack.c.h.b16 %v608
      %v2190 = vunpack.c.l.b16 %v609
      %v2191 = vunpack.c.h.b16 %v609
      %v2192 = vunpack.c.l.b16 %v610
      %v2193 = vunpack.c.h.b16 %v610
      %v2194 = vunpack.c.l.b16 %v611
      %v2195 = vunpack.c.h.b16 %v611
      %v2196 = vunpack.c.l.b16 %v612
      %v2197 = vunpack.c.h.b16 %v612
      %v2198 = vunpack.c.l.b16 %v613
      %v2199 = vunpack.c.h.b16 %v613
      %v2200 = vunpack.c.l.b16 %v614
      %v2201 = vunpack.c.h.b16 %v614
      %v2202 = vunpack.c.l.b16 %v615
      %v2203 = vunpack.c.h.b16 %v615
      %v2204 = vunpack.c.l.b16 %v616
      %v2205 = vunpack.c.h.b16 %v616
      %v2206 = vpack.c.b16 %v2176, %v2174
      %v2207 = vpack.c.b16 %v2177, %v2175
      %v2208 = vpack.c.b16 %v2180, %v2178
      %v2209 = vpack.c.b16 %v2181, %v2179
      %v2210 = vpack.c.b16 %v2184, %v2182
      %v2211 = vpack.c.b16 %v2185, %v2183
      %v2212 = vpack.c.b16 %v2188, %v2186
      %v2213 = vpack.c.b16 %v2189, %v2187
      %v2214 = vpack.c.b16 %v2192, %v2190
      %v2215 = vpack.c.b16 %v2193, %v2191
      %v2216 = vpack.c.b16 %v2196, %v2194
      %v2217 = vpack.c.b16 %v2197, %v2195
      %v2218 = vpack.c.b16 %v2200, %v2198
      %v2219 = vpack.c.b16 %v2201, %v2199
      %v2220 = vpack.c.b16 %v2204, %v2202
      %v2221 = vpack.c.b16 %v2205, %v2203
      %v2223 = vshrl.u32 %v2206, 16
      %v2225 = vshll.u32 %v2206, 16
      %v2227 = vrot.slane %v2225, 1
      %v2228 = vor.u32 %v2223, %v2227
      %v2230 = vshrl.u32 %v2207, 16
      %v2232 = vshll.u32 %v2207, 16
      %v2234 = vrot.slane %v2232, 1
      %v2235 = vor.u32 %v2230, %v2234
      %v2237 = vshrl.u32 %v2208, 16
      %v2239 = vshll.u32 %v2208, 16
      %v2241 = vrot.slane %v2239, 1
      %v2242 = vor.u32 %v2237, %v2241
      %v2244 = vshrl.u32 %v2209, 16
      %v2246 = vshll.u32 %v2209, 16
      %v2248 = vrot.slane %v2246, 1
      %v2249 = vor.u32 %v2244, %v2248
      %v2251 = vshrl.u32 %v2210, 16
      %v2253 = vshll.u32 %v2210, 16
      %v2255 = vrot.slane %v2253, 1
      %v2256 = vor.u32 %v2251, %v2255
      %v2258 = vshrl.u32 %v2211, 16
      %v2260 = vshll.u32 %v2211, 16
      %v2262 = vrot.slane %v2260, 1
      %v2263 = vor.u32 %v2258, %v2262
      %v2265 = vshrl.u32 %v2212, 16
      %v2267 = vshll.u32 %v2212, 16
      %v2269 = vrot.slane %v2267, 1
      %v2270 = vor.u32 %v2265, %v2269
      %v2272 = vshrl.u32 %v2213, 16
      %v2274 = vshll.u32 %v2213, 16
      %v2276 = vrot.slane %v2274, 1
      %v2277 = vor.u32 %v2272, %v2276
      %v2279 = vshrl.u32 %v2214, 16
      %v2281 = vshll.u32 %v2214, 16
      %v2283 = vrot.slane %v2281, 1
      %v2284 = vor.u32 %v2279, %v2283
      %v2286 = vshrl.u32 %v2215, 16
      %v2288 = vshll.u32 %v2215, 16
      %v2290 = vrot.slane %v2288, 1
      %v2291 = vor.u32 %v2286, %v2290
      %v2293 = vshrl.u32 %v2216, 16
      %v2295 = vshll.u32 %v2216, 16
      %v2297 = vrot.slane %v2295, 1
      %v2298 = vor.u32 %v2293, %v2297
      %v2300 = vshrl.u32 %v2217, 16
      %v2302 = vshll.u32 %v2217, 16
      %v2304 = vrot.slane %v2302, 1
      %v2305 = vor.u32 %v2300, %v2304
      %v2307 = vshrl.u32 %v2218, 16
      %v2309 = vshll.u32 %v2218, 16
      %v2311 = vrot.slane %v2309, 1
      %v2312 = vor.u32 %v2307, %v2311
      %v2314 = vshrl.u32 %v2219, 16
      %v2316 = vshll.u32 %v2219, 16
      %v2318 = vrot.slane %v2316, 1
      %v2319 = vor.u32 %v2314, %v2318
      %v2321 = vshrl.u32 %v2220, 16
      %v2323 = vshll.u32 %v2220, 16
      %v2325 = vrot.slane %v2323, 1
      %v2326 = vor.u32 %v2321, %v2325
      %v2328 = vshrl.u32 %v2221, 16
      %v2330 = vshll.u32 %v2221, 16
      %v2332 = vrot.slane %v2330, 1
      %v2333 = vor.u32 %v2328, %v2332
      %v2334 = vunpack.c.l.b16 %v2052
      %v2335 = vunpack.c.l.b16 %v2059
      %v2336 = vunpack.c.l.b16 %v2228
      %v2337 = vunpack.c.l.b16 %v2235
      %v2338 = vunpack.c.h.b16 %v2052
      %v2339 = vunpack.c.h.b16 %v2059
      %v2340 = vunpack.c.h.b16 %v2228
      %v2341 = vunpack.c.h.b16 %v2235
      %v2342 = vunpack.c.l.b16 %v2066
      %v2343 = vunpack.c.l.b16 %v2073
      %v2344 = vunpack.c.l.b16 %v2242
      %v2345 = vunpack.c.l.b16 %v2249
      %v2346 = vunpack.c.h.b16 %v2066
      %v2347 = vunpack.c.h.b16 %v2073
      %v2348 = vunpack.c.h.b16 %v2242
      %v2349 = vunpack.c.h.b16 %v2249
      %v2350 = vunpack.c.l.b16 %v2080
      %v2351 = vunpack.c.l.b16 %v2087
      %v2352 = vunpack.c.l.b16 %v2256
      %v2353 = vunpack.c.l.b16 %v2263
      %v2354 = vunpack.c.h.b16 %v2080
      %v2355 = vunpack.c.h.b16 %v2087
      %v2356 = vunpack.c.h.b16 %v2256
      %v2357 = vunpack.c.h.b16 %v2263
      %v2358 = vunpack.c.l.b16 %v2094
      %v2359 = vunpack.c.l.b16 %v2101
      %v2360 = vunpack.c.l.b16 %v2270
      %v2361 = vunpack.c.l.b16 %v2277
      %v2362 = vunpack.c.h.b16 %v2094
      %v2363 = vunpack.c.h.b16 %v2101
      %v2364 = vunpack.c.h.b16 %v2270
      %v2365 = vunpack.c.h.b16 %v2277
      %v2366 = vunpack.c.l.b16 %v2108
      %v2367 = vunpack.c.l.b16 %v2115
      %v2368 = vunpack.c.l.b16 %v2284
      %v2369 = vunpack.c.l.b16 %v2291
      %v2370 = vunpack.c.h.b16 %v2108
      %v2371 = vunpack.c.h.b16 %v2115
      %v2372 = vunpack.c.h.b16 %v2284
      %v2373 = vunpack.c.h.b16 %v2291
      %v2374 = vunpack.c.l.b16 %v2122
      %v2375 = vunpack.c.l.b16 %v2129
      %v2376 = vunpack.c.l.b16 %v2298
      %v2377 = vunpack.c.l.b16 %v2305
      %v2378 = vunpack.c.h.b16 %v2122
      %v2379 = vunpack.c.h.b16 %v2129
      %v2380 = vunpack.c.h.b16 %v2298
      %v2381 = vunpack.c.h.b16 %v2305
      %v2382 = vunpack.c.l.b16 %v2136
      %v2383 = vunpack.c.l.b16 %v2143
      %v2384 = vunpack.c.l.b16 %v2312
      %v2385 = vunpack.c.l.b16 %v2319
      %v2386 = vunpack.c.h.b16 %v2136
      %v2387 = vunpack.c.h.b16 %v2143
      %v2388 = vunpack.c.h.b16 %v2312
      %v2389 = vunpack.c.h.b16 %v2319
      %v2390 = vunpack.c.l.b16 %v2150
      %v2391 = vunpack.c.l.b16 %v2157
      %v2392 = vunpack.c.l.b16 %v2326
      %v2393 = vunpack.c.l.b16 %v2333
      %v2394 = vunpack.c.h.b16 %v2150
      %v2395 = vunpack.c.h.b16 %v2157
      %v2396 = vunpack.c.h.b16 %v2326
      %v2397 = vunpack.c.h.b16 %v2333
      %v2398 = vpack.c.b16 %v779, %v778
      %v2399 = vpack.c.b16 %v2335, %v2334
      %v2400 = vpack.c.b16 %v979, %v978
      %v2401 = vpack.c.b16 %v2337, %v2336
      %v2402 = vpack.c.b16 %v781, %v780
      %v2403 = vpack.c.b16 %v2339, %v2338
      %v2404 = vpack.c.b16 %v981, %v980
      %v2405 = vpack.c.b16 %v2341, %v2340
      %v2406 = vpack.c.b16 %v783, %v782
      %v2407 = vpack.c.b16 %v2343, %v2342
      %v2408 = vpack.c.b16 %v983, %v982
      %v2409 = vpack.c.b16 %v2345, %v2344
      %v2410 = vpack.c.b16 %v785, %v784
      %v2411 = vpack.c.b16 %v2347, %v2346
      %v2412 = vpack.c.b16 %v985, %v984
      %v2413 = vpack.c.b16 %v2349, %v2348
      %v2414 = vpack.c.b16 %v787, %v786
      %v2415 = vpack.c.b16 %v2351, %v2350
      %v2416 = vpack.c.b16 %v987, %v986
      %v2417 = vpack.c.b16 %v2353, %v2352
      %v2418 = vpack.c.b16 %v789, %v788
      %v2419 = vpack.c.b16 %v2355, %v2354
      %v2420 = vpack.c.b16 %v989, %v988
      %v2421 = vpack.c.b16 %v2357, %v2356
      %v2422 = vpack.c.b16 %v791, %v790
      %v2423 = vpack.c.b16 %v2359, %v2358
      %v2424 = vpack.c.b16 %v991, %v990
      %v2425 = vpack.c.b16 %v2361, %v2360
      %v2426 = vpack.c.b16 %v793, %v792
      %v2427 = vpack.c.b16 %v2363, %v2362
      %v2428 = vpack.c.b16 %v993, %v992
      %v2429 = vpack.c.b16 %v2365, %v2364
      %v2430 = vpack.c.b16 %v795, %v794
      %v2431 = vpack.c.b16 %v2367, %v2366
      %v2432 = vpack.c.b16 %v995, %v994
      %v2433 = vpack.c.b16 %v2369, %v2368
      %v2434 = vpack.c.b16 %v797, %v796
      %v2435 = vpack.c.b16 %v2371, %v2370
      %v2436 = vpack.c.b16 %v997, %v996
      %v2437 = vpack.c.b16 %v2373, %v2372
      %v2438 = vpack.c.b16 %v799, %v798
      %v2439 = vpack.c.b16 %v2375, %v2374
      %v2440 = vpack.c.b16 %v999, %v998
      %v2441 = vpack.c.b16 %v2377, %v2376
      %v2442 = vpack.c.b16 %v801, %v800
      %v2443 = vpack.c.b16 %v2379, %v2378
      %v2444 = vpack.c.b16 %v1001, %v1000
      %v2445 = vpack.c.b16 %v2381, %v2380
      %v2446 = vpack.c.b16 %v803, %v802
      %v2447 = vpack.c.b16 %v2383, %v2382
      %v2448 = vpack.c.b16 %v1003, %v1002
      %v2449 = vpack.c.b16 %v2385, %v2384
      %v2450 = vpack.c.b16 %v805, %v804
      %v2451 = vpack.c.b16 %v2387, %v2386
      %v2452 = vpack.c.b16 %v1005, %v1004
      %v2453 = vpack.c.b16 %v2389, %v2388
      %v2454 = vpack.c.b16 %v807, %v806
      %v2455 = vpack.c.b16 %v2391, %v2390
      %v2456 = vpack.c.b16 %v1007, %v1006
      %v2457 = vpack.c.b16 %v2393, %v2392
      %v2458 = vpack.c.b16 %v809, %v808
      %v2459 = vpack.c.b16 %v2395, %v2394
      %v2460 = vpack.c.b16 %v1009, %v1008
      %v2461 = vpack.c.b16 %v2397, %v2396
      %vm2462 = vsmask.f32 3328
      %vm2463 = vsmask.f32 7440
      %vm2464 = vmor %vm2462, %vm2463
      %v2466 = vshrl.u32 %v2398, 16
      %v2468 = vrot.slane %v2466, 4
      %v2469 = vshll.u32 %v2398, 16
      %v2471 = vrot.slane %v2469, 5
      %v2472 = vor.u32 %v2468, %v2471
      %v2473 = vrot.slane %v2472, 4
      %v2475 = vshll.u32 %v2402, 16
      %v2477 = vrot.slane %v2475, 5
      %v2478 = vsel %vm2464, %v2473, %v2477
      %v2480 = vshrl.u32 %v2399, 16
      %v2482 = vrot.slane %v2480, 4
      %v2483 = vshll.u32 %v2399, 16
      %v2485 = vrot.slane %v2483, 5
      %v2486 = vor.u32 %v2482, %v2485
      %v2487 = vrot.slane %v2486, 4
      %v2489 = vshll.u32 %v2403, 16
      %v2491 = vrot.slane %v2489, 5
      %v2492 = vsel %vm2464, %v2487, %v2491
      %v2494 = vshrl.u32 %v2400, 16
      %v2496 = vrot.slane %v2494, 4
      %v2497 = vshll.u32 %v2400, 16
      %v2499 = vrot.slane %v2497, 5
      %v2500 = vor.u32 %v2496, %v2499
      %v2501 = vrot.slane %v2500, 4
      %v2503 = vshll.u32 %v2404, 16
      %v2505 = vrot.slane %v2503, 5
      %v2506 = vsel %vm2464, %v2501, %v2505
      %v2508 = vshrl.u32 %v2401, 16
      %v2510 = vrot.slane %v2508, 4
      %v2511 = vshll.u32 %v2401, 16
      %v2513 = vrot.slane %v2511, 5
      %v2514 = vor.u32 %v2510, %v2513
      %v2515 = vrot.slane %v2514, 4
      %v2517 = vshll.u32 %v2405, 16
      %v2519 = vrot.slane %v2517, 5
      %v2520 = vsel %vm2464, %v2515, %v2519
      %v2522 = vshrl.u32 %v2406, 16
      %v2524 = vrot.slane %v2522, 4
      %v2525 = vshll.u32 %v2406, 16
      %v2527 = vrot.slane %v2525, 5
      %v2528 = vor.u32 %v2524, %v2527
      %v2529 = vrot.slane %v2528, 4
      %v2531 = vshll.u32 %v2410, 16
      %v2533 = vrot.slane %v2531, 5
      %v2534 = vsel %vm2464, %v2529, %v2533
      %v2536 = vshrl.u32 %v2407, 16
      %v2538 = vrot.slane %v2536, 4
      %v2539 = vshll.u32 %v2407, 16
      %v2541 = vrot.slane %v2539, 5
      %v2542 = vor.u32 %v2538, %v2541
      %v2543 = vrot.slane %v2542, 4
      %v2545 = vshll.u32 %v2411, 16
      %v2547 = vrot.slane %v2545, 5
      %v2548 = vsel %vm2464, %v2543, %v2547
      %v2550 = vshrl.u32 %v2408, 16
      %v2552 = vrot.slane %v2550, 4
      %v2553 = vshll.u32 %v2408, 16
      %v2555 = vrot.slane %v2553, 5
      %v2556 = vor.u32 %v2552, %v2555
      %v2557 = vrot.slane %v2556, 4
      %v2559 = vshll.u32 %v2412, 16
      %v2561 = vrot.slane %v2559, 5
      %v2562 = vsel %vm2464, %v2557, %v2561
      %v2564 = vshrl.u32 %v2409, 16
      %v2566 = vrot.slane %v2564, 4
      %v2567 = vshll.u32 %v2409, 16
      %v2569 = vrot.slane %v2567, 5
      %v2570 = vor.u32 %v2566, %v2569
      %v2571 = vrot.slane %v2570, 4
      %v2573 = vshll.u32 %v2413, 16
      %v2575 = vrot.slane %v2573, 5
      %v2576 = vsel %vm2464, %v2571, %v2575
      %v2578 = vshrl.u32 %v2414, 16
      %v2580 = vrot.slane %v2578, 4
      %v2581 = vshll.u32 %v2414, 16
      %v2583 = vrot.slane %v2581, 5
      %v2584 = vor.u32 %v2580, %v2583
      %v2585 = vrot.slane %v2584, 4
      %v2587 = vshll.u32 %v2418, 16
      %v2589 = vrot.slane %v2587, 5
      %v2590 = vsel %vm2464, %v2585, %v2589
      %v2592 = vshrl.u32 %v2415, 16
      %v2594 = vrot.slane %v2592, 4
      %v2595 = vshll.u32 %v2415, 16
      %v2597 = vrot.slane %v2595, 5
      %v2598 = vor.u32 %v2594, %v2597
      %v2599 = vrot.slane %v2598, 4
      %v2601 = vshll.u32 %v2419, 16
      %v2603 = vrot.slane %v2601, 5
      %v2604 = vsel %vm2464, %v2599, %v2603
      %v2606 = vshrl.u32 %v2416, 16
      %v2608 = vrot.slane %v2606, 4
      %v2609 = vshll.u32 %v2416, 16
      %v2611 = vrot.slane %v2609, 5
      %v2612 = vor.u32 %v2608, %v2611
      %v2613 = vrot.slane %v2612, 4
      %v2615 = vshll.u32 %v2420, 16
      %v2617 = vrot.slane %v2615, 5
      %v2618 = vsel %vm2464, %v2613, %v2617
      %v2620 = vshrl.u32 %v2417, 16
      %v2622 = vrot.slane %v2620, 4
      %v2623 = vshll.u32 %v2417, 16
      %v2625 = vrot.slane %v2623, 5
      %v2626 = vor.u32 %v2622, %v2625
      %v2627 = vrot.slane %v2626, 4
      %v2629 = vshll.u32 %v2421, 16
      %v2631 = vrot.slane %v2629, 5
      %v2632 = vsel %vm2464, %v2627, %v2631
      %v2634 = vshrl.u32 %v2422, 16
      %v2636 = vrot.slane %v2634, 4
      %v2637 = vshll.u32 %v2422, 16
      %v2639 = vrot.slane %v2637, 5
      %v2640 = vor.u32 %v2636, %v2639
      %v2641 = vrot.slane %v2640, 4
      %v2643 = vshll.u32 %v2426, 16
      %v2645 = vrot.slane %v2643, 5
      %v2646 = vsel %vm2464, %v2641, %v2645
      %v2648 = vshrl.u32 %v2423, 16
      %v2650 = vrot.slane %v2648, 4
      %v2651 = vshll.u32 %v2423, 16
      %v2653 = vrot.slane %v2651, 5
      %v2654 = vor.u32 %v2650, %v2653
      %v2655 = vrot.slane %v2654, 4
      %v2657 = vshll.u32 %v2427, 16
      %v2659 = vrot.slane %v2657, 5
      %v2660 = vsel %vm2464, %v2655, %v2659
      %v2662 = vshrl.u32 %v2424, 16
      %v2664 = vrot.slane %v2662, 4
      %v2665 = vshll.u32 %v2424, 16
      %v2667 = vrot.slane %v2665, 5
      %v2668 = vor.u32 %v2664, %v2667
      %v2669 = vrot.slane %v2668, 4
      %v2671 = vshll.u32 %v2428, 16
      %v2673 = vrot.slane %v2671, 5
      %v2674 = vsel %vm2464, %v2669, %v2673
      %v2676 = vshrl.u32 %v2425, 16
      %v2678 = vrot.slane %v2676, 4
      %v2679 = vshll.u32 %v2425, 16
      %v2681 = vrot.slane %v2679, 5
      %v2682 = vor.u32 %v2678, %v2681
      %v2683 = vrot.slane %v2682, 4
      %v2685 = vshll.u32 %v2429, 16
      %v2687 = vrot.slane %v2685, 5
      %v2688 = vsel %vm2464, %v2683, %v2687
      %v2690 = vshrl.u32 %v2430, 16
      %v2692 = vrot.slane %v2690, 4
      %v2693 = vshll.u32 %v2430, 16
      %v2695 = vrot.slane %v2693, 5
      %v2696 = vor.u32 %v2692, %v2695
      %v2697 = vrot.slane %v2696, 4
      %v2699 = vshll.u32 %v2434, 16
      %v2701 = vrot.slane %v2699, 5
      %v2702 = vsel %vm2464, %v2697, %v2701
      %v2704 = vshrl.u32 %v2431, 16
      %v2706 = vrot.slane %v2704, 4
      %v2707 = vshll.u32 %v2431, 16
      %v2709 = vrot.slane %v2707, 5
      %v2710 = vor.u32 %v2706, %v2709
      %v2711 = vrot.slane %v2710, 4
      %v2713 = vshll.u32 %v2435, 16
      %v2715 = vrot.slane %v2713, 5
      %v2716 = vsel %vm2464, %v2711, %v2715
      %v2718 = vshrl.u32 %v2432, 16
      %v2720 = vrot.slane %v2718, 4
      %v2721 = vshll.u32 %v2432, 16
      %v2723 = vrot.slane %v2721, 5
      %v2724 = vor.u32 %v2720, %v2723
      %v2725 = vrot.slane %v2724, 4
      %v2727 = vshll.u32 %v2436, 16
      %v2729 = vrot.slane %v2727, 5
      %v2730 = vsel %vm2464, %v2725, %v2729
      %v2732 = vshrl.u32 %v2433, 16
      %v2734 = vrot.slane %v2732, 4
      %v2735 = vshll.u32 %v2433, 16
      %v2737 = vrot.slane %v2735, 5
      %v2738 = vor.u32 %v2734, %v2737
      %v2739 = vrot.slane %v2738, 4
      %v2741 = vshll.u32 %v2437, 16
      %v2743 = vrot.slane %v2741, 5
      %v2744 = vsel %vm2464, %v2739, %v2743
      %v2746 = vshrl.u32 %v2438, 16
      %v2748 = vrot.slane %v2746, 4
      %v2749 = vshll.u32 %v2438, 16
      %v2751 = vrot.slane %v2749, 5
      %v2752 = vor.u32 %v2748, %v2751
      %v2753 = vrot.slane %v2752, 4
      %v2755 = vshll.u32 %v2442, 16
      %v2757 = vrot.slane %v2755, 5
      %v2758 = vsel %vm2464, %v2753, %v2757
      %v2760 = vshrl.u32 %v2439, 16
      %v2762 = vrot.slane %v2760, 4
      %v2763 = vshll.u32 %v2439, 16
      %v2765 = vrot.slane %v2763, 5
      %v2766 = vor.u32 %v2762, %v2765
      %v2767 = vrot.slane %v2766, 4
      %v2769 = vshll.u32 %v2443, 16
      %v2771 = vrot.slane %v2769, 5
      %v2772 = vsel %vm2464, %v2767, %v2771
      %v2774 = vshrl.u32 %v2440, 16
      %v2776 = vrot.slane %v2774, 4
      %v2777 = vshll.u32 %v2440, 16
      %v2779 = vrot.slane %v2777, 5
      %v2780 = vor.u32 %v2776, %v2779
      %v2781 = vrot.slane %v2780, 4
      %v2783 = vshll.u32 %v2444, 16
      %v2785 = vrot.slane %v2783, 5
      %v2786 = vsel %vm2464, %v2781, %v2785
      %v2788 = vshrl.u32 %v2441, 16
      %v2790 = vrot.slane %v2788, 4
      %v2791 = vshll.u32 %v2441, 16
      %v2793 = vrot.slane %v2791, 5
      %v2794 = vor.u32 %v2790, %v2793
      %v2795 = vrot.slane %v2794, 4
      %v2797 = vshll.u32 %v2445, 16
      %v2799 = vrot.slane %v2797, 5
      %v2800 = vsel %vm2464, %v2795, %v2799
      %v2802 = vshrl.u32 %v2446, 16
      %v2804 = vrot.slane %v2802, 4
      %v2805 = vshll.u32 %v2446, 16
      %v2807 = vrot.slane %v2805, 5
      %v2808 = vor.u32 %v2804, %v2807
      %v2809 = vrot.slane %v2808, 4
      %v2811 = vshll.u32 %v2450, 16
      %v2813 = vrot.slane %v2811, 5
      %v2814 = vsel %vm2464, %v2809, %v2813
      %v2816 = vshrl.u32 %v2447, 16
      %v2818 = vrot.slane %v2816, 4
      %v2819 = vshll.u32 %v2447, 16
      %v2821 = vrot.slane %v2819, 5
      %v2822 = vor.u32 %v2818, %v2821
      %v2823 = vrot.slane %v2822, 4
      %v2825 = vshll.u32 %v2451, 16
      %v2827 = vrot.slane %v2825, 5
      %v2828 = vsel %vm2464, %v2823, %v2827
      %v2830 = vshrl.u32 %v2448, 16
      %v2832 = vrot.slane %v2830, 4
      %v2833 = vshll.u32 %v2448, 16
      %v2835 = vrot.slane %v2833, 5
      %v2836 = vor.u32 %v2832, %v2835
      %v2837 = vrot.slane %v2836, 4
      %v2839 = vshll.u32 %v2452, 16
      %v2841 = vrot.slane %v2839, 5
      %v2842 = vsel %vm2464, %v2837, %v2841
      %v2844 = vshrl.u32 %v2449, 16
      %v2846 = vrot.slane %v2844, 4
      %v2847 = vshll.u32 %v2449, 16
      %v2849 = vrot.slane %v2847, 5
      %v2850 = vor.u32 %v2846, %v2849
      %v2851 = vrot.slane %v2850, 4
      %v2853 = vshll.u32 %v2453, 16
      %v2855 = vrot.slane %v2853, 5
      %v2856 = vsel %vm2464, %v2851, %v2855
      %v2858 = vshrl.u32 %v2454, 16
      %v2860 = vrot.slane %v2858, 4
      %v2861 = vshll.u32 %v2454, 16
      %v2863 = vrot.slane %v2861, 5
      %v2864 = vor.u32 %v2860, %v2863
      %v2865 = vrot.slane %v2864, 4
      %v2867 = vshll.u32 %v2458, 16
      %v2869 = vrot.slane %v2867, 5
      %v2870 = vsel %vm2464, %v2865, %v2869
      %v2872 = vshrl.u32 %v2455, 16
      %v2874 = vrot.slane %v2872, 4
      %v2875 = vshll.u32 %v2455, 16
      %v2877 = vrot.slane %v2875, 5
      %v2878 = vor.u32 %v2874, %v2877
      %v2879 = vrot.slane %v2878, 4
      %v2881 = vshll.u32 %v2459, 16
      %v2883 = vrot.slane %v2881, 5
      %v2884 = vsel %vm2464, %v2879, %v2883
      %v2886 = vshrl.u32 %v2456, 16
      %v2888 = vrot.slane %v2886, 4
      %v2889 = vshll.u32 %v2456, 16
      %v2891 = vrot.slane %v2889, 5
      %v2892 = vor.u32 %v2888, %v2891
      %v2893 = vrot.slane %v2892, 4
      %v2895 = vshll.u32 %v2460, 16
      %v2897 = vrot.slane %v2895, 5
      %v2898 = vsel %vm2464, %v2893, %v2897
      %v2900 = vshrl.u32 %v2457, 16
      %v2902 = vrot.slane %v2900, 4
      %v2903 = vshll.u32 %v2457, 16
      %v2905 = vrot.slane %v2903, 5
      %v2906 = vor.u32 %v2902, %v2905
      %v2907 = vrot.slane %v2906, 4
      %v2909 = vshll.u32 %v2461, 16
      %v2911 = vrot.slane %v2909, 5
      %v2912 = vsel %vm2464, %v2907, %v2911
      %s2913 = scalar_lea.vmem %s2, 512
      %v2914 = vld [vmem:[%s2913] sm:$0xf]
      %v2915 = vld [vmem:[%s2913 + $0x4] sm:$0xf]
      %v2916 = vld [vmem:[%s2913 + $0x8] sm:$0xf]
      %v2917 = vld [vmem:[%s2913 + $0xc] sm:$0xf]
      %v2918 = vld [vmem:[%s2913 + $0x10] sm:$0xf]
      %v2919 = vld [vmem:[%s2913 + $0x14] sm:$0xf]
      %v2920 = vld [vmem:[%s2913 + $0x18] sm:$0xf]
      %v2921 = vld [vmem:[%s2913 + $0x1c] sm:$0xf]
      %v2922 = vld [vmem:[%s2913 + $0x20] sm:$0xf]
      %v2923 = vld [vmem:[%s2913 + $0x24] sm:$0xf]
      %v2924 = vld [vmem:[%s2913 + $0x28] sm:$0xf]
      %v2925 = vld [vmem:[%s2913 + $0x2c] sm:$0xf]
      %v2926 = vld [vmem:[%s2913 + $0x30] sm:$0xf]
      %v2927 = vld [vmem:[%s2913 + $0x34] sm:$0xf]
      %v2928 = vld [vmem:[%s2913 + $0x38] sm:$0xf]
      %v2929 = vld [vmem:[%s2913 + $0x3c] sm:$0xf]
      %v2930 = vld [vmem:[%s2913 + $0x40] sm:$0xf]
      %v2931 = vld [vmem:[%s2913 + $0x44] sm:$0xf]
      %v2932 = vld [vmem:[%s2913 + $0x48] sm:$0xf]
      %v2933 = vld [vmem:[%s2913 + $0x4c] sm:$0xf]
      %v2934 = vld [vmem:[%s2913 + $0x50] sm:$0xf]
      %v2935 = vld [vmem:[%s2913 + $0x54] sm:$0xf]
      %v2936 = vld [vmem:[%s2913 + $0x58] sm:$0xf]
      %v2937 = vld [vmem:[%s2913 + $0x5c] sm:$0xf]
      %v2938 = vld [vmem:[%s2913 + $0x60] sm:$0xf]
      %v2939 = vld [vmem:[%s2913 + $0x64] sm:$0xf]
      %v2940 = vld [vmem:[%s2913 + $0x68] sm:$0xf]
      %v2941 = vld [vmem:[%s2913 + $0x6c] sm:$0xf]
      %v2942 = vld [vmem:[%s2913 + $0x70] sm:$0xf]
      %v2943 = vld [vmem:[%s2913 + $0x74] sm:$0xf]
      %v2944 = vld [vmem:[%s2913 + $0x78] sm:$0xf]
      %v2945 = vld [vmem:[%s2913 + $0x7c] sm:$0xf]
      %v2946 = vld [vmem:[%s2913 + $0x80] sm:$0xf]
      %v2947 = vld [vmem:[%s2913 + $0x84] sm:$0xf]
      %v2948 = vld [vmem:[%s2913 + $0x88] sm:$0xf]
      %v2949 = vld [vmem:[%s2913 + $0x8c] sm:$0xf]
      %v2950 = vld [vmem:[%s2913 + $0x90] sm:$0xf]
      %v2951 = vld [vmem:[%s2913 + $0x94] sm:$0xf]
      %v2952 = vld [vmem:[%s2913 + $0x98] sm:$0xf]
      %v2953 = vld [vmem:[%s2913 + $0x9c] sm:$0xf]
      %v2954 = vld [vmem:[%s2913 + $0xa0] sm:$0xf]
      %v2955 = vld [vmem:[%s2913 + $0xa4] sm:$0xf]
      %v2956 = vld [vmem:[%s2913 + $0xa8] sm:$0xf]
      %v2957 = vld [vmem:[%s2913 + $0xac] sm:$0xf]
      %v2958 = vld [vmem:[%s2913 + $0xb0] sm:$0xf]
      %v2959 = vld [vmem:[%s2913 + $0xb4] sm:$0xf]
      %v2960 = vld [vmem:[%s2913 + $0xb8] sm:$0xf]
      %v2961 = vld [vmem:[%s2913 + $0xbc] sm:$0xf]
      %v2962 = vld [vmem:[%s2913 + $0xc0] sm:$0xf]
      %v2963 = vld [vmem:[%s2913 + $0xc4] sm:$0xf]
      %v2964 = vld [vmem:[%s2913 + $0xc8] sm:$0xf]
      %v2965 = vld [vmem:[%s2913 + $0xcc] sm:$0xf]
      %v2966 = vld [vmem:[%s2913 + $0xd0] sm:$0xf]
      %v2967 = vld [vmem:[%s2913 + $0xd4] sm:$0xf]
      %v2968 = vld [vmem:[%s2913 + $0xd8] sm:$0xf]
      %v2969 = vld [vmem:[%s2913 + $0xdc] sm:$0xf]
      %v2970 = vld [vmem:[%s2913 + $0xe0] sm:$0xf]
      %v2971 = vld [vmem:[%s2913 + $0xe4] sm:$0xf]
      %v2972 = vld [vmem:[%s2913 + $0xe8] sm:$0xf]
      %v2973 = vld [vmem:[%s2913 + $0xec] sm:$0xf]
      %v2974 = vld [vmem:[%s2913 + $0xf0] sm:$0xf]
      %v2975 = vld [vmem:[%s2913 + $0xf4] sm:$0xf]
      %v2976 = vld [vmem:[%s2913 + $0xf8] sm:$0xf]
      %v2977 = vld [vmem:[%s2913 + $0xfc] sm:$0xf]
      %v2978 = vld [vmem:[%s2913 + $0x100] sm:$0xf]
      %v2979 = vld [vmem:[%s2913 + $0x104] sm:$0xf]
      %v2980 = vld [vmem:[%s2913 + $0x108] sm:$0xf]
      %v2981 = vld [vmem:[%s2913 + $0x10c] sm:$0xf]
      %v2982 = vld [vmem:[%s2913 + $0x110] sm:$0xf]
      %v2983 = vld [vmem:[%s2913 + $0x114] sm:$0xf]
      %v2984 = vld [vmem:[%s2913 + $0x118] sm:$0xf]
      %v2985 = vld [vmem:[%s2913 + $0x11c] sm:$0xf]
      %v2986 = vld [vmem:[%s2913 + $0x120] sm:$0xf]
      %v2987 = vld [vmem:[%s2913 + $0x124] sm:$0xf]
      %v2988 = vld [vmem:[%s2913 + $0x128] sm:$0xf]
      %v2989 = vld [vmem:[%s2913 + $0x12c] sm:$0xf]
      %v2990 = vld [vmem:[%s2913 + $0x130] sm:$0xf]
      %v2991 = vld [vmem:[%s2913 + $0x134] sm:$0xf]
      %v2992 = vld [vmem:[%s2913 + $0x138] sm:$0xf]
      %v2993 = vld [vmem:[%s2913 + $0x13c] sm:$0xf]
      %v2994 = vld [vmem:[%s2913 + $0x140] sm:$0xf]
      %v2995 = vld [vmem:[%s2913 + $0x144] sm:$0xf]
      %v2996 = vld [vmem:[%s2913 + $0x148] sm:$0xf]
      %v2997 = vld [vmem:[%s2913 + $0x14c] sm:$0xf]
      %v2998 = vld [vmem:[%s2913 + $0x150] sm:$0xf]
      %v2999 = vld [vmem:[%s2913 + $0x154] sm:$0xf]
      %v3000 = vld [vmem:[%s2913 + $0x158] sm:$0xf]
      %v3001 = vld [vmem:[%s2913 + $0x15c] sm:$0xf]
      %v3002 = vld [vmem:[%s2913 + $0x160] sm:$0xf]
      %v3003 = vld [vmem:[%s2913 + $0x164] sm:$0xf]
      %v3004 = vld [vmem:[%s2913 + $0x168] sm:$0xf]
      %v3005 = vld [vmem:[%s2913 + $0x16c] sm:$0xf]
      %v3006 = vld [vmem:[%s2913 + $0x170] sm:$0xf]
      %v3007 = vld [vmem:[%s2913 + $0x174] sm:$0xf]
      %v3008 = vld [vmem:[%s2913 + $0x178] sm:$0xf]
      %v3009 = vld [vmem:[%s2913 + $0x17c] sm:$0xf]
      %v3010 = vld [vmem:[%s2913 + $0x180] sm:$0xf]
      %v3011 = vld [vmem:[%s2913 + $0x184] sm:$0xf]
      %v3012 = vld [vmem:[%s2913 + $0x188] sm:$0xf]
      %v3013 = vld [vmem:[%s2913 + $0x18c] sm:$0xf]
      %v3014 = vld [vmem:[%s2913 + $0x190] sm:$0xf]
      %v3015 = vld [vmem:[%s2913 + $0x194] sm:$0xf]
      %v3016 = vld [vmem:[%s2913 + $0x198] sm:$0xf]
      %v3017 = vld [vmem:[%s2913 + $0x19c] sm:$0xf]
      %v3018 = vld [vmem:[%s2913 + $0x1a0] sm:$0xf]
      %v3019 = vld [vmem:[%s2913 + $0x1a4] sm:$0xf]
      %v3020 = vld [vmem:[%s2913 + $0x1a8] sm:$0xf]
      %v3021 = vld [vmem:[%s2913 + $0x1ac] sm:$0xf]
      %v3022 = vld [vmem:[%s2913 + $0x1b0] sm:$0xf]
      %v3023 = vld [vmem:[%s2913 + $0x1b4] sm:$0xf]
      %v3024 = vld [vmem:[%s2913 + $0x1b8] sm:$0xf]
      %v3025 = vld [vmem:[%s2913 + $0x1bc] sm:$0xf]
      %v3026 = vld [vmem:[%s2913 + $0x1c0] sm:$0xf]
      %v3027 = vld [vmem:[%s2913 + $0x1c4] sm:$0xf]
      %v3028 = vld [vmem:[%s2913 + $0x1c8] sm:$0xf]
      %v3029 = vld [vmem:[%s2913 + $0x1cc] sm:$0xf]
      %v3030 = vld [vmem:[%s2913 + $0x1d0] sm:$0xf]
      %v3031 = vld [vmem:[%s2913 + $0x1d4] sm:$0xf]
      %v3032 = vld [vmem:[%s2913 + $0x1d8] sm:$0xf]
      %v3033 = vld [vmem:[%s2913 + $0x1dc] sm:$0xf]
      %v3034 = vld [vmem:[%s2913 + $0x1e0] sm:$0xf]
      %v3035 = vld [vmem:[%s2913 + $0x1e4] sm:$0xf]
      %v3036 = vld [vmem:[%s2913 + $0x1e8] sm:$0xf]
      %v3037 = vld [vmem:[%s2913 + $0x1ec] sm:$0xf]
      %v3038 = vld [vmem:[%s2913 + $0x1f0] sm:$0xf]
      %v3039 = vld [vmem:[%s2913 + $0x1f4] sm:$0xf]
      %v3040 = vld [vmem:[%s2913 + $0x1f8] sm:$0xf]
      %v3041 = vld [vmem:[%s2913 + $0x1fc] sm:$0xf]
      %v3042 = vunpack.c.l.b16 %v2478
      %v3043 = vunpack.c.h.b16 %v2478
      %v3044 = vunpack.c.l.b16 %v2492
      %v3045 = vunpack.c.h.b16 %v2492
      %v3046 = vunpack.c.l.b16 %v2506
      %v3047 = vunpack.c.h.b16 %v2506
      %v3048 = vunpack.c.l.b16 %v2520
      %v3049 = vunpack.c.h.b16 %v2520
      %v3050 = vunpack.c.l.b16 %v2534
      %v3051 = vunpack.c.h.b16 %v2534
      %v3052 = vunpack.c.l.b16 %v2548
      %v3053 = vunpack.c.h.b16 %v2548
      %v3054 = vunpack.c.l.b16 %v2562
      %v3055 = vunpack.c.h.b16 %v2562
      %v3056 = vunpack.c.l.b16 %v2576
      %v3057 = vunpack.c.h.b16 %v2576
      %v3058 = vunpack.c.l.b16 %v2590
      %v3059 = vunpack.c.h.b16 %v2590
      %v3060 = vunpack.c.l.b16 %v2604
      %v3061 = vunpack.c.h.b16 %v2604
      %v3062 = vunpack.c.l.b16 %v2618
      %v3063 = vunpack.c.h.b16 %v2618
      %v3064 = vunpack.c.l.b16 %v2632
      %v3065 = vunpack.c.h.b16 %v2632
      %v3066 = vunpack.c.l.b16 %v2646
      %v3067 = vunpack.c.h.b16 %v2646
      %v3068 = vunpack.c.l.b16 %v2660
      %v3069 = vunpack.c.h.b16 %v2660
      %v3070 = vunpack.c.l.b16 %v2674
      %v3071 = vunpack.c.h.b16 %v2674
      %v3072 = vunpack.c.l.b16 %v2688
      %v3073 = vunpack.c.h.b16 %v2688
      %v3074 = vunpack.c.l.b16 %v2702
      %v3075 = vunpack.c.h.b16 %v2702
      %v3076 = vunpack.c.l.b16 %v2716
      %v3077 = vunpack.c.h.b16 %v2716
      %v3078 = vunpack.c.l.b16 %v2730
      %v3079 = vunpack.c.h.b16 %v2730
      %v3080 = vunpack.c.l.b16 %v2744
      %v3081 = vunpack.c.h.b16 %v2744
      %v3082 = vunpack.c.l.b16 %v2758
      %v3083 = vunpack.c.h.b16 %v2758
      %v3084 = vunpack.c.l.b16 %v2772
      %v3085 = vunpack.c.h.b16 %v2772
      %v3086 = vunpack.c.l.b16 %v2786
      %v3087 = vunpack.c.h.b16 %v2786
      %v3088 = vunpack.c.l.b16 %v2800
      %v3089 = vunpack.c.h.b16 %v2800
      %v3090 = vunpack.c.l.b16 %v2814
      %v3091 = vunpack.c.h.b16 %v2814
      %v3092 = vunpack.c.l.b16 %v2828
      %v3093 = vunpack.c.h.b16 %v2828
      %v3094 = vunpack.c.l.b16 %v2842
      %v3095 = vunpack.c.h.b16 %v2842
      %v3096 = vunpack.c.l.b16 %v2856
      %v3097 = vunpack.c.h.b16 %v2856
      %v3098 = vunpack.c.l.b16 %v2870
      %v3099 = vunpack.c.h.b16 %v2870
      %v3100 = vunpack.c.l.b16 %v2884
      %v3101 = vunpack.c.h.b16 %v2884
      %v3102 = vunpack.c.l.b16 %v2898
      %v3103 = vunpack.c.h.b16 %v2898
      %v3104 = vunpack.c.l.b16 %v2912
      %v3105 = vunpack.c.h.b16 %v2912
      %v3106 = vpack.c.b16 %v3050, %v3042
      %v3107 = vpack.c.b16 %v3051, %v3043
      %v3108 = vpack.c.b16 %v3052, %v3044
      %v3109 = vpack.c.b16 %v3053, %v3045
      %v3110 = vpack.c.b16 %v3054, %v3046
      %v3111 = vpack.c.b16 %v3055, %v3047
      %v3112 = vpack.c.b16 %v3056, %v3048
      %v3113 = vpack.c.b16 %v3057, %v3049
      %v3114 = vpack.c.b16 %v3066, %v3058
      %v3115 = vpack.c.b16 %v3067, %v3059
      %v3116 = vpack.c.b16 %v3068, %v3060
      %v3117 = vpack.c.b16 %v3069, %v3061
      %v3118 = vpack.c.b16 %v3070, %v3062
      %v3119 = vpack.c.b16 %v3071, %v3063
      %v3120 = vpack.c.b16 %v3072, %v3064
      %v3121 = vpack.c.b16 %v3073, %v3065
      %v3122 = vpack.c.b16 %v3082, %v3074
      %v3123 = vpack.c.b16 %v3083, %v3075
      %v3124 = vpack.c.b16 %v3084, %v3076
      %v3125 = vpack.c.b16 %v3085, %v3077
      %v3126 = vpack.c.b16 %v3086, %v3078
      %v3127 = vpack.c.b16 %v3087, %v3079
      %v3128 = vpack.c.b16 %v3088, %v3080
      %v3129 = vpack.c.b16 %v3089, %v3081
      %v3130 = vpack.c.b16 %v3098, %v3090
      %v3131 = vpack.c.b16 %v3099, %v3091
      %v3132 = vpack.c.b16 %v3100, %v3092
      %v3133 = vpack.c.b16 %v3101, %v3093
      %v3134 = vpack.c.b16 %v3102, %v3094
      %v3135 = vpack.c.b16 %v3103, %v3095
      %v3136 = vpack.c.b16 %v3104, %v3096
      %v3137 = vpack.c.b16 %v3105, %v3097
      %v3298 = vunpack.c.l.b16 %v2914
      %v3299 = vunpack.c.l.b16 %v2915
      %v3300 = vunpack.c.l.b16 %v2916
      %v3301 = vunpack.c.l.b16 %v2917
      %v3302 = vunpack.c.l.b16 %v2918
      %v3303 = vunpack.c.l.b16 %v2919
      %v3304 = vunpack.c.l.b16 %v2920
      %v3305 = vunpack.c.l.b16 %v2921
      %v3306 = vunpack.c.l.b16 %v2922
      %v3307 = vunpack.c.l.b16 %v2923
      %v3308 = vunpack.c.l.b16 %v2924
      %v3309 = vunpack.c.l.b16 %v2925
      %v3310 = vunpack.c.l.b16 %v2926
      %v3311 = vunpack.c.l.b16 %v2927
      %v3312 = vunpack.c.l.b16 %v2928
      %v3313 = vunpack.c.l.b16 %v2929
      %v3314 = vunpack.c.l.b16 %v2930
      %v3315 = vunpack.c.l.b16 %v2931
      %v3316 = vunpack.c.l.b16 %v2932
      %v3317 = vunpack.c.l.b16 %v2933
      %v3318 = vunpack.c.l.b16 %v2934
      %v3319 = vunpack.c.l.b16 %v2935
      %v3320 = vunpack.c.l.b16 %v2936
      %v3321 = vunpack.c.l.b16 %v2937
      %v3322 = vunpack.c.l.b16 %v2938
      %v3323 = vunpack.c.l.b16 %v2939
      %v3324 = vunpack.c.l.b16 %v2940
      %v3325 = vunpack.c.l.b16 %v2941
      %v3326 = vunpack.c.l.b16 %v2942
      %v3327 = vunpack.c.l.b16 %v2943
      %v3328 = vunpack.c.l.b16 %v2944
      %v3329 = vunpack.c.l.b16 %v2945
      %v3330 = vunpack.c.l.b16 %v2946
      %v3331 = vunpack.c.l.b16 %v2947
      %v3332 = vunpack.c.l.b16 %v2948
      %v3333 = vunpack.c.l.b16 %v2949
      %v3334 = vunpack.c.l.b16 %v2950
      %v3335 = vunpack.c.l.b16 %v2951
      %v3336 = vunpack.c.l.b16 %v2952
      %v3337 = vunpack.c.l.b16 %v2953
      %v3338 = vunpack.c.l.b16 %v2954
      %v3339 = vunpack.c.l.b16 %v2955
      %v3340 = vunpack.c.l.b16 %v2956
      %v3341 = vunpack.c.l.b16 %v2957
      %v3342 = vunpack.c.l.b16 %v2958
      %v3343 = vunpack.c.l.b16 %v2959
      %v3344 = vunpack.c.l.b16 %v2960
      %v3345 = vunpack.c.l.b16 %v2961
      %v3346 = vunpack.c.l.b16 %v2962
      %v3347 = vunpack.c.l.b16 %v2963
      %v3348 = vunpack.c.l.b16 %v2964
      %v3349 = vunpack.c.l.b16 %v2965
      %v3350 = vunpack.c.l.b16 %v2966
      %v3351 = vunpack.c.l.b16 %v2967
      %v3352 = vunpack.c.l.b16 %v2968
      %v3353 = vunpack.c.l.b16 %v2969
      %v3354 = vunpack.c.l.b16 %v2970
      %v3355 = vunpack.c.l.b16 %v2971
      %v3356 = vunpack.c.l.b16 %v2972
      %v3357 = vunpack.c.l.b16 %v2973
      %v3358 = vunpack.c.l.b16 %v2974
      %v3359 = vunpack.c.l.b16 %v2975
      %v3360 = vunpack.c.l.b16 %v2976
      %v3361 = vunpack.c.l.b16 %v2977
      %v3362 = vunpack.c.l.b16 %v2978
      %v3363 = vunpack.c.l.b16 %v2979
      %v3364 = vunpack.c.l.b16 %v2980
      %v3365 = vunpack.c.l.b16 %v2981
      %v3366 = vunpack.c.l.b16 %v2982
      %v3367 = vunpack.c.l.b16 %v2983
      %v3368 = vunpack.c.l.b16 %v2984
      %v3369 = vunpack.c.l.b16 %v2985
      %v3370 = vunpack.c.l.b16 %v2986
      %v3371 = vunpack.c.l.b16 %v2987
      %v3372 = vunpack.c.l.b16 %v2988
      %v3373 = vunpack.c.l.b16 %v2989
      %v3374 = vunpack.c.l.b16 %v2990
      %v3375 = vunpack.c.l.b16 %v2991
      %v3376 = vunpack.c.l.b16 %v2992
      %v3377 = vunpack.c.l.b16 %v2993
      %v3378 = vunpack.c.l.b16 %v2994
      %v3379 = vunpack.c.l.b16 %v2995
      %v3380 = vunpack.c.l.b16 %v2996
      %v3381 = vunpack.c.l.b16 %v2997
      %v3382 = vunpack.c.l.b16 %v2998
      %v3383 = vunpack.c.l.b16 %v2999
      %v3384 = vunpack.c.l.b16 %v3000
      %v3385 = vunpack.c.l.b16 %v3001
      %v3386 = vunpack.c.l.b16 %v3002
      %v3387 = vunpack.c.l.b16 %v3003
      %v3388 = vunpack.c.l.b16 %v3004
      %v3389 = vunpack.c.l.b16 %v3005
      %v3390 = vunpack.c.l.b16 %v3006
      %v3391 = vunpack.c.l.b16 %v3007
      %v3392 = vunpack.c.l.b16 %v3008
      %v3393 = vunpack.c.l.b16 %v3009
      %v3394 = vunpack.c.l.b16 %v3010
      %v3395 = vunpack.c.l.b16 %v3011
      %v3396 = vunpack.c.l.b16 %v3012
      %v3397 = vunpack.c.l.b16 %v3013
      %v3398 = vunpack.c.l.b16 %v3014
      %v3399 = vunpack.c.l.b16 %v3015
      %v3400 = vunpack.c.l.b16 %v3016
      %v3401 = vunpack.c.l.b16 %v3017
      %v3402 = vunpack.c.l.b16 %v3018
      %v3403 = vunpack.c.l.b16 %v3019
      %v3404 = vunpack.c.l.b16 %v3020
      %v3405 = vunpack.c.l.b16 %v3021
      %v3406 = vunpack.c.l.b16 %v3022
      %v3407 = vunpack.c.l.b16 %v3023
      %v3408 = vunpack.c.l.b16 %v3024
      %v3409 = vunpack.c.l.b16 %v3025
      %v3410 = vunpack.c.l.b16 %v3026
      %v3411 = vunpack.c.l.b16 %v3027
      %v3412 = vunpack.c.l.b16 %v3028
      %v3413 = vunpack.c.l.b16 %v3029
      %v3414 = vunpack.c.l.b16 %v3030
      %v3415 = vunpack.c.l.b16 %v3031
      %v3416 = vunpack.c.l.b16 %v3032
      %v3417 = vunpack.c.l.b16 %v3033
      %v3418 = vunpack.c.l.b16 %v3034
      %v3419 = vunpack.c.l.b16 %v3035
      %v3420 = vunpack.c.l.b16 %v3036
      %v3421 = vunpack.c.l.b16 %v3037
      %v3422 = vunpack.c.l.b16 %v3038
      %v3423 = vunpack.c.l.b16 %v3039
      %v3424 = vunpack.c.l.b16 %v3040
      %v3425 = vunpack.c.l.b16 %v3041
      %v3426 = vpack.c.b16 %v3299, %v3298
      %v3427 = vpack.c.b16 %v3301, %v3300
      %v3428 = vpack.c.b16 %v3303, %v3302
      %v3429 = vpack.c.b16 %v3305, %v3304
      %v3430 = vpack.c.b16 %v3307, %v3306
      %v3431 = vpack.c.b16 %v3309, %v3308
      %v3432 = vpack.c.b16 %v3311, %v3310
      %v3433 = vpack.c.b16 %v3313, %v3312
      %v3434 = vpack.c.b16 %v3315, %v3314
      %v3435 = vpack.c.b16 %v3317, %v3316
      %v3436 = vpack.c.b16 %v3319, %v3318
      %v3437 = vpack.c.b16 %v3321, %v3320
      %v3438 = vpack.c.b16 %v3323, %v3322
      %v3439 = vpack.c.b16 %v3325, %v3324
      %v3440 = vpack.c.b16 %v3327, %v3326
      %v3441 = vpack.c.b16 %v3329, %v3328
      %v3442 = vpack.c.b16 %v3331, %v3330
      %v3443 = vpack.c.b16 %v3333, %v3332
      %v3444 = vpack.c.b16 %v3335, %v3334
      %v3445 = vpack.c.b16 %v3337, %v3336
      %v3446 = vpack.c.b16 %v3339, %v3338
      %v3447 = vpack.c.b16 %v3341, %v3340
      %v3448 = vpack.c.b16 %v3343, %v3342
      %v3449 = vpack.c.b16 %v3345, %v3344
      %v3450 = vpack.c.b16 %v3347, %v3346
      %v3451 = vpack.c.b16 %v3349, %v3348
      %v3452 = vpack.c.b16 %v3351, %v3350
      %v3453 = vpack.c.b16 %v3353, %v3352
      %v3454 = vpack.c.b16 %v3355, %v3354
      %v3455 = vpack.c.b16 %v3357, %v3356
      %v3456 = vpack.c.b16 %v3359, %v3358
      %v3457 = vpack.c.b16 %v3361, %v3360
      %v3458 = vpack.c.b16 %v3363, %v3362
      %v3459 = vpack.c.b16 %v3365, %v3364
      %v3460 = vpack.c.b16 %v3367, %v3366
      %v3461 = vpack.c.b16 %v3369, %v3368
      %v3462 = vpack.c.b16 %v3371, %v3370
      %v3463 = vpack.c.b16 %v3373, %v3372
      %v3464 = vpack.c.b16 %v3375, %v3374
      %v3465 = vpack.c.b16 %v3377, %v3376
      %v3466 = vpack.c.b16 %v3379, %v3378
      %v3467 = vpack.c.b16 %v3381, %v3380
      %v3468 = vpack.c.b16 %v3383, %v3382
      %v3469 = vpack.c.b16 %v3385, %v3384
      %v3470 = vpack.c.b16 %v3387, %v3386
      %v3471 = vpack.c.b16 %v3389, %v3388
      %v3472 = vpack.c.b16 %v3391, %v3390
      %v3473 = vpack.c.b16 %v3393, %v3392
      %v3474 = vpack.c.b16 %v3395, %v3394
      %v3475 = vpack.c.b16 %v3397, %v3396
      %v3476 = vpack.c.b16 %v3399, %v3398
      %v3477 = vpack.c.b16 %v3401, %v3400
      %v3478 = vpack.c.b16 %v3403, %v3402
      %v3479 = vpack.c.b16 %v3405, %v3404
      %v3480 = vpack.c.b16 %v3407, %v3406
      %v3481 = vpack.c.b16 %v3409, %v3408
      %v3482 = vpack.c.b16 %v3411, %v3410
      %v3483 = vpack.c.b16 %v3413, %v3412
      %v3484 = vpack.c.b16 %v3415, %v3414
      %v3485 = vpack.c.b16 %v3417, %v3416
      %v3486 = vpack.c.b16 %v3419, %v3418
      %v3487 = vpack.c.b16 %v3421, %v3420
      %v3488 = vpack.c.b16 %v3423, %v3422
      %v3489 = vpack.c.b16 %v3425, %v3424
      %3554 = vmatpush.bf16.msra.mxu0 %v3433
      %3555 = vmatpush.bf16.msra.mxu0 %v3432
      %3556 = vmatpush.bf16.msra.mxu0 %v3431
      %3557 = vmatpush.bf16.msra.mxu0 %v3430
      %3558 = vmatpush.bf16.msra.mxu0 %v3429
      %3559 = vmatpush.bf16.msra.mxu0 %v3428
      %3560 = vmatpush.bf16.msra.mxu0 %v3427
      %3561 = vmatpush.bf16.msra.mxu0 %v3426
      %3562 = vmatmul.bf16.gmra.mxu0 %v3106
      %v3563 = vpop.f32.mrf.mxu0
      %v3564 = vadd.f32 %v1300, %v3563
      %v3565 = vpop.f32.mrf.mxu0
      %v3566 = vadd.f32 %v1300, %v3565
      %3567 = vmatmul.bf16.gmra.mxu0 %v3114
      %v3568 = vpop.f32.mrf.mxu0
      %v3569 = vadd.f32 %v1300, %v3568
      %v3570 = vpop.f32.mrf.mxu0
      %v3571 = vadd.f32 %v1300, %v3570
      %3572 = vmatmul.bf16.gmra.mxu0 %v3122
      %v3573 = vpop.f32.mrf.mxu0
      %v3574 = vadd.f32 %v1300, %v3573
      %v3575 = vpop.f32.mrf.mxu0
      %v3576 = vadd.f32 %v1300, %v3575
      %3577 = vmatmul.bf16.gmra.mxu0 %v3130
      %v3578 = vpop.f32.mrf.mxu0
      %v3579 = vadd.f32 %v1300, %v3578
      %v3580 = vpop.f32.mrf.mxu0
      %v3581 = vadd.f32 %v1300, %v3580
      %3582 = vdwg.mxu0
      %3583 = vmatpush.bf16.msra.mxu0 %v3441
      %3584 = vmatpush.bf16.msra.mxu0 %v3440
      %3585 = vmatpush.bf16.msra.mxu0 %v3439
      %3586 = vmatpush.bf16.msra.mxu0 %v3438
      %3587 = vmatpush.bf16.msra.mxu0 %v3437
      %3588 = vmatpush.bf16.msra.mxu0 %v3436
      %3589 = vmatpush.bf16.msra.mxu0 %v3435
      %3590 = vmatpush.bf16.msra.mxu0 %v3434
      %3591 = vmatmul.bf16.gmra.mxu0 %v3107
      %v3592 = vpop.f32.mrf.mxu0
      %v3593 = vadd.f32 %v3564, %v3592
      %v3594 = vpop.f32.mrf.mxu0
      %v3595 = vadd.f32 %v3566, %v3594
      %3596 = vmatmul.bf16.gmra.mxu0 %v3115
      %v3597 = vpop.f32.mrf.mxu0
      %v3598 = vadd.f32 %v3569, %v3597
      %v3599 = vpop.f32.mrf.mxu0
      %v3600 = vadd.f32 %v3571, %v3599
      %3601 = vmatmul.bf16.gmra.mxu0 %v3123
      %v3602 = vpop.f32.mrf.mxu0
      %v3603 = vadd.f32 %v3574, %v3602
      %v3604 = vpop.f32.mrf.mxu0
      %v3605 = vadd.f32 %v3576, %v3604
      %3606 = vmatmul.bf16.gmra.mxu0 %v3131
      %v3607 = vpop.f32.mrf.mxu0
      %v3608 = vadd.f32 %v3579, %v3607
      %v3609 = vpop.f32.mrf.mxu0
      %v3610 = vadd.f32 %v3581, %v3609
      %3611 = vdwg.mxu0
      %3612 = vmatpush.bf16.msra.mxu0 %v3449
      %3613 = vmatpush.bf16.msra.mxu0 %v3448
      %3614 = vmatpush.bf16.msra.mxu0 %v3447
      %3615 = vmatpush.bf16.msra.mxu0 %v3446
      %3616 = vmatpush.bf16.msra.mxu0 %v3445
      %3617 = vmatpush.bf16.msra.mxu0 %v3444
      %3618 = vmatpush.bf16.msra.mxu0 %v3443
      %3619 = vmatpush.bf16.msra.mxu0 %v3442
      %3620 = vmatmul.bf16.gmra.mxu0 %v3108
      %v3621 = vpop.f32.mrf.mxu0
      %v3622 = vadd.f32 %v3593, %v3621
      %v3623 = vpop.f32.mrf.mxu0
      %v3624 = vadd.f32 %v3595, %v3623
      %3625 = vmatmul.bf16.gmra.mxu0 %v3116
      %v3626 = vpop.f32.mrf.mxu0
      %v3627 = vadd.f32 %v3598, %v3626
      %v3628 = vpop.f32.mrf.mxu0
      %v3629 = vadd.f32 %v3600, %v3628
      %3630 = vmatmul.bf16.gmra.mxu0 %v3124
      %v3631 = vpop.f32.mrf.mxu0
      %v3632 = vadd.f32 %v3603, %v3631
      %v3633 = vpop.f32.mrf.mxu0
      %v3634 = vadd.f32 %v3605, %v3633
      %3635 = vmatmul.bf16.gmra.mxu0 %v3132
      %v3636 = vpop.f32.mrf.mxu0
      %v3637 = vadd.f32 %v3608, %v3636
      %v3638 = vpop.f32.mrf.mxu0
      %v3639 = vadd.f32 %v3610, %v3638
      %3640 = vdwg.mxu0
      %3641 = vmatpush.bf16.msra.mxu0 %v3457
      %3642 = vmatpush.bf16.msra.mxu0 %v3456
      %3643 = vmatpush.bf16.msra.mxu0 %v3455
      %3644 = vmatpush.bf16.msra.mxu0 %v3454
      %3645 = vmatpush.bf16.msra.mxu0 %v3453
      %3646 = vmatpush.bf16.msra.mxu0 %v3452
      %3647 = vmatpush.bf16.msra.mxu0 %v3451
      %3648 = vmatpush.bf16.msra.mxu0 %v3450
      %3649 = vmatmul.bf16.gmra.mxu0 %v3109
      %v3650 = vpop.f32.mrf.mxu0
      %v3651 = vadd.f32 %v3622, %v3650
      %v3652 = vpop.f32.mrf.mxu0
      %v3653 = vadd.f32 %v3624, %v3652
      %3654 = vmatmul.bf16.gmra.mxu0 %v3117
      %v3655 = vpop.f32.mrf.mxu0
      %v3656 = vadd.f32 %v3627, %v3655
      %v3657 = vpop.f32.mrf.mxu0
      %v3658 = vadd.f32 %v3629, %v3657
      %3659 = vmatmul.bf16.gmra.mxu0 %v3125
      %v3660 = vpop.f32.mrf.mxu0
      %v3661 = vadd.f32 %v3632, %v3660
      %v3662 = vpop.f32.mrf.mxu0
      %v3663 = vadd.f32 %v3634, %v3662
      %3664 = vmatmul.bf16.gmra.mxu0 %v3133
      %v3665 = vpop.f32.mrf.mxu0
      %v3666 = vadd.f32 %v3637, %v3665
      %v3667 = vpop.f32.mrf.mxu0
      %v3668 = vadd.f32 %v3639, %v3667
      %3669 = vdwg.mxu0
      %3670 = vmatpush.bf16.msra.mxu0 %v3465
      %3671 = vmatpush.bf16.msra.mxu0 %v3464
      %3672 = vmatpush.bf16.msra.mxu0 %v3463
      %3673 = vmatpush.bf16.msra.mxu0 %v3462
      %3674 = vmatpush.bf16.msra.mxu0 %v3461
      %3675 = vmatpush.bf16.msra.mxu0 %v3460
      %3676 = vmatpush.bf16.msra.mxu0 %v3459
      %3677 = vmatpush.bf16.msra.mxu0 %v3458
      %3678 = vmatmul.bf16.gmra.mxu0 %v3110
      %v3679 = vpop.f32.mrf.mxu0
      %v3680 = vadd.f32 %v3651, %v3679
      %v3681 = vpop.f32.mrf.mxu0
      %v3682 = vadd.f32 %v3653, %v3681
      %3683 = vmatmul.bf16.gmra.mxu0 %v3118
      %v3684 = vpop.f32.mrf.mxu0
      %v3685 = vadd.f32 %v3656, %v3684
      %v3686 = vpop.f32.mrf.mxu0
      %v3687 = vadd.f32 %v3658, %v3686
      %3688 = vmatmul.bf16.gmra.mxu0 %v3126
      %v3689 = vpop.f32.mrf.mxu0
      %v3690 = vadd.f32 %v3661, %v3689
      %v3691 = vpop.f32.mrf.mxu0
      %v3692 = vadd.f32 %v3663, %v3691
      %3693 = vmatmul.bf16.gmra.mxu0 %v3134
      %v3694 = vpop.f32.mrf.mxu0
      %v3695 = vadd.f32 %v3666, %v3694
      %v3696 = vpop.f32.mrf.mxu0
      %v3697 = vadd.f32 %v3668, %v3696
      %3698 = vdwg.mxu0
      %3699 = vmatpush.bf16.msra.mxu0 %v3473
      %3700 = vmatpush.bf16.msra.mxu0 %v3472
      %3701 = vmatpush.bf16.msra.mxu0 %v3471
      %3702 = vmatpush.bf16.msra.mxu0 %v3470
      %3703 = vmatpush.bf16.msra.mxu0 %v3469
      %3704 = vmatpush.bf16.msra.mxu0 %v3468
      %3705 = vmatpush.bf16.msra.mxu0 %v3467
      %3706 = vmatpush.bf16.msra.mxu0 %v3466
      %3707 = vmatmul.bf16.gmra.mxu0 %v3111
      %v3708 = vpop.f32.mrf.mxu0
      %v3709 = vadd.f32 %v3680, %v3708
      %v3710 = vpop.f32.mrf.mxu0
      %v3711 = vadd.f32 %v3682, %v3710
      %3712 = vmatmul.bf16.gmra.mxu0 %v3119
      %v3713 = vpop.f32.mrf.mxu0
      %v3714 = vadd.f32 %v3685, %v3713
      %v3715 = vpop.f32.mrf.mxu0
      %v3716 = vadd.f32 %v3687, %v3715
      %3717 = vmatmul.bf16.gmra.mxu0 %v3127
      %v3718 = vpop.f32.mrf.mxu0
      %v3719 = vadd.f32 %v3690, %v3718
      %v3720 = vpop.f32.mrf.mxu0
      %v3721 = vadd.f32 %v3692, %v3720
      %3722 = vmatmul.bf16.gmra.mxu0 %v3135
      %v3723 = vpop.f32.mrf.mxu0
      %v3724 = vadd.f32 %v3695, %v3723
      %v3725 = vpop.f32.mrf.mxu0
      %v3726 = vadd.f32 %v3697, %v3725
      %3727 = vdwg.mxu0
      %3728 = vmatpush.bf16.msra.mxu0 %v3481
      %3729 = vmatpush.bf16.msra.mxu0 %v3480
      %3730 = vmatpush.bf16.msra.mxu0 %v3479
      %3731 = vmatpush.bf16.msra.mxu0 %v3478
      %3732 = vmatpush.bf16.msra.mxu0 %v3477
      %3733 = vmatpush.bf16.msra.mxu0 %v3476
      %3734 = vmatpush.bf16.msra.mxu0 %v3475
      %3735 = vmatpush.bf16.msra.mxu0 %v3474
      %3736 = vmatmul.bf16.gmra.mxu0 %v3112
      %v3737 = vpop.f32.mrf.mxu0
      %v3738 = vadd.f32 %v3709, %v3737
      %v3739 = vpop.f32.mrf.mxu0
      %v3740 = vadd.f32 %v3711, %v3739
      %3741 = vmatmul.bf16.gmra.mxu0 %v3120
      %v3742 = vpop.f32.mrf.mxu0
      %v3743 = vadd.f32 %v3714, %v3742
      %v3744 = vpop.f32.mrf.mxu0
      %v3745 = vadd.f32 %v3716, %v3744
      %3746 = vmatmul.bf16.gmra.mxu0 %v3128
      %v3747 = vpop.f32.mrf.mxu0
      %v3748 = vadd.f32 %v3719, %v3747
      %v3749 = vpop.f32.mrf.mxu0
      %v3750 = vadd.f32 %v3721, %v3749
      %3751 = vmatmul.bf16.gmra.mxu0 %v3136
      %v3752 = vpop.f32.mrf.mxu0
      %v3753 = vadd.f32 %v3724, %v3752
      %v3754 = vpop.f32.mrf.mxu0
      %v3755 = vadd.f32 %v3726, %v3754
      %3756 = vdwg.mxu0
      %3757 = vmatpush.bf16.msra.mxu0 %v3489
      %3758 = vmatpush.bf16.msra.mxu0 %v3488
      %3759 = vmatpush.bf16.msra.mxu0 %v3487
      %3760 = vmatpush.bf16.msra.mxu0 %v3486
      %3761 = vmatpush.bf16.msra.mxu0 %v3485
      %3762 = vmatpush.bf16.msra.mxu0 %v3484
      %3763 = vmatpush.bf16.msra.mxu0 %v3483
      %3764 = vmatpush.bf16.msra.mxu0 %v3482
      %3765 = vmatmul.bf16.gmra.mxu0 %v3113
      %v3766 = vpop.f32.mrf.mxu0
      %v3767 = vadd.f32 %v3738, %v3766
      %v3768 = vpop.f32.mrf.mxu0
      %v3769 = vadd.f32 %v3740, %v3768
      %3770 = vmatmul.bf16.gmra.mxu0 %v3121
      %v3771 = vpop.f32.mrf.mxu0
      %v3772 = vadd.f32 %v3743, %v3771
      %v3773 = vpop.f32.mrf.mxu0
      %v3774 = vadd.f32 %v3745, %v3773
      %3775 = vmatmul.bf16.gmra.mxu0 %v3129
      %v3776 = vpop.f32.mrf.mxu0
      %v3777 = vadd.f32 %v3748, %v3776
      %v3778 = vpop.f32.mrf.mxu0
      %v3779 = vadd.f32 %v3750, %v3778
      %3780 = vmatmul.bf16.gmra.mxu0 %v3137
      %v3781 = vpop.f32.mrf.mxu0
      %v3782 = vadd.f32 %v3753, %v3781
      %v3783 = vpop.f32.mrf.mxu0
      %v3784 = vadd.f32 %v3755, %v3783
      %3785 = vdwg.mxu0
      %3786 = vst [vmem:[%s197] sm:$0xff] %v1963
      %3787 = vst [vmem:[%s197 + $0x8] sm:$0xff] %v3767
      %3788 = vst [vmem:[%s197 + $0x20] sm:$0xff] %v1965
      %3789 = vst [vmem:[%s197 + $0x28] sm:$0xff] %v3769
      %3790 = vst [vmem:[%s197 + $0x40] sm:$0xff] %v1968
      %3791 = vst [vmem:[%s197 + $0x48] sm:$0xff] %v3772
      %3792 = vst [vmem:[%s197 + $0x60] sm:$0xff] %v1970
      %3793 = vst [vmem:[%s197 + $0x68] sm:$0xff] %v3774
      %3794 = vst [vmem:[%s197 + $0x80] sm:$0xff] %v1973
      %3795 = vst [vmem:[%s197 + $0x88] sm:$0xff] %v3777
      %3796 = vst [vmem:[%s197 + $0xa0] sm:$0xff] %v1975
      %3797 = vst [vmem:[%s197 + $0xa8] sm:$0xff] %v3779
      %3798 = vst [vmem:[%s197 + $0xc0] sm:$0xff] %v1978
      %3799 = vst [vmem:[%s197 + $0xc8] sm:$0xff] %v3782
      %3800 = vst [vmem:[%s197 + $0xe0] sm:$0xff] %v1980
      %3801 = vst [vmem:[%s197 + $0xe8] sm:$0xff] %v3784
      %v3810 = vunpack.c.l.b16 %v634
      %v3811 = vunpack.c.h.b16 %v634
      %v3812 = vunpack.c.l.b16 %v635
      %v3813 = vunpack.c.h.b16 %v635
      %v3814 = vunpack.c.l.b16 %v636
      %v3815 = vunpack.c.h.b16 %v636
      %v3816 = vunpack.c.l.b16 %v637
      %v3817 = vunpack.c.h.b16 %v637
      %v3818 = vunpack.c.l.b16 %v638
      %v3819 = vunpack.c.h.b16 %v638
      %v3820 = vunpack.c.l.b16 %v639
      %v3821 = vunpack.c.h.b16 %v639
      %v3822 = vunpack.c.l.b16 %v640
      %v3823 = vunpack.c.h.b16 %v640
      %v3824 = vunpack.c.l.b16 %v641
      %v3825 = vunpack.c.h.b16 %v641
      %v3842 = vunpack.c.l.b16 %v674
      %v3843 = vunpack.c.h.b16 %v674
      %v3844 = vunpack.c.l.b16 %v675
      %v3845 = vunpack.c.h.b16 %v675
      %v3846 = vunpack.c.l.b16 %v676
      %v3847 = vunpack.c.h.b16 %v676
      %v3848 = vunpack.c.l.b16 %v677
      %v3849 = vunpack.c.h.b16 %v677
      %v3850 = vunpack.c.l.b16 %v678
      %v3851 = vunpack.c.h.b16 %v678
      %v3852 = vunpack.c.l.b16 %v679
      %v3853 = vunpack.c.h.b16 %v679
      %v3854 = vunpack.c.l.b16 %v680
      %v3855 = vunpack.c.h.b16 %v680
      %v3856 = vunpack.c.l.b16 %v681
      %v3857 = vunpack.c.h.b16 %v681
      %v3858 = vunpack.c.l.b16 %v682
      %v3859 = vunpack.c.h.b16 %v682
      %v3860 = vunpack.c.l.b16 %v683
      %v3861 = vunpack.c.h.b16 %v683
      %v3862 = vunpack.c.l.b16 %v684
      %v3863 = vunpack.c.h.b16 %v684
      %v3864 = vunpack.c.l.b16 %v685
      %v3865 = vunpack.c.h.b16 %v685
      %v3866 = vunpack.c.l.b16 %v686
      %v3867 = vunpack.c.h.b16 %v686
      %v3868 = vunpack.c.l.b16 %v687
      %v3869 = vunpack.c.h.b16 %v687
      %v3870 = vunpack.c.l.b16 %v688
      %v3871 = vunpack.c.h.b16 %v688
      %v3872 = vunpack.c.l.b16 %v689
      %v3873 = vunpack.c.h.b16 %v689
      %v3874 = vpack.c.b16 %v3844, %v3842
      %v3875 = vpack.c.b16 %v3845, %v3843
      %v3876 = vpack.c.b16 %v3848, %v3846
      %v3877 = vpack.c.b16 %v3849, %v3847
      %v3878 = vpack.c.b16 %v3852, %v3850
      %v3879 = vpack.c.b16 %v3853, %v3851
      %v3880 = vpack.c.b16 %v3856, %v3854
      %v3881 = vpack.c.b16 %v3857, %v3855
      %v3882 = vpack.c.b16 %v3860, %v3858
      %v3883 = vpack.c.b16 %v3861, %v3859
      %v3884 = vpack.c.b16 %v3864, %v3862
      %v3885 = vpack.c.b16 %v3865, %v3863
      %v3886 = vpack.c.b16 %v3868, %v3866
      %v3887 = vpack.c.b16 %v3869, %v3867
      %v3888 = vpack.c.b16 %v3872, %v3870
      %v3889 = vpack.c.b16 %v3873, %v3871
      %v3891 = vshrl.u32 %v3874, 16
      %v3893 = vshll.u32 %v3874, 16
      %v3895 = vrot.slane %v3893, 1
      %v3896 = vor.u32 %v3891, %v3895
      %v3898 = vshrl.u32 %v3875, 16
      %v3900 = vshll.u32 %v3875, 16
      %v3902 = vrot.slane %v3900, 1
      %v3903 = vor.u32 %v3898, %v3902
      %v3905 = vshrl.u32 %v3876, 16
      %v3907 = vshll.u32 %v3876, 16
      %v3909 = vrot.slane %v3907, 1
      %v3910 = vor.u32 %v3905, %v3909
      %v3912 = vshrl.u32 %v3877, 16
      %v3914 = vshll.u32 %v3877, 16
      %v3916 = vrot.slane %v3914, 1
      %v3917 = vor.u32 %v3912, %v3916
      %v3919 = vshrl.u32 %v3878, 16
      %v3921 = vshll.u32 %v3878, 16
      %v3923 = vrot.slane %v3921, 1
      %v3924 = vor.u32 %v3919, %v3923
      %v3926 = vshrl.u32 %v3879, 16
      %v3928 = vshll.u32 %v3879, 16
      %v3930 = vrot.slane %v3928, 1
      %v3931 = vor.u32 %v3926, %v3930
      %v3933 = vshrl.u32 %v3880, 16
      %v3935 = vshll.u32 %v3880, 16
      %v3937 = vrot.slane %v3935, 1
      %v3938 = vor.u32 %v3933, %v3937
      %v3940 = vshrl.u32 %v3881, 16
      %v3942 = vshll.u32 %v3881, 16
      %v3944 = vrot.slane %v3942, 1
      %v3945 = vor.u32 %v3940, %v3944
      %v3947 = vshrl.u32 %v3882, 16
      %v3949 = vshll.u32 %v3882, 16
      %v3951 = vrot.slane %v3949, 1
      %v3952 = vor.u32 %v3947, %v3951
      %v3954 = vshrl.u32 %v3883, 16
      %v3956 = vshll.u32 %v3883, 16
      %v3958 = vrot.slane %v3956, 1
      %v3959 = vor.u32 %v3954, %v3958
      %v3961 = vshrl.u32 %v3884, 16
      %v3963 = vshll.u32 %v3884, 16
      %v3965 = vrot.slane %v3963, 1
      %v3966 = vor.u32 %v3961, %v3965
      %v3968 = vshrl.u32 %v3885, 16
      %v3970 = vshll.u32 %v3885, 16
      %v3972 = vrot.slane %v3970, 1
      %v3973 = vor.u32 %v3968, %v3972
      %v3975 = vshrl.u32 %v3886, 16
      %v3977 = vshll.u32 %v3886, 16
      %v3979 = vrot.slane %v3977, 1
      %v3980 = vor.u32 %v3975, %v3979
      %v3982 = vshrl.u32 %v3887, 16
      %v3984 = vshll.u32 %v3887, 16
      %v3986 = vrot.slane %v3984, 1
      %v3987 = vor.u32 %v3982, %v3986
      %v3989 = vshrl.u32 %v3888, 16
      %v3991 = vshll.u32 %v3888, 16
      %v3993 = vrot.slane %v3991, 1
      %v3994 = vor.u32 %v3989, %v3993
      %v3996 = vshrl.u32 %v3889, 16
      %v3998 = vshll.u32 %v3889, 16
      %v4000 = vrot.slane %v3998, 1
      %v4001 = vor.u32 %v3996, %v4000
      %v4002 = vunpack.c.l.b16 %v3896
      %v4003 = vunpack.c.l.b16 %v3903
      %v4004 = vunpack.c.l.b16 %v3910
      %v4005 = vunpack.c.l.b16 %v3917
      %v4006 = vunpack.c.l.b16 %v3924
      %v4007 = vunpack.c.l.b16 %v3931
      %v4008 = vunpack.c.l.b16 %v3938
      %v4009 = vunpack.c.l.b16 %v3945
      %v4010 = vunpack.c.l.b16 %v3952
      %v4011 = vunpack.c.l.b16 %v3959
      %v4012 = vunpack.c.l.b16 %v3966
      %v4013 = vunpack.c.l.b16 %v3973
      %v4014 = vunpack.c.l.b16 %v3980
      %v4015 = vunpack.c.l.b16 %v3987
      %v4016 = vunpack.c.l.b16 %v3994
      %v4017 = vunpack.c.l.b16 %v4001
      %s4018 = scalar_lea.vmem %s2, 1024
      %v4019 = vld [vmem:[%s4018] sm:$0xf]
      %v4020 = vld [vmem:[%s4018 + $0x4] sm:$0xf]
      %v4021 = vld [vmem:[%s4018 + $0x8] sm:$0xf]
      %v4022 = vld [vmem:[%s4018 + $0xc] sm:$0xf]
      %v4023 = vld [vmem:[%s4018 + $0x10] sm:$0xf]
      %v4024 = vld [vmem:[%s4018 + $0x14] sm:$0xf]
      %v4025 = vld [vmem:[%s4018 + $0x18] sm:$0xf]
      %v4026 = vld [vmem:[%s4018 + $0x1c] sm:$0xf]
      %v4027 = vld [vmem:[%s4018 + $0x20] sm:$0xf]
      %v4028 = vld [vmem:[%s4018 + $0x24] sm:$0xf]
      %v4029 = vld [vmem:[%s4018 + $0x28] sm:$0xf]
      %v4030 = vld [vmem:[%s4018 + $0x2c] sm:$0xf]
      %v4031 = vld [vmem:[%s4018 + $0x30] sm:$0xf]
      %v4032 = vld [vmem:[%s4018 + $0x34] sm:$0xf]
      %v4033 = vld [vmem:[%s4018 + $0x38] sm:$0xf]
      %v4034 = vld [vmem:[%s4018 + $0x3c] sm:$0xf]
      %v4035 = vld [vmem:[%s4018 + $0x40] sm:$0xf]
      %v4036 = vld [vmem:[%s4018 + $0x44] sm:$0xf]
      %v4037 = vld [vmem:[%s4018 + $0x48] sm:$0xf]
      %v4038 = vld [vmem:[%s4018 + $0x4c] sm:$0xf]
      %v4039 = vld [vmem:[%s4018 + $0x50] sm:$0xf]
      %v4040 = vld [vmem:[%s4018 + $0x54] sm:$0xf]
      %v4041 = vld [vmem:[%s4018 + $0x58] sm:$0xf]
      %v4042 = vld [vmem:[%s4018 + $0x5c] sm:$0xf]
      %v4043 = vld [vmem:[%s4018 + $0x60] sm:$0xf]
      %v4044 = vld [vmem:[%s4018 + $0x64] sm:$0xf]
      %v4045 = vld [vmem:[%s4018 + $0x68] sm:$0xf]
      %v4046 = vld [vmem:[%s4018 + $0x6c] sm:$0xf]
      %v4047 = vld [vmem:[%s4018 + $0x70] sm:$0xf]
      %v4048 = vld [vmem:[%s4018 + $0x74] sm:$0xf]
      %v4049 = vld [vmem:[%s4018 + $0x78] sm:$0xf]
      %v4050 = vld [vmem:[%s4018 + $0x7c] sm:$0xf]
      %v4051 = vld [vmem:[%s4018 + $0x80] sm:$0xf]
      %v4052 = vld [vmem:[%s4018 + $0x84] sm:$0xf]
      %v4053 = vld [vmem:[%s4018 + $0x88] sm:$0xf]
      %v4054 = vld [vmem:[%s4018 + $0x8c] sm:$0xf]
      %v4055 = vld [vmem:[%s4018 + $0x90] sm:$0xf]
      %v4056 = vld [vmem:[%s4018 + $0x94] sm:$0xf]
      %v4057 = vld [vmem:[%s4018 + $0x98] sm:$0xf]
      %v4058 = vld [vmem:[%s4018 + $0x9c] sm:$0xf]
      %v4059 = vld [vmem:[%s4018 + $0xa0] sm:$0xf]
      %v4060 = vld [vmem:[%s4018 + $0xa4] sm:$0xf]
      %v4061 = vld [vmem:[%s4018 + $0xa8] sm:$0xf]
      %v4062 = vld [vmem:[%s4018 + $0xac] sm:$0xf]
      %v4063 = vld [vmem:[%s4018 + $0xb0] sm:$0xf]
      %v4064 = vld [vmem:[%s4018 + $0xb4] sm:$0xf]
      %v4065 = vld [vmem:[%s4018 + $0xb8] sm:$0xf]
      %v4066 = vld [vmem:[%s4018 + $0xbc] sm:$0xf]
      %v4067 = vld [vmem:[%s4018 + $0xc0] sm:$0xf]
      %v4068 = vld [vmem:[%s4018 + $0xc4] sm:$0xf]
      %v4069 = vld [vmem:[%s4018 + $0xc8] sm:$0xf]
      %v4070 = vld [vmem:[%s4018 + $0xcc] sm:$0xf]
      %v4071 = vld [vmem:[%s4018 + $0xd0] sm:$0xf]
      %v4072 = vld [vmem:[%s4018 + $0xd4] sm:$0xf]
      %v4073 = vld [vmem:[%s4018 + $0xd8] sm:$0xf]
      %v4074 = vld [vmem:[%s4018 + $0xdc] sm:$0xf]
      %v4075 = vld [vmem:[%s4018 + $0xe0] sm:$0xf]
      %v4076 = vld [vmem:[%s4018 + $0xe4] sm:$0xf]
      %v4077 = vld [vmem:[%s4018 + $0xe8] sm:$0xf]
      %v4078 = vld [vmem:[%s4018 + $0xec] sm:$0xf]
      %v4079 = vld [vmem:[%s4018 + $0xf0] sm:$0xf]
      %v4080 = vld [vmem:[%s4018 + $0xf4] sm:$0xf]
      %v4081 = vld [vmem:[%s4018 + $0xf8] sm:$0xf]
      %v4082 = vld [vmem:[%s4018 + $0xfc] sm:$0xf]
      %v4083 = vld [vmem:[%s4018 + $0x100] sm:$0xf]
      %v4084 = vld [vmem:[%s4018 + $0x104] sm:$0xf]
      %v4085 = vld [vmem:[%s4018 + $0x108] sm:$0xf]
      %v4086 = vld [vmem:[%s4018 + $0x10c] sm:$0xf]
      %v4087 = vld [vmem:[%s4018 + $0x110] sm:$0xf]
      %v4088 = vld [vmem:[%s4018 + $0x114] sm:$0xf]
      %v4089 = vld [vmem:[%s4018 + $0x118] sm:$0xf]
      %v4090 = vld [vmem:[%s4018 + $0x11c] sm:$0xf]
      %v4091 = vld [vmem:[%s4018 + $0x120] sm:$0xf]
      %v4092 = vld [vmem:[%s4018 + $0x124] sm:$0xf]
      %v4093 = vld [vmem:[%s4018 + $0x128] sm:$0xf]
      %v4094 = vld [vmem:[%s4018 + $0x12c] sm:$0xf]
      %v4095 = vld [vmem:[%s4018 + $0x130] sm:$0xf]
      %v4096 = vld [vmem:[%s4018 + $0x134] sm:$0xf]
      %v4097 = vld [vmem:[%s4018 + $0x138] sm:$0xf]
      %v4098 = vld [vmem:[%s4018 + $0x13c] sm:$0xf]
      %v4099 = vld [vmem:[%s4018 + $0x140] sm:$0xf]
      %v4100 = vld [vmem:[%s4018 + $0x144] sm:$0xf]
      %v4101 = vld [vmem:[%s4018 + $0x148] sm:$0xf]
      %v4102 = vld [vmem:[%s4018 + $0x14c] sm:$0xf]
      %v4103 = vld [vmem:[%s4018 + $0x150] sm:$0xf]
      %v4104 = vld [vmem:[%s4018 + $0x154] sm:$0xf]
      %v4105 = vld [vmem:[%s4018 + $0x158] sm:$0xf]
      %v4106 = vld [vmem:[%s4018 + $0x15c] sm:$0xf]
      %v4107 = vld [vmem:[%s4018 + $0x160] sm:$0xf]
      %v4108 = vld [vmem:[%s4018 + $0x164] sm:$0xf]
      %v4109 = vld [vmem:[%s4018 + $0x168] sm:$0xf]
      %v4110 = vld [vmem:[%s4018 + $0x16c] sm:$0xf]
      %v4111 = vld [vmem:[%s4018 + $0x170] sm:$0xf]
      %v4112 = vld [vmem:[%s4018 + $0x174] sm:$0xf]
      %v4113 = vld [vmem:[%s4018 + $0x178] sm:$0xf]
      %v4114 = vld [vmem:[%s4018 + $0x17c] sm:$0xf]
      %v4115 = vld [vmem:[%s4018 + $0x180] sm:$0xf]
      %v4116 = vld [vmem:[%s4018 + $0x184] sm:$0xf]
      %v4117 = vld [vmem:[%s4018 + $0x188] sm:$0xf]
      %v4118 = vld [vmem:[%s4018 + $0x18c] sm:$0xf]
      %v4119 = vld [vmem:[%s4018 + $0x190] sm:$0xf]
      %v4120 = vld [vmem:[%s4018 + $0x194] sm:$0xf]
      %v4121 = vld [vmem:[%s4018 + $0x198] sm:$0xf]
      %v4122 = vld [vmem:[%s4018 + $0x19c] sm:$0xf]
      %v4123 = vld [vmem:[%s4018 + $0x1a0] sm:$0xf]
      %v4124 = vld [vmem:[%s4018 + $0x1a4] sm:$0xf]
      %v4125 = vld [vmem:[%s4018 + $0x1a8] sm:$0xf]
      %v4126 = vld [vmem:[%s4018 + $0x1ac] sm:$0xf]
      %v4127 = vld [vmem:[%s4018 + $0x1b0] sm:$0xf]
      %v4128 = vld [vmem:[%s4018 + $0x1b4] sm:$0xf]
      %v4129 = vld [vmem:[%s4018 + $0x1b8] sm:$0xf]
      %v4130 = vld [vmem:[%s4018 + $0x1bc] sm:$0xf]
      %v4131 = vld [vmem:[%s4018 + $0x1c0] sm:$0xf]
      %v4132 = vld [vmem:[%s4018 + $0x1c4] sm:$0xf]
      %v4133 = vld [vmem:[%s4018 + $0x1c8] sm:$0xf]
      %v4134 = vld [vmem:[%s4018 + $0x1cc] sm:$0xf]
      %v4135 = vld [vmem:[%s4018 + $0x1d0] sm:$0xf]
      %v4136 = vld [vmem:[%s4018 + $0x1d4] sm:$0xf]
      %v4137 = vld [vmem:[%s4018 + $0x1d8] sm:$0xf]
      %v4138 = vld [vmem:[%s4018 + $0x1dc] sm:$0xf]
      %v4139 = vld [vmem:[%s4018 + $0x1e0] sm:$0xf]
      %v4140 = vld [vmem:[%s4018 + $0x1e4] sm:$0xf]
      %v4141 = vld [vmem:[%s4018 + $0x1e8] sm:$0xf]
      %v4142 = vld [vmem:[%s4018 + $0x1ec] sm:$0xf]
      %v4143 = vld [vmem:[%s4018 + $0x1f0] sm:$0xf]
      %v4144 = vld [vmem:[%s4018 + $0x1f4] sm:$0xf]
      %v4145 = vld [vmem:[%s4018 + $0x1f8] sm:$0xf]
      %v4146 = vld [vmem:[%s4018 + $0x1fc] sm:$0xf]
      %v4147 = vld [vmem:[%s3] sm:$0x1]
      %v4149 = vperm.slane %v4147, 0
      %v4151 = vpack.c.b16 %v3812, %v3810
      %v4152 = vpack.c.b16 %v3813, %v3811
      %v4153 = vpack.c.b16 %v4004, %v4002
      %v4154 = vpack.c.b16 %v4005, %v4003
      %v4155 = vpack.c.b16 %v3816, %v3814
      %v4156 = vpack.c.b16 %v3817, %v3815
      %v4157 = vpack.c.b16 %v4008, %v4006
      %v4158 = vpack.c.b16 %v4009, %v4007
      %v4159 = vpack.c.b16 %v3820, %v3818
      %v4160 = vpack.c.b16 %v3821, %v3819
      %v4161 = vpack.c.b16 %v4012, %v4010
      %v4162 = vpack.c.b16 %v4013, %v4011
      %v4163 = vpack.c.b16 %v3824, %v3822
      %v4164 = vpack.c.b16 %v3825, %v3823
      %v4165 = vpack.c.b16 %v4016, %v4014
      %v4166 = vpack.c.b16 %v4017, %v4015
      %v4311 = vunpack.c.l.b16 %v4019
      %v4312 = vunpack.c.l.b16 %v4020
      %v4313 = vunpack.c.l.b16 %v4021
      %v4314 = vunpack.c.l.b16 %v4022
      %v4315 = vunpack.c.l.b16 %v4023
      %v4316 = vunpack.c.l.b16 %v4024
      %v4317 = vunpack.c.l.b16 %v4025
      %v4318 = vunpack.c.l.b16 %v4026
      %v4319 = vunpack.c.l.b16 %v4027
      %v4320 = vunpack.c.l.b16 %v4028
      %v4321 = vunpack.c.l.b16 %v4029
      %v4322 = vunpack.c.l.b16 %v4030
      %v4323 = vunpack.c.l.b16 %v4031
      %v4324 = vunpack.c.l.b16 %v4032
      %v4325 = vunpack.c.l.b16 %v4033
      %v4326 = vunpack.c.l.b16 %v4034
      %v4327 = vunpack.c.l.b16 %v4035
      %v4328 = vunpack.c.l.b16 %v4036
      %v4329 = vunpack.c.l.b16 %v4037
      %v4330 = vunpack.c.l.b16 %v4038
      %v4331 = vunpack.c.l.b16 %v4039
      %v4332 = vunpack.c.l.b16 %v4040
      %v4333 = vunpack.c.l.b16 %v4041
      %v4334 = vunpack.c.l.b16 %v4042
      %v4335 = vunpack.c.l.b16 %v4043
      %v4336 = vunpack.c.l.b16 %v4044
      %v4337 = vunpack.c.l.b16 %v4045
      %v4338 = vunpack.c.l.b16 %v4046
      %v4339 = vunpack.c.l.b16 %v4047
      %v4340 = vunpack.c.l.b16 %v4048
      %v4341 = vunpack.c.l.b16 %v4049
      %v4342 = vunpack.c.l.b16 %v4050
      %v4343 = vunpack.c.l.b16 %v4051
      %v4344 = vunpack.c.l.b16 %v4052
      %v4345 = vunpack.c.l.b16 %v4053
      %v4346 = vunpack.c.l.b16 %v4054
      %v4347 = vunpack.c.l.b16 %v4055
      %v4348 = vunpack.c.l.b16 %v4056
      %v4349 = vunpack.c.l.b16 %v4057
      %v4350 = vunpack.c.l.b16 %v4058
      %v4351 = vunpack.c.l.b16 %v4059
      %v4352 = vunpack.c.l.b16 %v4060
      %v4353 = vunpack.c.l.b16 %v4061
      %v4354 = vunpack.c.l.b16 %v4062
      %v4355 = vunpack.c.l.b16 %v4063
      %v4356 = vunpack.c.l.b16 %v4064
      %v4357 = vunpack.c.l.b16 %v4065
      %v4358 = vunpack.c.l.b16 %v4066
      %v4359 = vunpack.c.l.b16 %v4067
      %v4360 = vunpack.c.l.b16 %v4068
      %v4361 = vunpack.c.l.b16 %v4069
      %v4362 = vunpack.c.l.b16 %v4070
      %v4363 = vunpack.c.l.b16 %v4071
      %v4364 = vunpack.c.l.b16 %v4072
      %v4365 = vunpack.c.l.b16 %v4073
      %v4366 = vunpack.c.l.b16 %v4074
      %v4367 = vunpack.c.l.b16 %v4075
      %v4368 = vunpack.c.l.b16 %v4076
      %v4369 = vunpack.c.l.b16 %v4077
      %v4370 = vunpack.c.l.b16 %v4078
      %v4371 = vunpack.c.l.b16 %v4079
      %v4372 = vunpack.c.l.b16 %v4080
      %v4373 = vunpack.c.l.b16 %v4081
      %v4374 = vunpack.c.l.b16 %v4082
      %v4375 = vunpack.c.l.b16 %v4083
      %v4376 = vunpack.c.l.b16 %v4084
      %v4377 = vunpack.c.l.b16 %v4085
      %v4378 = vunpack.c.l.b16 %v4086
      %v4379 = vunpack.c.l.b16 %v4087
      %v4380 = vunpack.c.l.b16 %v4088
      %v4381 = vunpack.c.l.b16 %v4089
      %v4382 = vunpack.c.l.b16 %v4090
      %v4383 = vunpack.c.l.b16 %v4091
      %v4384 = vunpack.c.l.b16 %v4092
      %v4385 = vunpack.c.l.b16 %v4093
      %v4386 = vunpack.c.l.b16 %v4094
      %v4387 = vunpack.c.l.b16 %v4095
      %v4388 = vunpack.c.l.b16 %v4096
      %v4389 = vunpack.c.l.b16 %v4097
      %v4390 = vunpack.c.l.b16 %v4098
      %v4391 = vunpack.c.l.b16 %v4099
      %v4392 = vunpack.c.l.b16 %v4100
      %v4393 = vunpack.c.l.b16 %v4101
      %v4394 = vunpack.c.l.b16 %v4102
      %v4395 = vunpack.c.l.b16 %v4103
      %v4396 = vunpack.c.l.b16 %v4104
      %v4397 = vunpack.c.l.b16 %v4105
      %v4398 = vunpack.c.l.b16 %v4106
      %v4399 = vunpack.c.l.b16 %v4107
      %v4400 = vunpack.c.l.b16 %v4108
      %v4401 = vunpack.c.l.b16 %v4109
      %v4402 = vunpack.c.l.b16 %v4110
      %v4403 = vunpack.c.l.b16 %v4111
      %v4404 = vunpack.c.l.b16 %v4112
      %v4405 = vunpack.c.l.b16 %v4113
      %v4406 = vunpack.c.l.b16 %v4114
      %v4407 = vunpack.c.l.b16 %v4115
      %v4408 = vunpack.c.l.b16 %v4116
      %v4409 = vunpack.c.l.b16 %v4117
      %v4410 = vunpack.c.l.b16 %v4118
      %v4411 = vunpack.c.l.b16 %v4119
      %v4412 = vunpack.c.l.b16 %v4120
      %v4413 = vunpack.c.l.b16 %v4121
      %v4414 = vunpack.c.l.b16 %v4122
      %v4415 = vunpack.c.l.b16 %v4123
      %v4416 = vunpack.c.l.b16 %v4124
      %v4417 = vunpack.c.l.b16 %v4125
      %v4418 = vunpack.c.l.b16 %v4126
      %v4419 = vunpack.c.l.b16 %v4127
      %v4420 = vunpack.c.l.b16 %v4128
      %v4421 = vunpack.c.l.b16 %v4129
      %v4422 = vunpack.c.l.b16 %v4130
      %v4423 = vunpack.c.l.b16 %v4131
      %v4424 = vunpack.c.l.b16 %v4132
      %v4425 = vunpack.c.l.b16 %v4133
      %v4426 = vunpack.c.l.b16 %v4134
      %v4427 = vunpack.c.l.b16 %v4135
      %v4428 = vunpack.c.l.b16 %v4136
      %v4429 = vunpack.c.l.b16 %v4137
      %v4430 = vunpack.c.l.b16 %v4138
      %v4431 = vunpack.c.l.b16 %v4139
      %v4432 = vunpack.c.l.b16 %v4140
      %v4433 = vunpack.c.l.b16 %v4141
      %v4434 = vunpack.c.l.b16 %v4142
      %v4435 = vunpack.c.l.b16 %v4143
      %v4436 = vunpack.c.l.b16 %v4144
      %v4437 = vunpack.c.l.b16 %v4145
      %v4438 = vunpack.c.l.b16 %v4146
      %v4439 = vpack.c.b16 %v4312, %v4311
      %v4440 = vpack.c.b16 %v4314, %v4313
      %v4441 = vpack.c.b16 %v4316, %v4315
      %v4442 = vpack.c.b16 %v4318, %v4317
      %v4443 = vpack.c.b16 %v4320, %v4319
      %v4444 = vpack.c.b16 %v4322, %v4321
      %v4445 = vpack.c.b16 %v4324, %v4323
      %v4446 = vpack.c.b16 %v4326, %v4325
      %v4447 = vpack.c.b16 %v4328, %v4327
      %v4448 = vpack.c.b16 %v4330, %v4329
      %v4449 = vpack.c.b16 %v4332, %v4331
      %v4450 = vpack.c.b16 %v4334, %v4333
      %v4451 = vpack.c.b16 %v4336, %v4335
      %v4452 = vpack.c.b16 %v4338, %v4337
      %v4453 = vpack.c.b16 %v4340, %v4339
      %v4454 = vpack.c.b16 %v4342, %v4341
      %v4455 = vpack.c.b16 %v4344, %v4343
      %v4456 = vpack.c.b16 %v4346, %v4345
      %v4457 = vpack.c.b16 %v4348, %v4347
      %v4458 = vpack.c.b16 %v4350, %v4349
      %v4459 = vpack.c.b16 %v4352, %v4351
      %v4460 = vpack.c.b16 %v4354, %v4353
      %v4461 = vpack.c.b16 %v4356, %v4355
      %v4462 = vpack.c.b16 %v4358, %v4357
      %v4463 = vpack.c.b16 %v4360, %v4359
      %v4464 = vpack.c.b16 %v4362, %v4361
      %v4465 = vpack.c.b16 %v4364, %v4363
      %v4466 = vpack.c.b16 %v4366, %v4365
      %v4467 = vpack.c.b16 %v4368, %v4367
      %v4468 = vpack.c.b16 %v4370, %v4369
      %v4469 = vpack.c.b16 %v4372, %v4371
      %v4470 = vpack.c.b16 %v4374, %v4373
      %v4471 = vpack.c.b16 %v4376, %v4375
      %v4472 = vpack.c.b16 %v4378, %v4377
      %v4473 = vpack.c.b16 %v4380, %v4379
      %v4474 = vpack.c.b16 %v4382, %v4381
      %v4475 = vpack.c.b16 %v4384, %v4383
      %v4476 = vpack.c.b16 %v4386, %v4385
      %v4477 = vpack.c.b16 %v4388, %v4387
      %v4478 = vpack.c.b16 %v4390, %v4389
      %v4479 = vpack.c.b16 %v4392, %v4391
      %v4480 = vpack.c.b16 %v4394, %v4393
      %v4481 = vpack.c.b16 %v4396, %v4395
      %v4482 = vpack.c.b16 %v4398, %v4397
      %v4483 = vpack.c.b16 %v4400, %v4399
      %v4484 = vpack.c.b16 %v4402, %v4401
      %v4485 = vpack.c.b16 %v4404, %v4403
      %v4486 = vpack.c.b16 %v4406, %v4405
      %v4487 = vpack.c.b16 %v4408, %v4407
      %v4488 = vpack.c.b16 %v4410, %v4409
      %v4489 = vpack.c.b16 %v4412, %v4411
      %v4490 = vpack.c.b16 %v4414, %v4413
      %v4491 = vpack.c.b16 %v4416, %v4415
      %v4492 = vpack.c.b16 %v4418, %v4417
      %v4493 = vpack.c.b16 %v4420, %v4419
      %v4494 = vpack.c.b16 %v4422, %v4421
      %v4495 = vpack.c.b16 %v4424, %v4423
      %v4496 = vpack.c.b16 %v4426, %v4425
      %v4497 = vpack.c.b16 %v4428, %v4427
      %v4498 = vpack.c.b16 %v4430, %v4429
      %v4499 = vpack.c.b16 %v4432, %v4431
      %v4500 = vpack.c.b16 %v4434, %v4433
      %v4501 = vpack.c.b16 %v4436, %v4435
      %v4502 = vpack.c.b16 %v4438, %v4437
      %4567 = vmatpush.bf16.msra.mxu0 %v4446
      %4568 = vmatpush.bf16.msra.mxu0 %v4445
      %4569 = vmatpush.bf16.msra.mxu0 %v4444
      %4570 = vmatpush.bf16.msra.mxu0 %v4443
      %4571 = vmatpush.bf16.msra.mxu0 %v4442
      %4572 = vmatpush.bf16.msra.mxu0 %v4441
      %4573 = vmatpush.bf16.msra.mxu0 %v4440
      %4574 = vmatpush.bf16.msra.mxu0 %v4439
      %4575 = vmatmul.bf16.gmra.mxu0 %v1306
      %v4576 = vpop.f32.mrf.mxu0
      %v4577 = vadd.f32 %v4149, %v4576
      %v4578 = vpop.f32.mrf.mxu0
      %v4579 = vadd.f32 %v4149, %v4578
      %4580 = vmatmul.bf16.gmra.mxu0 %v1314
      %v4581 = vpop.f32.mrf.mxu0
      %v4582 = vadd.f32 %v4149, %v4581
      %v4583 = vpop.f32.mrf.mxu0
      %v4584 = vadd.f32 %v4149, %v4583
      %4585 = vmatmul.bf16.gmra.mxu0 %v1322
      %v4586 = vpop.f32.mrf.mxu0
      %v4587 = vadd.f32 %v4149, %v4586
      %v4588 = vpop.f32.mrf.mxu0
      %v4589 = vadd.f32 %v4149, %v4588
      %4590 = vmatmul.bf16.gmra.mxu0 %v1330
      %v4591 = vpop.f32.mrf.mxu0
      %v4592 = vadd.f32 %v4149, %v4591
      %v4593 = vpop.f32.mrf.mxu0
      %v4594 = vadd.f32 %v4149, %v4593
      %4595 = vdwg.mxu0
      %4596 = vmatpush.bf16.msra.mxu0 %v4454
      %4597 = vmatpush.bf16.msra.mxu0 %v4453
      %4598 = vmatpush.bf16.msra.mxu0 %v4452
      %4599 = vmatpush.bf16.msra.mxu0 %v4451
      %4600 = vmatpush.bf16.msra.mxu0 %v4450
      %4601 = vmatpush.bf16.msra.mxu0 %v4449
      %4602 = vmatpush.bf16.msra.mxu0 %v4448
      %4603 = vmatpush.bf16.msra.mxu0 %v4447
      %4604 = vmatmul.bf16.gmra.mxu0 %v1307
      %v4605 = vpop.f32.mrf.mxu0
      %v4606 = vadd.f32 %v4577, %v4605
      %v4607 = vpop.f32.mrf.mxu0
      %v4608 = vadd.f32 %v4579, %v4607
      %4609 = vmatmul.bf16.gmra.mxu0 %v1315
      %v4610 = vpop.f32.mrf.mxu0
      %v4611 = vadd.f32 %v4582, %v4610
      %v4612 = vpop.f32.mrf.mxu0
      %v4613 = vadd.f32 %v4584, %v4612
      %4614 = vmatmul.bf16.gmra.mxu0 %v1323
      %v4615 = vpop.f32.mrf.mxu0
      %v4616 = vadd.f32 %v4587, %v4615
      %v4617 = vpop.f32.mrf.mxu0
      %v4618 = vadd.f32 %v4589, %v4617
      %4619 = vmatmul.bf16.gmra.mxu0 %v1331
      %v4620 = vpop.f32.mrf.mxu0
      %v4621 = vadd.f32 %v4592, %v4620
      %v4622 = vpop.f32.mrf.mxu0
      %v4623 = vadd.f32 %v4594, %v4622
      %4624 = vdwg.mxu0
      %4625 = vmatpush.bf16.msra.mxu0 %v4462
      %4626 = vmatpush.bf16.msra.mxu0 %v4461
      %4627 = vmatpush.bf16.msra.mxu0 %v4460
      %4628 = vmatpush.bf16.msra.mxu0 %v4459
      %4629 = vmatpush.bf16.msra.mxu0 %v4458
      %4630 = vmatpush.bf16.msra.mxu0 %v4457
      %4631 = vmatpush.bf16.msra.mxu0 %v4456
      %4632 = vmatpush.bf16.msra.mxu0 %v4455
      %4633 = vmatmul.bf16.gmra.mxu0 %v1308
      %v4634 = vpop.f32.mrf.mxu0
      %v4635 = vadd.f32 %v4606, %v4634
      %v4636 = vpop.f32.mrf.mxu0
      %v4637 = vadd.f32 %v4608, %v4636
      %4638 = vmatmul.bf16.gmra.mxu0 %v1316
      %v4639 = vpop.f32.mrf.mxu0
      %v4640 = vadd.f32 %v4611, %v4639
      %v4641 = vpop.f32.mrf.mxu0
      %v4642 = vadd.f32 %v4613, %v4641
      %4643 = vmatmul.bf16.gmra.mxu0 %v1324
      %v4644 = vpop.f32.mrf.mxu0
      %v4645 = vadd.f32 %v4616, %v4644
      %v4646 = vpop.f32.mrf.mxu0
      %v4647 = vadd.f32 %v4618, %v4646
      %4648 = vmatmul.bf16.gmra.mxu0 %v1332
      %v4649 = vpop.f32.mrf.mxu0
      %v4650 = vadd.f32 %v4621, %v4649
      %v4651 = vpop.f32.mrf.mxu0
      %v4652 = vadd.f32 %v4623, %v4651
      %4653 = vdwg.mxu0
      %4654 = vmatpush.bf16.msra.mxu0 %v4470
      %4655 = vmatpush.bf16.msra.mxu0 %v4469
      %4656 = vmatpush.bf16.msra.mxu0 %v4468
      %4657 = vmatpush.bf16.msra.mxu0 %v4467
      %4658 = vmatpush.bf16.msra.mxu0 %v4466
      %4659 = vmatpush.bf16.msra.mxu0 %v4465
      %4660 = vmatpush.bf16.msra.mxu0 %v4464
      %4661 = vmatpush.bf16.msra.mxu0 %v4463
      %4662 = vmatmul.bf16.gmra.mxu0 %v1309
      %v4663 = vpop.f32.mrf.mxu0
      %v4664 = vadd.f32 %v4635, %v4663
      %v4665 = vpop.f32.mrf.mxu0
      %v4666 = vadd.f32 %v4637, %v4665
      %4667 = vmatmul.bf16.gmra.mxu0 %v1317
      %v4668 = vpop.f32.mrf.mxu0
      %v4669 = vadd.f32 %v4640, %v4668
      %v4670 = vpop.f32.mrf.mxu0
      %v4671 = vadd.f32 %v4642, %v4670
      %4672 = vmatmul.bf16.gmra.mxu0 %v1325
      %v4673 = vpop.f32.mrf.mxu0
      %v4674 = vadd.f32 %v4645, %v4673
      %v4675 = vpop.f32.mrf.mxu0
      %v4676 = vadd.f32 %v4647, %v4675
      %4677 = vmatmul.bf16.gmra.mxu0 %v1333
      %v4678 = vpop.f32.mrf.mxu0
      %v4679 = vadd.f32 %v4650, %v4678
      %v4680 = vpop.f32.mrf.mxu0
      %v4681 = vadd.f32 %v4652, %v4680
      %4682 = vdwg.mxu0
      %4683 = vmatpush.bf16.msra.mxu0 %v4478
      %4684 = vmatpush.bf16.msra.mxu0 %v4477
      %4685 = vmatpush.bf16.msra.mxu0 %v4476
      %4686 = vmatpush.bf16.msra.mxu0 %v4475
      %4687 = vmatpush.bf16.msra.mxu0 %v4474
      %4688 = vmatpush.bf16.msra.mxu0 %v4473
      %4689 = vmatpush.bf16.msra.mxu0 %v4472
      %4690 = vmatpush.bf16.msra.mxu0 %v4471
      %4691 = vmatmul.bf16.gmra.mxu0 %v4151
      %v4692 = vpop.f32.mrf.mxu0
      %v4693 = vadd.f32 %v4664, %v4692
      %v4694 = vpop.f32.mrf.mxu0
      %v4695 = vadd.f32 %v4666, %v4694
      %4696 = vmatmul.bf16.gmra.mxu0 %v4155
      %v4697 = vpop.f32.mrf.mxu0
      %v4698 = vadd.f32 %v4669, %v4697
      %v4699 = vpop.f32.mrf.mxu0
      %v4700 = vadd.f32 %v4671, %v4699
      %4701 = vmatmul.bf16.gmra.mxu0 %v4159
      %v4702 = vpop.f32.mrf.mxu0
      %v4703 = vadd.f32 %v4674, %v4702
      %v4704 = vpop.f32.mrf.mxu0
      %v4705 = vadd.f32 %v4676, %v4704
      %4706 = vmatmul.bf16.gmra.mxu0 %v4163
      %v4707 = vpop.f32.mrf.mxu0
      %v4708 = vadd.f32 %v4679, %v4707
      %v4709 = vpop.f32.mrf.mxu0
      %v4710 = vadd.f32 %v4681, %v4709
      %4711 = vdwg.mxu0
      %4712 = vmatpush.bf16.msra.mxu0 %v4486
      %4713 = vmatpush.bf16.msra.mxu0 %v4485
      %4714 = vmatpush.bf16.msra.mxu0 %v4484
      %4715 = vmatpush.bf16.msra.mxu0 %v4483
      %4716 = vmatpush.bf16.msra.mxu0 %v4482
      %4717 = vmatpush.bf16.msra.mxu0 %v4481
      %4718 = vmatpush.bf16.msra.mxu0 %v4480
      %4719 = vmatpush.bf16.msra.mxu0 %v4479
      %4720 = vmatmul.bf16.gmra.mxu0 %v4152
      %v4721 = vpop.f32.mrf.mxu0
      %v4722 = vadd.f32 %v4693, %v4721
      %v4723 = vpop.f32.mrf.mxu0
      %v4724 = vadd.f32 %v4695, %v4723
      %4725 = vmatmul.bf16.gmra.mxu0 %v4156
      %v4726 = vpop.f32.mrf.mxu0
      %v4727 = vadd.f32 %v4698, %v4726
      %v4728 = vpop.f32.mrf.mxu0
      %v4729 = vadd.f32 %v4700, %v4728
      %4730 = vmatmul.bf16.gmra.mxu0 %v4160
      %v4731 = vpop.f32.mrf.mxu0
      %v4732 = vadd.f32 %v4703, %v4731
      %v4733 = vpop.f32.mrf.mxu0
      %v4734 = vadd.f32 %v4705, %v4733
      %4735 = vmatmul.bf16.gmra.mxu0 %v4164
      %v4736 = vpop.f32.mrf.mxu0
      %v4737 = vadd.f32 %v4708, %v4736
      %v4738 = vpop.f32.mrf.mxu0
      %v4739 = vadd.f32 %v4710, %v4738
      %4740 = vdwg.mxu0
      %4741 = vmatpush.bf16.msra.mxu0 %v4494
      %4742 = vmatpush.bf16.msra.mxu0 %v4493
      %4743 = vmatpush.bf16.msra.mxu0 %v4492
      %4744 = vmatpush.bf16.msra.mxu0 %v4491
      %4745 = vmatpush.bf16.msra.mxu0 %v4490
      %4746 = vmatpush.bf16.msra.mxu0 %v4489
      %4747 = vmatpush.bf16.msra.mxu0 %v4488
      %4748 = vmatpush.bf16.msra.mxu0 %v4487
      %4749 = vmatmul.bf16.gmra.mxu0 %v4153
      %v4750 = vpop.f32.mrf.mxu0
      %v4751 = vadd.f32 %v4722, %v4750
      %v4752 = vpop.f32.mrf.mxu0
      %v4753 = vadd.f32 %v4724, %v4752
      %4754 = vmatmul.bf16.gmra.mxu0 %v4157
      %v4755 = vpop.f32.mrf.mxu0
      %v4756 = vadd.f32 %v4727, %v4755
      %v4757 = vpop.f32.mrf.mxu0
      %v4758 = vadd.f32 %v4729, %v4757
      %4759 = vmatmul.bf16.gmra.mxu0 %v4161
      %v4760 = vpop.f32.mrf.mxu0
      %v4761 = vadd.f32 %v4732, %v4760
      %v4762 = vpop.f32.mrf.mxu0
      %v4763 = vadd.f32 %v4734, %v4762
      %4764 = vmatmul.bf16.gmra.mxu0 %v4165
      %v4765 = vpop.f32.mrf.mxu0
      %v4766 = vadd.f32 %v4737, %v4765
      %v4767 = vpop.f32.mrf.mxu0
      %v4768 = vadd.f32 %v4739, %v4767
      %4769 = vdwg.mxu0
      %4770 = vmatpush.bf16.msra.mxu0 %v4502
      %4771 = vmatpush.bf16.msra.mxu0 %v4501
      %4772 = vmatpush.bf16.msra.mxu0 %v4500
      %4773 = vmatpush.bf16.msra.mxu0 %v4499
      %4774 = vmatpush.bf16.msra.mxu0 %v4498
      %4775 = vmatpush.bf16.msra.mxu0 %v4497
      %4776 = vmatpush.bf16.msra.mxu0 %v4496
      %4777 = vmatpush.bf16.msra.mxu0 %v4495
      %4778 = vmatmul.bf16.gmra.mxu0 %v4154
      %v4779 = vpop.f32.mrf.mxu0
      %v4780 = vadd.f32 %v4751, %v4779
      %v4781 = vpop.f32.mrf.mxu0
      %v4782 = vadd.f32 %v4753, %v4781
      %4783 = vmatmul.bf16.gmra.mxu0 %v4158
      %v4784 = vpop.f32.mrf.mxu0
      %v4785 = vadd.f32 %v4756, %v4784
      %v4786 = vpop.f32.mrf.mxu0
      %v4787 = vadd.f32 %v4758, %v4786
      %4788 = vmatmul.bf16.gmra.mxu0 %v4162
      %v4789 = vpop.f32.mrf.mxu0
      %v4790 = vadd.f32 %v4761, %v4789
      %v4791 = vpop.f32.mrf.mxu0
      %v4792 = vadd.f32 %v4763, %v4791
      %4793 = vmatmul.bf16.gmra.mxu0 %v4166
      %v4794 = vpop.f32.mrf.mxu0
      %v4795 = vadd.f32 %v4766, %v4794
      %v4796 = vpop.f32.mrf.mxu0
      %v4797 = vadd.f32 %v4768, %v4796
      %4798 = vdwg.mxu0
      %v4815 = vunpack.c.l.b16 %v722
      %v4816 = vunpack.c.h.b16 %v722
      %v4817 = vunpack.c.l.b16 %v723
      %v4818 = vunpack.c.h.b16 %v723
      %v4819 = vunpack.c.l.b16 %v724
      %v4820 = vunpack.c.h.b16 %v724
      %v4821 = vunpack.c.l.b16 %v725
      %v4822 = vunpack.c.h.b16 %v725
      %v4823 = vunpack.c.l.b16 %v726
      %v4824 = vunpack.c.h.b16 %v726
      %v4825 = vunpack.c.l.b16 %v727
      %v4826 = vunpack.c.h.b16 %v727
      %v4827 = vunpack.c.l.b16 %v728
      %v4828 = vunpack.c.h.b16 %v728
      %v4829 = vunpack.c.l.b16 %v729
      %v4830 = vunpack.c.h.b16 %v729
      %v4831 = vunpack.c.l.b16 %v730
      %v4832 = vunpack.c.h.b16 %v730
      %v4833 = vunpack.c.l.b16 %v731
      %v4834 = vunpack.c.h.b16 %v731
      %v4835 = vunpack.c.l.b16 %v732
      %v4836 = vunpack.c.h.b16 %v732
      %v4837 = vunpack.c.l.b16 %v733
      %v4838 = vunpack.c.h.b16 %v733
      %v4839 = vunpack.c.l.b16 %v734
      %v4840 = vunpack.c.h.b16 %v734
      %v4841 = vunpack.c.l.b16 %v735
      %v4842 = vunpack.c.h.b16 %v735
      %v4843 = vunpack.c.l.b16 %v736
      %v4844 = vunpack.c.h.b16 %v736
      %v4845 = vunpack.c.l.b16 %v737
      %v4846 = vunpack.c.h.b16 %v737
      %v4847 = vpack.c.b16 %v4817, %v4815
      %v4848 = vpack.c.b16 %v4818, %v4816
      %v4849 = vpack.c.b16 %v4821, %v4819
      %v4850 = vpack.c.b16 %v4822, %v4820
      %v4851 = vpack.c.b16 %v4825, %v4823
      %v4852 = vpack.c.b16 %v4826, %v4824
      %v4853 = vpack.c.b16 %v4829, %v4827
      %v4854 = vpack.c.b16 %v4830, %v4828
      %v4855 = vpack.c.b16 %v4833, %v4831
      %v4856 = vpack.c.b16 %v4834, %v4832
      %v4857 = vpack.c.b16 %v4837, %v4835
      %v4858 = vpack.c.b16 %v4838, %v4836
      %v4859 = vpack.c.b16 %v4841, %v4839
      %v4860 = vpack.c.b16 %v4842, %v4840
      %v4861 = vpack.c.b16 %v4845, %v4843
      %v4862 = vpack.c.b16 %v4846, %v4844
      %v4864 = vshrl.u32 %v4847, 16
      %v4866 = vshll.u32 %v4847, 16
      %v4868 = vrot.slane %v4866, 1
      %v4869 = vor.u32 %v4864, %v4868
      %v4871 = vshrl.u32 %v4848, 16
      %v4873 = vshll.u32 %v4848, 16
      %v4875 = vrot.slane %v4873, 1
      %v4876 = vor.u32 %v4871, %v4875
      %v4878 = vshrl.u32 %v4849, 16
      %v4880 = vshll.u32 %v4849, 16
      %v4882 = vrot.slane %v4880, 1
      %v4883 = vor.u32 %v4878, %v4882
      %v4885 = vshrl.u32 %v4850, 16
      %v4887 = vshll.u32 %v4850, 16
      %v4889 = vrot.slane %v4887, 1
      %v4890 = vor.u32 %v4885, %v4889
      %v4892 = vshrl.u32 %v4851, 16
      %v4894 = vshll.u32 %v4851, 16
      %v4896 = vrot.slane %v4894, 1
      %v4897 = vor.u32 %v4892, %v4896
      %v4899 = vshrl.u32 %v4852, 16
      %v4901 = vshll.u32 %v4852, 16
      %v4903 = vrot.slane %v4901, 1
      %v4904 = vor.u32 %v4899, %v4903
      %v4906 = vshrl.u32 %v4853, 16
      %v4908 = vshll.u32 %v4853, 16
      %v4910 = vrot.slane %v4908, 1
      %v4911 = vor.u32 %v4906, %v4910
      %v4913 = vshrl.u32 %v4854, 16
      %v4915 = vshll.u32 %v4854, 16
      %v4917 = vrot.slane %v4915, 1
      %v4918 = vor.u32 %v4913, %v4917
      %v4920 = vshrl.u32 %v4855, 16
      %v4922 = vshll.u32 %v4855, 16
      %v4924 = vrot.slane %v4922, 1
      %v4925 = vor.u32 %v4920, %v4924
      %v4927 = vshrl.u32 %v4856, 16
      %v4929 = vshll.u32 %v4856, 16
      %v4931 = vrot.slane %v4929, 1
      %v4932 = vor.u32 %v4927, %v4931
      %v4934 = vshrl.u32 %v4857, 16
      %v4936 = vshll.u32 %v4857, 16
      %v4938 = vrot.slane %v4936, 1
      %v4939 = vor.u32 %v4934, %v4938
      %v4941 = vshrl.u32 %v4858, 16
      %v4943 = vshll.u32 %v4858, 16
      %v4945 = vrot.slane %v4943, 1
      %v4946 = vor.u32 %v4941, %v4945
      %v4948 = vshrl.u32 %v4859, 16
      %v4950 = vshll.u32 %v4859, 16
      %v4952 = vrot.slane %v4950, 1
      %v4953 = vor.u32 %v4948, %v4952
      %v4955 = vshrl.u32 %v4860, 16
      %v4957 = vshll.u32 %v4860, 16
      %v4959 = vrot.slane %v4957, 1
      %v4960 = vor.u32 %v4955, %v4959
      %v4962 = vshrl.u32 %v4861, 16
      %v4964 = vshll.u32 %v4861, 16
      %v4966 = vrot.slane %v4964, 1
      %v4967 = vor.u32 %v4962, %v4966
      %v4969 = vshrl.u32 %v4862, 16
      %v4971 = vshll.u32 %v4862, 16
      %v4973 = vrot.slane %v4971, 1
      %v4974 = vor.u32 %v4969, %v4973
      %v4975 = vunpack.c.l.b16 %v4869
      %v4976 = vunpack.c.l.b16 %v4876
      %v4977 = vunpack.c.h.b16 %v4869
      %v4978 = vunpack.c.h.b16 %v4876
      %v4979 = vunpack.c.l.b16 %v4883
      %v4980 = vunpack.c.l.b16 %v4890
      %v4981 = vunpack.c.h.b16 %v4883
      %v4982 = vunpack.c.h.b16 %v4890
      %v4983 = vunpack.c.l.b16 %v4897
      %v4984 = vunpack.c.l.b16 %v4904
      %v4985 = vunpack.c.h.b16 %v4897
      %v4986 = vunpack.c.h.b16 %v4904
      %v4987 = vunpack.c.l.b16 %v4911
      %v4988 = vunpack.c.l.b16 %v4918
      %v4989 = vunpack.c.h.b16 %v4911
      %v4990 = vunpack.c.h.b16 %v4918
      %v4991 = vunpack.c.l.b16 %v4925
      %v4992 = vunpack.c.l.b16 %v4932
      %v4993 = vunpack.c.h.b16 %v4925
      %v4994 = vunpack.c.h.b16 %v4932
      %v4995 = vunpack.c.l.b16 %v4939
      %v4996 = vunpack.c.l.b16 %v4946
      %v4997 = vunpack.c.h.b16 %v4939
      %v4998 = vunpack.c.h.b16 %v4946
      %v4999 = vunpack.c.l.b16 %v4953
      %v5000 = vunpack.c.l.b16 %v4960
      %v5001 = vunpack.c.h.b16 %v4953
      %v5002 = vunpack.c.h.b16 %v4960
      %v5003 = vunpack.c.l.b16 %v4967
      %v5004 = vunpack.c.l.b16 %v4974
      %v5005 = vunpack.c.h.b16 %v4967
      %v5006 = vunpack.c.h.b16 %v4974
      %v5007 = vpack.c.b16 %v3843, %v3842
      %v5008 = vpack.c.b16 %v4976, %v4975
      %v5009 = vpack.c.b16 %v3845, %v3844
      %v5010 = vpack.c.b16 %v4978, %v4977
      %v5011 = vpack.c.b16 %v3847, %v3846
      %v5012 = vpack.c.b16 %v4980, %v4979
      %v5013 = vpack.c.b16 %v3849, %v3848
      %v5014 = vpack.c.b16 %v4982, %v4981
      %v5015 = vpack.c.b16 %v3851, %v3850
      %v5016 = vpack.c.b16 %v4984, %v4983
      %v5017 = vpack.c.b16 %v3853, %v3852
      %v5018 = vpack.c.b16 %v4986, %v4985
      %v5019 = vpack.c.b16 %v3855, %v3854
      %v5020 = vpack.c.b16 %v4988, %v4987
      %v5021 = vpack.c.b16 %v3857, %v3856
      %v5022 = vpack.c.b16 %v4990, %v4989
      %v5023 = vpack.c.b16 %v3859, %v3858
      %v5024 = vpack.c.b16 %v4992, %v4991
      %v5025 = vpack.c.b16 %v3861, %v3860
      %v5026 = vpack.c.b16 %v4994, %v4993
      %v5027 = vpack.c.b16 %v3863, %v3862
      %v5028 = vpack.c.b16 %v4996, %v4995
      %v5029 = vpack.c.b16 %v3865, %v3864
      %v5030 = vpack.c.b16 %v4998, %v4997
      %v5031 = vpack.c.b16 %v3867, %v3866
      %v5032 = vpack.c.b16 %v5000, %v4999
      %v5033 = vpack.c.b16 %v3869, %v3868
      %v5034 = vpack.c.b16 %v5002, %v5001
      %v5035 = vpack.c.b16 %v3871, %v3870
      %v5036 = vpack.c.b16 %v5004, %v5003
      %v5037 = vpack.c.b16 %v3873, %v3872
      %v5038 = vpack.c.b16 %v5006, %v5005
      %v5040 = vshrl.u32 %v5007, 16
      %v5042 = vrot.slane %v5040, 4
      %v5043 = vshll.u32 %v5007, 16
      %v5045 = vrot.slane %v5043, 5
      %v5046 = vor.u32 %v5042, %v5045
      %v5047 = vrot.slane %v5046, 4
      %v5049 = vshll.u32 %v5009, 16
      %v5051 = vrot.slane %v5049, 5
      %v5052 = vsel %vm2464, %v5047, %v5051
      %v5054 = vshrl.u32 %v5008, 16
      %v5056 = vrot.slane %v5054, 4
      %v5057 = vshll.u32 %v5008, 16
      %v5059 = vrot.slane %v5057, 5
      %v5060 = vor.u32 %v5056, %v5059
      %v5061 = vrot.slane %v5060, 4
      %v5063 = vshll.u32 %v5010, 16
      %v5065 = vrot.slane %v5063, 5
      %v5066 = vsel %vm2464, %v5061, %v5065
      %v5068 = vshrl.u32 %v5011, 16
      %v5070 = vrot.slane %v5068, 4
      %v5071 = vshll.u32 %v5011, 16
      %v5073 = vrot.slane %v5071, 5
      %v5074 = vor.u32 %v5070, %v5073
      %v5075 = vrot.slane %v5074, 4
      %v5077 = vshll.u32 %v5013, 16
      %v5079 = vrot.slane %v5077, 5
      %v5080 = vsel %vm2464, %v5075, %v5079
      %v5082 = vshrl.u32 %v5012, 16
      %v5084 = vrot.slane %v5082, 4
      %v5085 = vshll.u32 %v5012, 16
      %v5087 = vrot.slane %v5085, 5
      %v5088 = vor.u32 %v5084, %v5087
      %v5089 = vrot.slane %v5088, 4
      %v5091 = vshll.u32 %v5014, 16
      %v5093 = vrot.slane %v5091, 5
      %v5094 = vsel %vm2464, %v5089, %v5093
      %v5096 = vshrl.u32 %v5015, 16
      %v5098 = vrot.slane %v5096, 4
      %v5099 = vshll.u32 %v5015, 16
      %v5101 = vrot.slane %v5099, 5
      %v5102 = vor.u32 %v5098, %v5101
      %v5103 = vrot.slane %v5102, 4
      %v5105 = vshll.u32 %v5017, 16
      %v5107 = vrot.slane %v5105, 5
      %v5108 = vsel %vm2464, %v5103, %v5107
      %v5110 = vshrl.u32 %v5016, 16
      %v5112 = vrot.slane %v5110, 4
      %v5113 = vshll.u32 %v5016, 16
      %v5115 = vrot.slane %v5113, 5
      %v5116 = vor.u32 %v5112, %v5115
      %v5117 = vrot.slane %v5116, 4
      %v5119 = vshll.u32 %v5018, 16
      %v5121 = vrot.slane %v5119, 5
      %v5122 = vsel %vm2464, %v5117, %v5121
      %v5124 = vshrl.u32 %v5019, 16
      %v5126 = vrot.slane %v5124, 4
      %v5127 = vshll.u32 %v5019, 16
      %v5129 = vrot.slane %v5127, 5
      %v5130 = vor.u32 %v5126, %v5129
      %v5131 = vrot.slane %v5130, 4
      %v5133 = vshll.u32 %v5021, 16
      %v5135 = vrot.slane %v5133, 5
      %v5136 = vsel %vm2464, %v5131, %v5135
      %v5138 = vshrl.u32 %v5020, 16
      %v5140 = vrot.slane %v5138, 4
      %v5141 = vshll.u32 %v5020, 16
      %v5143 = vrot.slane %v5141, 5
      %v5144 = vor.u32 %v5140, %v5143
      %v5145 = vrot.slane %v5144, 4
      %v5147 = vshll.u32 %v5022, 16
      %v5149 = vrot.slane %v5147, 5
      %v5150 = vsel %vm2464, %v5145, %v5149
      %v5152 = vshrl.u32 %v5023, 16
      %v5154 = vrot.slane %v5152, 4
      %v5155 = vshll.u32 %v5023, 16
      %v5157 = vrot.slane %v5155, 5
      %v5158 = vor.u32 %v5154, %v5157
      %v5159 = vrot.slane %v5158, 4
      %v5161 = vshll.u32 %v5025, 16
      %v5163 = vrot.slane %v5161, 5
      %v5164 = vsel %vm2464, %v5159, %v5163
      %v5166 = vshrl.u32 %v5024, 16
      %v5168 = vrot.slane %v5166, 4
      %v5169 = vshll.u32 %v5024, 16
      %v5171 = vrot.slane %v5169, 5
      %v5172 = vor.u32 %v5168, %v5171
      %v5173 = vrot.slane %v5172, 4
      %v5175 = vshll.u32 %v5026, 16
      %v5177 = vrot.slane %v5175, 5
      %v5178 = vsel %vm2464, %v5173, %v5177
      %v5180 = vshrl.u32 %v5027, 16
      %v5182 = vrot.slane %v5180, 4
      %v5183 = vshll.u32 %v5027, 16
      %v5185 = vrot.slane %v5183, 5
      %v5186 = vor.u32 %v5182, %v5185
      %v5187 = vrot.slane %v5186, 4
      %v5189 = vshll.u32 %v5029, 16
      %v5191 = vrot.slane %v5189, 5
      %v5192 = vsel %vm2464, %v5187, %v5191
      %v5194 = vshrl.u32 %v5028, 16
      %v5196 = vrot.slane %v5194, 4
      %v5197 = vshll.u32 %v5028, 16
      %v5199 = vrot.slane %v5197, 5
      %v5200 = vor.u32 %v5196, %v5199
      %v5201 = vrot.slane %v5200, 4
      %v5203 = vshll.u32 %v5030, 16
      %v5205 = vrot.slane %v5203, 5
      %v5206 = vsel %vm2464, %v5201, %v5205
      %v5208 = vshrl.u32 %v5031, 16
      %v5210 = vrot.slane %v5208, 4
      %v5211 = vshll.u32 %v5031, 16
      %v5213 = vrot.slane %v5211, 5
      %v5214 = vor.u32 %v5210, %v5213
      %v5215 = vrot.slane %v5214, 4
      %v5217 = vshll.u32 %v5033, 16
      %v5219 = vrot.slane %v5217, 5
      %v5220 = vsel %vm2464, %v5215, %v5219
      %v5222 = vshrl.u32 %v5032, 16
      %v5224 = vrot.slane %v5222, 4
      %v5225 = vshll.u32 %v5032, 16
      %v5227 = vrot.slane %v5225, 5
      %v5228 = vor.u32 %v5224, %v5227
      %v5229 = vrot.slane %v5228, 4
      %v5231 = vshll.u32 %v5034, 16
      %v5233 = vrot.slane %v5231, 5
      %v5234 = vsel %vm2464, %v5229, %v5233
      %v5236 = vshrl.u32 %v5035, 16
      %v5238 = vrot.slane %v5236, 4
      %v5239 = vshll.u32 %v5035, 16
      %v5241 = vrot.slane %v5239, 5
      %v5242 = vor.u32 %v5238, %v5241
      %v5243 = vrot.slane %v5242, 4
      %v5245 = vshll.u32 %v5037, 16
      %v5247 = vrot.slane %v5245, 5
      %v5248 = vsel %vm2464, %v5243, %v5247
      %v5250 = vshrl.u32 %v5036, 16
      %v5252 = vrot.slane %v5250, 4
      %v5253 = vshll.u32 %v5036, 16
      %v5255 = vrot.slane %v5253, 5
      %v5256 = vor.u32 %v5252, %v5255
      %v5257 = vrot.slane %v5256, 4
      %v5259 = vshll.u32 %v5038, 16
      %v5261 = vrot.slane %v5259, 5
      %v5262 = vsel %vm2464, %v5257, %v5261
      %s5263 = scalar_lea.vmem %s2, 1536
      %v5264 = vld [vmem:[%s5263] sm:$0xf]
      %v5265 = vld [vmem:[%s5263 + $0x4] sm:$0xf]
      %v5266 = vld [vmem:[%s5263 + $0x8] sm:$0xf]
      %v5267 = vld [vmem:[%s5263 + $0xc] sm:$0xf]
      %v5268 = vld [vmem:[%s5263 + $0x10] sm:$0xf]
      %v5269 = vld [vmem:[%s5263 + $0x14] sm:$0xf]
      %v5270 = vld [vmem:[%s5263 + $0x18] sm:$0xf]
      %v5271 = vld [vmem:[%s5263 + $0x1c] sm:$0xf]
      %v5272 = vld [vmem:[%s5263 + $0x20] sm:$0xf]
      %v5273 = vld [vmem:[%s5263 + $0x24] sm:$0xf]
      %v5274 = vld [vmem:[%s5263 + $0x28] sm:$0xf]
      %v5275 = vld [vmem:[%s5263 + $0x2c] sm:$0xf]
      %v5276 = vld [vmem:[%s5263 + $0x30] sm:$0xf]
      %v5277 = vld [vmem:[%s5263 + $0x34] sm:$0xf]
      %v5278 = vld [vmem:[%s5263 + $0x38] sm:$0xf]
      %v5279 = vld [vmem:[%s5263 + $0x3c] sm:$0xf]
      %v5280 = vld [vmem:[%s5263 + $0x40] sm:$0xf]
      %v5281 = vld [vmem:[%s5263 + $0x44] sm:$0xf]
      %v5282 = vld [vmem:[%s5263 + $0x48] sm:$0xf]
      %v5283 = vld [vmem:[%s5263 + $0x4c] sm:$0xf]
      %v5284 = vld [vmem:[%s5263 + $0x50] sm:$0xf]
      %v5285 = vld [vmem:[%s5263 + $0x54] sm:$0xf]
      %v5286 = vld [vmem:[%s5263 + $0x58] sm:$0xf]
      %v5287 = vld [vmem:[%s5263 + $0x5c] sm:$0xf]
      %v5288 = vld [vmem:[%s5263 + $0x60] sm:$0xf]
      %v5289 = vld [vmem:[%s5263 + $0x64] sm:$0xf]
      %v5290 = vld [vmem:[%s5263 + $0x68] sm:$0xf]
      %v5291 = vld [vmem:[%s5263 + $0x6c] sm:$0xf]
      %v5292 = vld [vmem:[%s5263 + $0x70] sm:$0xf]
      %v5293 = vld [vmem:[%s5263 + $0x74] sm:$0xf]
      %v5294 = vld [vmem:[%s5263 + $0x78] sm:$0xf]
      %v5295 = vld [vmem:[%s5263 + $0x7c] sm:$0xf]
      %v5296 = vld [vmem:[%s5263 + $0x80] sm:$0xf]
      %v5297 = vld [vmem:[%s5263 + $0x84] sm:$0xf]
      %v5298 = vld [vmem:[%s5263 + $0x88] sm:$0xf]
      %v5299 = vld [vmem:[%s5263 + $0x8c] sm:$0xf]
      %v5300 = vld [vmem:[%s5263 + $0x90] sm:$0xf]
      %v5301 = vld [vmem:[%s5263 + $0x94] sm:$0xf]
      %v5302 = vld [vmem:[%s5263 + $0x98] sm:$0xf]
      %v5303 = vld [vmem:[%s5263 + $0x9c] sm:$0xf]
      %v5304 = vld [vmem:[%s5263 + $0xa0] sm:$0xf]
      %v5305 = vld [vmem:[%s5263 + $0xa4] sm:$0xf]
      %v5306 = vld [vmem:[%s5263 + $0xa8] sm:$0xf]
      %v5307 = vld [vmem:[%s5263 + $0xac] sm:$0xf]
      %v5308 = vld [vmem:[%s5263 + $0xb0] sm:$0xf]
      %v5309 = vld [vmem:[%s5263 + $0xb4] sm:$0xf]
      %v5310 = vld [vmem:[%s5263 + $0xb8] sm:$0xf]
      %v5311 = vld [vmem:[%s5263 + $0xbc] sm:$0xf]
      %v5312 = vld [vmem:[%s5263 + $0xc0] sm:$0xf]
      %v5313 = vld [vmem:[%s5263 + $0xc4] sm:$0xf]
      %v5314 = vld [vmem:[%s5263 + $0xc8] sm:$0xf]
      %v5315 = vld [vmem:[%s5263 + $0xcc] sm:$0xf]
      %v5316 = vld [vmem:[%s5263 + $0xd0] sm:$0xf]
      %v5317 = vld [vmem:[%s5263 + $0xd4] sm:$0xf]
      %v5318 = vld [vmem:[%s5263 + $0xd8] sm:$0xf]
      %v5319 = vld [vmem:[%s5263 + $0xdc] sm:$0xf]
      %v5320 = vld [vmem:[%s5263 + $0xe0] sm:$0xf]
      %v5321 = vld [vmem:[%s5263 + $0xe4] sm:$0xf]
      %v5322 = vld [vmem:[%s5263 + $0xe8] sm:$0xf]
      %v5323 = vld [vmem:[%s5263 + $0xec] sm:$0xf]
      %v5324 = vld [vmem:[%s5263 + $0xf0] sm:$0xf]
      %v5325 = vld [vmem:[%s5263 + $0xf4] sm:$0xf]
      %v5326 = vld [vmem:[%s5263 + $0xf8] sm:$0xf]
      %v5327 = vld [vmem:[%s5263 + $0xfc] sm:$0xf]
      %v5328 = vld [vmem:[%s5263 + $0x100] sm:$0xf]
      %v5329 = vld [vmem:[%s5263 + $0x104] sm:$0xf]
      %v5330 = vld [vmem:[%s5263 + $0x108] sm:$0xf]
      %v5331 = vld [vmem:[%s5263 + $0x10c] sm:$0xf]
      %v5332 = vld [vmem:[%s5263 + $0x110] sm:$0xf]
      %v5333 = vld [vmem:[%s5263 + $0x114] sm:$0xf]
      %v5334 = vld [vmem:[%s5263 + $0x118] sm:$0xf]
      %v5335 = vld [vmem:[%s5263 + $0x11c] sm:$0xf]
      %v5336 = vld [vmem:[%s5263 + $0x120] sm:$0xf]
      %v5337 = vld [vmem:[%s5263 + $0x124] sm:$0xf]
      %v5338 = vld [vmem:[%s5263 + $0x128] sm:$0xf]
      %v5339 = vld [vmem:[%s5263 + $0x12c] sm:$0xf]
      %v5340 = vld [vmem:[%s5263 + $0x130] sm:$0xf]
      %v5341 = vld [vmem:[%s5263 + $0x134] sm:$0xf]
      %v5342 = vld [vmem:[%s5263 + $0x138] sm:$0xf]
      %v5343 = vld [vmem:[%s5263 + $0x13c] sm:$0xf]
      %v5344 = vld [vmem:[%s5263 + $0x140] sm:$0xf]
      %v5345 = vld [vmem:[%s5263 + $0x144] sm:$0xf]
      %v5346 = vld [vmem:[%s5263 + $0x148] sm:$0xf]
      %v5347 = vld [vmem:[%s5263 + $0x14c] sm:$0xf]
      %v5348 = vld [vmem:[%s5263 + $0x150] sm:$0xf]
      %v5349 = vld [vmem:[%s5263 + $0x154] sm:$0xf]
      %v5350 = vld [vmem:[%s5263 + $0x158] sm:$0xf]
      %v5351 = vld [vmem:[%s5263 + $0x15c] sm:$0xf]
      %v5352 = vld [vmem:[%s5263 + $0x160] sm:$0xf]
      %v5353 = vld [vmem:[%s5263 + $0x164] sm:$0xf]
      %v5354 = vld [vmem:[%s5263 + $0x168] sm:$0xf]
      %v5355 = vld [vmem:[%s5263 + $0x16c] sm:$0xf]
      %v5356 = vld [vmem:[%s5263 + $0x170] sm:$0xf]
      %v5357 = vld [vmem:[%s5263 + $0x174] sm:$0xf]
      %v5358 = vld [vmem:[%s5263 + $0x178] sm:$0xf]
      %v5359 = vld [vmem:[%s5263 + $0x17c] sm:$0xf]
      %v5360 = vld [vmem:[%s5263 + $0x180] sm:$0xf]
      %v5361 = vld [vmem:[%s5263 + $0x184] sm:$0xf]
      %v5362 = vld [vmem:[%s5263 + $0x188] sm:$0xf]
      %v5363 = vld [vmem:[%s5263 + $0x18c] sm:$0xf]
      %v5364 = vld [vmem:[%s5263 + $0x190] sm:$0xf]
      %v5365 = vld [vmem:[%s5263 + $0x194] sm:$0xf]
      %v5366 = vld [vmem:[%s5263 + $0x198] sm:$0xf]
      %v5367 = vld [vmem:[%s5263 + $0x19c] sm:$0xf]
      %v5368 = vld [vmem:[%s5263 + $0x1a0] sm:$0xf]
      %v5369 = vld [vmem:[%s5263 + $0x1a4] sm:$0xf]
      %v5370 = vld [vmem:[%s5263 + $0x1a8] sm:$0xf]
      %v5371 = vld [vmem:[%s5263 + $0x1ac] sm:$0xf]
      %v5372 = vld [vmem:[%s5263 + $0x1b0] sm:$0xf]
      %v5373 = vld [vmem:[%s5263 + $0x1b4] sm:$0xf]
      %v5374 = vld [vmem:[%s5263 + $0x1b8] sm:$0xf]
      %v5375 = vld [vmem:[%s5263 + $0x1bc] sm:$0xf]
      %v5376 = vld [vmem:[%s5263 + $0x1c0] sm:$0xf]
      %v5377 = vld [vmem:[%s5263 + $0x1c4] sm:$0xf]
      %v5378 = vld [vmem:[%s5263 + $0x1c8] sm:$0xf]
      %v5379 = vld [vmem:[%s5263 + $0x1cc] sm:$0xf]
      %v5380 = vld [vmem:[%s5263 + $0x1d0] sm:$0xf]
      %v5381 = vld [vmem:[%s5263 + $0x1d4] sm:$0xf]
      %v5382 = vld [vmem:[%s5263 + $0x1d8] sm:$0xf]
      %v5383 = vld [vmem:[%s5263 + $0x1dc] sm:$0xf]
      %v5384 = vld [vmem:[%s5263 + $0x1e0] sm:$0xf]
      %v5385 = vld [vmem:[%s5263 + $0x1e4] sm:$0xf]
      %v5386 = vld [vmem:[%s5263 + $0x1e8] sm:$0xf]
      %v5387 = vld [vmem:[%s5263 + $0x1ec] sm:$0xf]
      %v5388 = vld [vmem:[%s5263 + $0x1f0] sm:$0xf]
      %v5389 = vld [vmem:[%s5263 + $0x1f4] sm:$0xf]
      %v5390 = vld [vmem:[%s5263 + $0x1f8] sm:$0xf]
      %v5391 = vld [vmem:[%s5263 + $0x1fc] sm:$0xf]
      %v5392 = vunpack.c.l.b16 %v5052
      %v5393 = vunpack.c.h.b16 %v5052
      %v5394 = vunpack.c.l.b16 %v5066
      %v5395 = vunpack.c.h.b16 %v5066
      %v5396 = vunpack.c.l.b16 %v5080
      %v5397 = vunpack.c.h.b16 %v5080
      %v5398 = vunpack.c.l.b16 %v5094
      %v5399 = vunpack.c.h.b16 %v5094
      %v5400 = vunpack.c.l.b16 %v5108
      %v5401 = vunpack.c.h.b16 %v5108
      %v5402 = vunpack.c.l.b16 %v5122
      %v5403 = vunpack.c.h.b16 %v5122
      %v5404 = vunpack.c.l.b16 %v5136
      %v5405 = vunpack.c.h.b16 %v5136
      %v5406 = vunpack.c.l.b16 %v5150
      %v5407 = vunpack.c.h.b16 %v5150
      %v5408 = vunpack.c.l.b16 %v5164
      %v5409 = vunpack.c.h.b16 %v5164
      %v5410 = vunpack.c.l.b16 %v5178
      %v5411 = vunpack.c.h.b16 %v5178
      %v5412 = vunpack.c.l.b16 %v5192
      %v5413 = vunpack.c.h.b16 %v5192
      %v5414 = vunpack.c.l.b16 %v5206
      %v5415 = vunpack.c.h.b16 %v5206
      %v5416 = vunpack.c.l.b16 %v5220
      %v5417 = vunpack.c.h.b16 %v5220
      %v5418 = vunpack.c.l.b16 %v5234
      %v5419 = vunpack.c.h.b16 %v5234
      %v5420 = vunpack.c.l.b16 %v5248
      %v5421 = vunpack.c.h.b16 %v5248
      %v5422 = vunpack.c.l.b16 %v5262
      %v5423 = vunpack.c.h.b16 %v5262
      %v5424 = vpack.c.b16 %v5396, %v5392
      %v5425 = vpack.c.b16 %v5397, %v5393
      %v5426 = vpack.c.b16 %v5398, %v5394
      %v5427 = vpack.c.b16 %v5399, %v5395
      %v5428 = vpack.c.b16 %v5404, %v5400
      %v5429 = vpack.c.b16 %v5405, %v5401
      %v5430 = vpack.c.b16 %v5406, %v5402
      %v5431 = vpack.c.b16 %v5407, %v5403
      %v5432 = vpack.c.b16 %v5412, %v5408
      %v5433 = vpack.c.b16 %v5413, %v5409
      %v5434 = vpack.c.b16 %v5414, %v5410
      %v5435 = vpack.c.b16 %v5415, %v5411
      %v5436 = vpack.c.b16 %v5420, %v5416
      %v5437 = vpack.c.b16 %v5421, %v5417
      %v5438 = vpack.c.b16 %v5422, %v5418
      %v5439 = vpack.c.b16 %v5423, %v5419
      %v5584 = vunpack.c.l.b16 %v5264
      %v5585 = vunpack.c.l.b16 %v5265
      %v5586 = vunpack.c.l.b16 %v5266
      %v5587 = vunpack.c.l.b16 %v5267
      %v5588 = vunpack.c.l.b16 %v5268
      %v5589 = vunpack.c.l.b16 %v5269
      %v5590 = vunpack.c.l.b16 %v5270
      %v5591 = vunpack.c.l.b16 %v5271
      %v5592 = vunpack.c.l.b16 %v5272
      %v5593 = vunpack.c.l.b16 %v5273
      %v5594 = vunpack.c.l.b16 %v5274
      %v5595 = vunpack.c.l.b16 %v5275
      %v5596 = vunpack.c.l.b16 %v5276
      %v5597 = vunpack.c.l.b16 %v5277
      %v5598 = vunpack.c.l.b16 %v5278
      %v5599 = vunpack.c.l.b16 %v5279
      %v5600 = vunpack.c.l.b16 %v5280
      %v5601 = vunpack.c.l.b16 %v5281
      %v5602 = vunpack.c.l.b16 %v5282
      %v5603 = vunpack.c.l.b16 %v5283
      %v5604 = vunpack.c.l.b16 %v5284
      %v5605 = vunpack.c.l.b16 %v5285
      %v5606 = vunpack.c.l.b16 %v5286
      %v5607 = vunpack.c.l.b16 %v5287
      %v5608 = vunpack.c.l.b16 %v5288
      %v5609 = vunpack.c.l.b16 %v5289
      %v5610 = vunpack.c.l.b16 %v5290
      %v5611 = vunpack.c.l.b16 %v5291
      %v5612 = vunpack.c.l.b16 %v5292
      %v5613 = vunpack.c.l.b16 %v5293
      %v5614 = vunpack.c.l.b16 %v5294
      %v5615 = vunpack.c.l.b16 %v5295
      %v5616 = vunpack.c.l.b16 %v5296
      %v5617 = vunpack.c.l.b16 %v5297
      %v5618 = vunpack.c.l.b16 %v5298
      %v5619 = vunpack.c.l.b16 %v5299
      %v5620 = vunpack.c.l.b16 %v5300
      %v5621 = vunpack.c.l.b16 %v5301
      %v5622 = vunpack.c.l.b16 %v5302
      %v5623 = vunpack.c.l.b16 %v5303
      %v5624 = vunpack.c.l.b16 %v5304
      %v5625 = vunpack.c.l.b16 %v5305
      %v5626 = vunpack.c.l.b16 %v5306
      %v5627 = vunpack.c.l.b16 %v5307
      %v5628 = vunpack.c.l.b16 %v5308
      %v5629 = vunpack.c.l.b16 %v5309
      %v5630 = vunpack.c.l.b16 %v5310
      %v5631 = vunpack.c.l.b16 %v5311
      %v5632 = vunpack.c.l.b16 %v5312
      %v5633 = vunpack.c.l.b16 %v5313
      %v5634 = vunpack.c.l.b16 %v5314
      %v5635 = vunpack.c.l.b16 %v5315
      %v5636 = vunpack.c.l.b16 %v5316
      %v5637 = vunpack.c.l.b16 %v5317
      %v5638 = vunpack.c.l.b16 %v5318
      %v5639 = vunpack.c.l.b16 %v5319
      %v5640 = vunpack.c.l.b16 %v5320
      %v5641 = vunpack.c.l.b16 %v5321
      %v5642 = vunpack.c.l.b16 %v5322
      %v5643 = vunpack.c.l.b16 %v5323
      %v5644 = vunpack.c.l.b16 %v5324
      %v5645 = vunpack.c.l.b16 %v5325
      %v5646 = vunpack.c.l.b16 %v5326
      %v5647 = vunpack.c.l.b16 %v5327
      %v5648 = vunpack.c.l.b16 %v5328
      %v5649 = vunpack.c.l.b16 %v5329
      %v5650 = vunpack.c.l.b16 %v5330
      %v5651 = vunpack.c.l.b16 %v5331
      %v5652 = vunpack.c.l.b16 %v5332
      %v5653 = vunpack.c.l.b16 %v5333
      %v5654 = vunpack.c.l.b16 %v5334
      %v5655 = vunpack.c.l.b16 %v5335
      %v5656 = vunpack.c.l.b16 %v5336
      %v5657 = vunpack.c.l.b16 %v5337
      %v5658 = vunpack.c.l.b16 %v5338
      %v5659 = vunpack.c.l.b16 %v5339
      %v5660 = vunpack.c.l.b16 %v5340
      %v5661 = vunpack.c.l.b16 %v5341
      %v5662 = vunpack.c.l.b16 %v5342
      %v5663 = vunpack.c.l.b16 %v5343
      %v5664 = vunpack.c.l.b16 %v5344
      %v5665 = vunpack.c.l.b16 %v5345
      %v5666 = vunpack.c.l.b16 %v5346
      %v5667 = vunpack.c.l.b16 %v5347
      %v5668 = vunpack.c.l.b16 %v5348
      %v5669 = vunpack.c.l.b16 %v5349
      %v5670 = vunpack.c.l.b16 %v5350
      %v5671 = vunpack.c.l.b16 %v5351
      %v5672 = vunpack.c.l.b16 %v5352
      %v5673 = vunpack.c.l.b16 %v5353
      %v5674 = vunpack.c.l.b16 %v5354
      %v5675 = vunpack.c.l.b16 %v5355
      %v5676 = vunpack.c.l.b16 %v5356
      %v5677 = vunpack.c.l.b16 %v5357
      %v5678 = vunpack.c.l.b16 %v5358
      %v5679 = vunpack.c.l.b16 %v5359
      %v5680 = vunpack.c.l.b16 %v5360
      %v5681 = vunpack.c.l.b16 %v5361
      %v5682 = vunpack.c.l.b16 %v5362
      %v5683 = vunpack.c.l.b16 %v5363
      %v5684 = vunpack.c.l.b16 %v5364
      %v5685 = vunpack.c.l.b16 %v5365
      %v5686 = vunpack.c.l.b16 %v5366
      %v5687 = vunpack.c.l.b16 %v5367
      %v5688 = vunpack.c.l.b16 %v5368
      %v5689 = vunpack.c.l.b16 %v5369
      %v5690 = vunpack.c.l.b16 %v5370
      %v5691 = vunpack.c.l.b16 %v5371
      %v5692 = vunpack.c.l.b16 %v5372
      %v5693 = vunpack.c.l.b16 %v5373
      %v5694 = vunpack.c.l.b16 %v5374
      %v5695 = vunpack.c.l.b16 %v5375
      %v5696 = vunpack.c.l.b16 %v5376
      %v5697 = vunpack.c.l.b16 %v5377
      %v5698 = vunpack.c.l.b16 %v5378
      %v5699 = vunpack.c.l.b16 %v5379
      %v5700 = vunpack.c.l.b16 %v5380
      %v5701 = vunpack.c.l.b16 %v5381
      %v5702 = vunpack.c.l.b16 %v5382
      %v5703 = vunpack.c.l.b16 %v5383
      %v5704 = vunpack.c.l.b16 %v5384
      %v5705 = vunpack.c.l.b16 %v5385
      %v5706 = vunpack.c.l.b16 %v5386
      %v5707 = vunpack.c.l.b16 %v5387
      %v5708 = vunpack.c.l.b16 %v5388
      %v5709 = vunpack.c.l.b16 %v5389
      %v5710 = vunpack.c.l.b16 %v5390
      %v5711 = vunpack.c.l.b16 %v5391
      %v5712 = vpack.c.b16 %v5585, %v5584
      %v5713 = vpack.c.b16 %v5587, %v5586
      %v5714 = vpack.c.b16 %v5589, %v5588
      %v5715 = vpack.c.b16 %v5591, %v5590
      %v5716 = vpack.c.b16 %v5593, %v5592
      %v5717 = vpack.c.b16 %v5595, %v5594
      %v5718 = vpack.c.b16 %v5597, %v5596
      %v5719 = vpack.c.b16 %v5599, %v5598
      %v5720 = vpack.c.b16 %v5601, %v5600
      %v5721 = vpack.c.b16 %v5603, %v5602
      %v5722 = vpack.c.b16 %v5605, %v5604
      %v5723 = vpack.c.b16 %v5607, %v5606
      %v5724 = vpack.c.b16 %v5609, %v5608
      %v5725 = vpack.c.b16 %v5611, %v5610
      %v5726 = vpack.c.b16 %v5613, %v5612
      %v5727 = vpack.c.b16 %v5615, %v5614
      %v5728 = vpack.c.b16 %v5617, %v5616
      %v5729 = vpack.c.b16 %v5619, %v5618
      %v5730 = vpack.c.b16 %v5621, %v5620
      %v5731 = vpack.c.b16 %v5623, %v5622
      %v5732 = vpack.c.b16 %v5625, %v5624
      %v5733 = vpack.c.b16 %v5627, %v5626
      %v5734 = vpack.c.b16 %v5629, %v5628
      %v5735 = vpack.c.b16 %v5631, %v5630
      %v5736 = vpack.c.b16 %v5633, %v5632
      %v5737 = vpack.c.b16 %v5635, %v5634
      %v5738 = vpack.c.b16 %v5637, %v5636
      %v5739 = vpack.c.b16 %v5639, %v5638
      %v5740 = vpack.c.b16 %v5641, %v5640
      %v5741 = vpack.c.b16 %v5643, %v5642
      %v5742 = vpack.c.b16 %v5645, %v5644
      %v5743 = vpack.c.b16 %v5647, %v5646
      %v5744 = vpack.c.b16 %v5649, %v5648
      %v5745 = vpack.c.b16 %v5651, %v5650
      %v5746 = vpack.c.b16 %v5653, %v5652
      %v5747 = vpack.c.b16 %v5655, %v5654
      %v5748 = vpack.c.b16 %v5657, %v5656
      %v5749 = vpack.c.b16 %v5659, %v5658
      %v5750 = vpack.c.b16 %v5661, %v5660
      %v5751 = vpack.c.b16 %v5663, %v5662
      %v5752 = vpack.c.b16 %v5665, %v5664
      %v5753 = vpack.c.b16 %v5667, %v5666
      %v5754 = vpack.c.b16 %v5669, %v5668
      %v5755 = vpack.c.b16 %v5671, %v5670
      %v5756 = vpack.c.b16 %v5673, %v5672
      %v5757 = vpack.c.b16 %v5675, %v5674
      %v5758 = vpack.c.b16 %v5677, %v5676
      %v5759 = vpack.c.b16 %v5679, %v5678
      %v5760 = vpack.c.b16 %v5681, %v5680
      %v5761 = vpack.c.b16 %v5683, %v5682
      %v5762 = vpack.c.b16 %v5685, %v5684
      %v5763 = vpack.c.b16 %v5687, %v5686
      %v5764 = vpack.c.b16 %v5689, %v5688
      %v5765 = vpack.c.b16 %v5691, %v5690
      %v5766 = vpack.c.b16 %v5693, %v5692
      %v5767 = vpack.c.b16 %v5695, %v5694
      %v5768 = vpack.c.b16 %v5697, %v5696
      %v5769 = vpack.c.b16 %v5699, %v5698
      %v5770 = vpack.c.b16 %v5701, %v5700
      %v5771 = vpack.c.b16 %v5703, %v5702
      %v5772 = vpack.c.b16 %v5705, %v5704
      %v5773 = vpack.c.b16 %v5707, %v5706
      %v5774 = vpack.c.b16 %v5709, %v5708
      %v5775 = vpack.c.b16 %v5711, %v5710
      %5840 = vmatpush.bf16.msra.mxu0 %v5719
      %5841 = vmatpush.bf16.msra.mxu0 %v5718
      %5842 = vmatpush.bf16.msra.mxu0 %v5717
      %5843 = vmatpush.bf16.msra.mxu0 %v5716
      %5844 = vmatpush.bf16.msra.mxu0 %v5715
      %5845 = vmatpush.bf16.msra.mxu0 %v5714
      %5846 = vmatpush.bf16.msra.mxu0 %v5713
      %5847 = vmatpush.bf16.msra.mxu0 %v5712
      %5848 = vmatmul.bf16.gmra.mxu0 %v3110
      %v5849 = vpop.f32.mrf.mxu0
      %v5850 = vadd.f32 %v4149, %v5849
      %v5851 = vpop.f32.mrf.mxu0
      %v5852 = vadd.f32 %v4149, %v5851
      %5853 = vmatmul.bf16.gmra.mxu0 %v3118
      %v5854 = vpop.f32.mrf.mxu0
      %v5855 = vadd.f32 %v4149, %v5854
      %v5856 = vpop.f32.mrf.mxu0
      %v5857 = vadd.f32 %v4149, %v5856
      %5858 = vmatmul.bf16.gmra.mxu0 %v3126
      %v5859 = vpop.f32.mrf.mxu0
      %v5860 = vadd.f32 %v4149, %v5859
      %v5861 = vpop.f32.mrf.mxu0
      %v5862 = vadd.f32 %v4149, %v5861
      %5863 = vmatmul.bf16.gmra.mxu0 %v3134
      %v5864 = vpop.f32.mrf.mxu0
      %v5865 = vadd.f32 %v4149, %v5864
      %v5866 = vpop.f32.mrf.mxu0
      %v5867 = vadd.f32 %v4149, %v5866
      %5868 = vdwg.mxu0
      %5869 = vmatpush.bf16.msra.mxu0 %v5727
      %5870 = vmatpush.bf16.msra.mxu0 %v5726
      %5871 = vmatpush.bf16.msra.mxu0 %v5725
      %5872 = vmatpush.bf16.msra.mxu0 %v5724
      %5873 = vmatpush.bf16.msra.mxu0 %v5723
      %5874 = vmatpush.bf16.msra.mxu0 %v5722
      %5875 = vmatpush.bf16.msra.mxu0 %v5721
      %5876 = vmatpush.bf16.msra.mxu0 %v5720
      %5877 = vmatmul.bf16.gmra.mxu0 %v3111
      %v5878 = vpop.f32.mrf.mxu0
      %v5879 = vadd.f32 %v5850, %v5878
      %v5880 = vpop.f32.mrf.mxu0
      %v5881 = vadd.f32 %v5852, %v5880
      %5882 = vmatmul.bf16.gmra.mxu0 %v3119
      %v5883 = vpop.f32.mrf.mxu0
      %v5884 = vadd.f32 %v5855, %v5883
      %v5885 = vpop.f32.mrf.mxu0
      %v5886 = vadd.f32 %v5857, %v5885
      %5887 = vmatmul.bf16.gmra.mxu0 %v3127
      %v5888 = vpop.f32.mrf.mxu0
      %v5889 = vadd.f32 %v5860, %v5888
      %v5890 = vpop.f32.mrf.mxu0
      %v5891 = vadd.f32 %v5862, %v5890
      %5892 = vmatmul.bf16.gmra.mxu0 %v3135
      %v5893 = vpop.f32.mrf.mxu0
      %v5894 = vadd.f32 %v5865, %v5893
      %v5895 = vpop.f32.mrf.mxu0
      %v5896 = vadd.f32 %v5867, %v5895
      %5897 = vdwg.mxu0
      %5898 = vmatpush.bf16.msra.mxu0 %v5735
      %5899 = vmatpush.bf16.msra.mxu0 %v5734
      %5900 = vmatpush.bf16.msra.mxu0 %v5733
      %5901 = vmatpush.bf16.msra.mxu0 %v5732
      %5902 = vmatpush.bf16.msra.mxu0 %v5731
      %5903 = vmatpush.bf16.msra.mxu0 %v5730
      %5904 = vmatpush.bf16.msra.mxu0 %v5729
      %5905 = vmatpush.bf16.msra.mxu0 %v5728
      %5906 = vmatmul.bf16.gmra.mxu0 %v3112
      %v5907 = vpop.f32.mrf.mxu0
      %v5908 = vadd.f32 %v5879, %v5907
      %v5909 = vpop.f32.mrf.mxu0
      %v5910 = vadd.f32 %v5881, %v5909
      %5911 = vmatmul.bf16.gmra.mxu0 %v3120
      %v5912 = vpop.f32.mrf.mxu0
      %v5913 = vadd.f32 %v5884, %v5912
      %v5914 = vpop.f32.mrf.mxu0
      %v5915 = vadd.f32 %v5886, %v5914
      %5916 = vmatmul.bf16.gmra.mxu0 %v3128
      %v5917 = vpop.f32.mrf.mxu0
      %v5918 = vadd.f32 %v5889, %v5917
      %v5919 = vpop.f32.mrf.mxu0
      %v5920 = vadd.f32 %v5891, %v5919
      %5921 = vmatmul.bf16.gmra.mxu0 %v3136
      %v5922 = vpop.f32.mrf.mxu0
      %v5923 = vadd.f32 %v5894, %v5922
      %v5924 = vpop.f32.mrf.mxu0
      %v5925 = vadd.f32 %v5896, %v5924
      %5926 = vdwg.mxu0
      %5927 = vmatpush.bf16.msra.mxu0 %v5743
      %5928 = vmatpush.bf16.msra.mxu0 %v5742
      %5929 = vmatpush.bf16.msra.mxu0 %v5741
      %5930 = vmatpush.bf16.msra.mxu0 %v5740
      %5931 = vmatpush.bf16.msra.mxu0 %v5739
      %5932 = vmatpush.bf16.msra.mxu0 %v5738
      %5933 = vmatpush.bf16.msra.mxu0 %v5737
      %5934 = vmatpush.bf16.msra.mxu0 %v5736
      %5935 = vmatmul.bf16.gmra.mxu0 %v3113
      %v5936 = vpop.f32.mrf.mxu0
      %v5937 = vadd.f32 %v5908, %v5936
      %v5938 = vpop.f32.mrf.mxu0
      %v5939 = vadd.f32 %v5910, %v5938
      %5940 = vmatmul.bf16.gmra.mxu0 %v3121
      %v5941 = vpop.f32.mrf.mxu0
      %v5942 = vadd.f32 %v5913, %v5941
      %v5943 = vpop.f32.mrf.mxu0
      %v5944 = vadd.f32 %v5915, %v5943
      %5945 = vmatmul.bf16.gmra.mxu0 %v3129
      %v5946 = vpop.f32.mrf.mxu0
      %v5947 = vadd.f32 %v5918, %v5946
      %v5948 = vpop.f32.mrf.mxu0
      %v5949 = vadd.f32 %v5920, %v5948
      %5950 = vmatmul.bf16.gmra.mxu0 %v3137
      %v5951 = vpop.f32.mrf.mxu0
      %v5952 = vadd.f32 %v5923, %v5951
      %v5953 = vpop.f32.mrf.mxu0
      %v5954 = vadd.f32 %v5925, %v5953
      %5955 = vdwg.mxu0
      %5956 = vmatpush.bf16.msra.mxu0 %v5751
      %5957 = vmatpush.bf16.msra.mxu0 %v5750
      %5958 = vmatpush.bf16.msra.mxu0 %v5749
      %5959 = vmatpush.bf16.msra.mxu0 %v5748
      %5960 = vmatpush.bf16.msra.mxu0 %v5747
      %5961 = vmatpush.bf16.msra.mxu0 %v5746
      %5962 = vmatpush.bf16.msra.mxu0 %v5745
      %5963 = vmatpush.bf16.msra.mxu0 %v5744
      %5964 = vmatmul.bf16.gmra.mxu0 %v5424
      %v5965 = vpop.f32.mrf.mxu0
      %v5966 = vadd.f32 %v5937, %v5965
      %v5967 = vpop.f32.mrf.mxu0
      %v5968 = vadd.f32 %v5939, %v5967
      %5969 = vmatmul.bf16.gmra.mxu0 %v5428
      %v5970 = vpop.f32.mrf.mxu0
      %v5971 = vadd.f32 %v5942, %v5970
      %v5972 = vpop.f32.mrf.mxu0
      %v5973 = vadd.f32 %v5944, %v5972
      %5974 = vmatmul.bf16.gmra.mxu0 %v5432
      %v5975 = vpop.f32.mrf.mxu0
      %v5976 = vadd.f32 %v5947, %v5975
      %v5977 = vpop.f32.mrf.mxu0
      %v5978 = vadd.f32 %v5949, %v5977
      %5979 = vmatmul.bf16.gmra.mxu0 %v5436
      %v5980 = vpop.f32.mrf.mxu0
      %v5981 = vadd.f32 %v5952, %v5980
      %v5982 = vpop.f32.mrf.mxu0
      %v5983 = vadd.f32 %v5954, %v5982
      %5984 = vdwg.mxu0
      %5985 = vmatpush.bf16.msra.mxu0 %v5759
      %5986 = vmatpush.bf16.msra.mxu0 %v5758
      %5987 = vmatpush.bf16.msra.mxu0 %v5757
      %5988 = vmatpush.bf16.msra.mxu0 %v5756
      %5989 = vmatpush.bf16.msra.mxu0 %v5755
      %5990 = vmatpush.bf16.msra.mxu0 %v5754
      %5991 = vmatpush.bf16.msra.mxu0 %v5753
      %5992 = vmatpush.bf16.msra.mxu0 %v5752
      %5993 = vmatmul.bf16.gmra.mxu0 %v5425
      %v5994 = vpop.f32.mrf.mxu0
      %v5995 = vadd.f32 %v5966, %v5994
      %v5996 = vpop.f32.mrf.mxu0
      %v5997 = vadd.f32 %v5968, %v5996
      %5998 = vmatmul.bf16.gmra.mxu0 %v5429
      %v5999 = vpop.f32.mrf.mxu0
      %v6000 = vadd.f32 %v5971, %v5999
      %v6001 = vpop.f32.mrf.mxu0
      %v6002 = vadd.f32 %v5973, %v6001
      %6003 = vmatmul.bf16.gmra.mxu0 %v5433
      %v6004 = vpop.f32.mrf.mxu0
      %v6005 = vadd.f32 %v5976, %v6004
      %v6006 = vpop.f32.mrf.mxu0
      %v6007 = vadd.f32 %v5978, %v6006
      %6008 = vmatmul.bf16.gmra.mxu0 %v5437
      %v6009 = vpop.f32.mrf.mxu0
      %v6010 = vadd.f32 %v5981, %v6009
      %v6011 = vpop.f32.mrf.mxu0
      %v6012 = vadd.f32 %v5983, %v6011
      %6013 = vdwg.mxu0
      %6014 = vmatpush.bf16.msra.mxu0 %v5767
      %6015 = vmatpush.bf16.msra.mxu0 %v5766
      %6016 = vmatpush.bf16.msra.mxu0 %v5765
      %6017 = vmatpush.bf16.msra.mxu0 %v5764
      %6018 = vmatpush.bf16.msra.mxu0 %v5763
      %6019 = vmatpush.bf16.msra.mxu0 %v5762
      %6020 = vmatpush.bf16.msra.mxu0 %v5761
      %6021 = vmatpush.bf16.msra.mxu0 %v5760
      %6022 = vmatmul.bf16.gmra.mxu0 %v5426
      %v6023 = vpop.f32.mrf.mxu0
      %v6024 = vadd.f32 %v5995, %v6023
      %v6025 = vpop.f32.mrf.mxu0
      %v6026 = vadd.f32 %v5997, %v6025
      %6027 = vmatmul.bf16.gmra.mxu0 %v5430
      %v6028 = vpop.f32.mrf.mxu0
      %v6029 = vadd.f32 %v6000, %v6028
      %v6030 = vpop.f32.mrf.mxu0
      %v6031 = vadd.f32 %v6002, %v6030
      %6032 = vmatmul.bf16.gmra.mxu0 %v5434
      %v6033 = vpop.f32.mrf.mxu0
      %v6034 = vadd.f32 %v6005, %v6033
      %v6035 = vpop.f32.mrf.mxu0
      %v6036 = vadd.f32 %v6007, %v6035
      %6037 = vmatmul.bf16.gmra.mxu0 %v5438
      %v6038 = vpop.f32.mrf.mxu0
      %v6039 = vadd.f32 %v6010, %v6038
      %v6040 = vpop.f32.mrf.mxu0
      %v6041 = vadd.f32 %v6012, %v6040
      %6042 = vdwg.mxu0
      %6043 = vmatpush.bf16.msra.mxu0 %v5775
      %6044 = vmatpush.bf16.msra.mxu0 %v5774
      %6045 = vmatpush.bf16.msra.mxu0 %v5773
      %6046 = vmatpush.bf16.msra.mxu0 %v5772
      %6047 = vmatpush.bf16.msra.mxu0 %v5771
      %6048 = vmatpush.bf16.msra.mxu0 %v5770
      %6049 = vmatpush.bf16.msra.mxu0 %v5769
      %6050 = vmatpush.bf16.msra.mxu0 %v5768
      %6051 = vmatmul.bf16.gmra.mxu0 %v5427
      %v6052 = vpop.f32.mrf.mxu0
      %v6053 = vadd.f32 %v6024, %v6052
      %v6054 = vpop.f32.mrf.mxu0
      %v6055 = vadd.f32 %v6026, %v6054
      %6056 = vmatmul.bf16.gmra.mxu0 %v5431
      %v6057 = vpop.f32.mrf.mxu0
      %v6058 = vadd.f32 %v6029, %v6057
      %v6059 = vpop.f32.mrf.mxu0
      %v6060 = vadd.f32 %v6031, %v6059
      %6061 = vmatmul.bf16.gmra.mxu0 %v5435
      %v6062 = vpop.f32.mrf.mxu0
      %v6063 = vadd.f32 %v6034, %v6062
      %v6064 = vpop.f32.mrf.mxu0
      %v6065 = vadd.f32 %v6036, %v6064
      %6066 = vmatmul.bf16.gmra.mxu0 %v5439
      %v6067 = vpop.f32.mrf.mxu0
      %v6068 = vadd.f32 %v6039, %v6067
      %v6069 = vpop.f32.mrf.mxu0
      %v6070 = vadd.f32 %v6041, %v6069
      %6071 = vdwg.mxu0
      %s6072 = scalar_lea.vmem %s197, 16
      %6073 = vst [vmem:[%s6072] sm:$0xff] %v4780
      %6074 = vst [vmem:[%s6072 + $0x8] sm:$0xff] %v6053
      %6075 = vst [vmem:[%s6072 + $0x20] sm:$0xff] %v4782
      %6076 = vst [vmem:[%s6072 + $0x28] sm:$0xff] %v6055
      %6077 = vst [vmem:[%s6072 + $0x40] sm:$0xff] %v4785
      %6078 = vst [vmem:[%s6072 + $0x48] sm:$0xff] %v6058
      %6079 = vst [vmem:[%s6072 + $0x60] sm:$0xff] %v4787
      %6080 = vst [vmem:[%s6072 + $0x68] sm:$0xff] %v6060
      %6081 = vst [vmem:[%s6072 + $0x80] sm:$0xff] %v4790
      %6082 = vst [vmem:[%s6072 + $0x88] sm:$0xff] %v6063
      %6083 = vst [vmem:[%s6072 + $0xa0] sm:$0xff] %v4792
      %6084 = vst [vmem:[%s6072 + $0xa8] sm:$0xff] %v6065
      %6085 = vst [vmem:[%s6072 + $0xc0] sm:$0xff] %v4795
      %6086 = vst [vmem:[%s6072 + $0xc8] sm:$0xff] %v6068
      %6087 = vst [vmem:[%s6072 + $0xe0] sm:$0xff] %v4797
      %6088 = vst [vmem:[%s6072 + $0xe8] sm:$0xff] %v6070
      %p6089 = scmp.lt.s32.totalorder %s15, 3
      %s6090 = scalar_select %p6089, %s15, 3
      %s6091 = smul.addr %s6090, 32
      %s6092 = smul.addr %s6091, 8
      %s6093 = scalar_lea.vmem %s4, %s6092
      // Predicated region
      $region37: #{patch_expand_forward.1} parent=35 // pred_check
        %p6094 = pneg %p122
      $region38: #{patch_expand_forward.1} parent=35 // pred_check_branch
        %6096 = sbr.rel (%p6094) target = $region40
      $region39: #{patch_expand_forward.1} parent=35 // pred_region
        _
      $region40: #{patch_expand_forward.1} parent=35 // pred_fallthru
        _
    $region36: #{patch_expand_forward.1} parent=5 // pred_fallthru
      _
    %p6097 = scmp.le.s32.totalorder 2, %s10
    // Predicated region
    $region41: #{patch_expand_forward.1} parent=5 // pred_check
      %p6098 = pneg %p6097
    $region42: #{patch_expand_forward.1} parent=5 // pred_check_branch
      %6100 = sbr.rel (%p6098) target = $region44
    $region43: #{patch_expand_forward.1} parent=5 // pred_region
      %s6101 = ssub.s32 %s10, 2
      // Predicated region
      $region45: #{patch_expand_forward.1} parent=43 // pred_check
        %p6102 = pneg %p128
      $region46: #{patch_expand_forward.1} parent=43 // pred_check_branch
        %6104 = sbr.rel (%p6102) target = $region48
      $region47: #{patch_expand_forward.1} parent=43 // pred_region
        %p6105 = scmp.lt.s32.totalorder %s16, 3
        %s6106 = scalar_select %p6105, %s16, 3
        %s6107 = smul.addr %s6106, 32
        %s6108 = smul.addr %s6107, 8
        %s6109 = scalar_lea.vmem %s4, %s6108
      $region48: #{patch_expand_forward.1} parent=43 // pred_fallthru
        _
    $region44: #{patch_expand_forward.1} parent=5 // pred_fallthru
      _
  $region6: #{patch_expand_forward.1} parent=0 // loop_footer
    %s14 = sadd.s32 1, %s10
  $region7: #{patch_expand_forward.1} parent=0 // loop_footer_branch
    %9 = sbr.rel target = $region3
  $region8: #{patch_expand_forward.1} parent=0 // loop_exit
    _

</llo_original>
